<compile_context>
chip_gen: v7x
topology: tpu7x:2x2x1
jax: 0.10.0
libtpu: 0.0.40
codegen_flags: <defaults>
</compile_context>

<pallas_src>
import functools

import jax
import jax.numpy as jnp
from jax.experimental import pallas as pl
from jax.experimental.pallas import tpu as pltpu

EPS = 1e-5


# ------------------------------ fused kernel ------------------------------- #

def _fused_self_attention_kernel(*refs, num_heads, seq_lens):
    n_inputs = len(seq_lens)
    x_refs = refs[:n_inputs]
    (g_ref, be_ref, wqkv_ref, bqkv_ref, wo_ref, bo_ref,
     wh_ref, bh_ref, o_ref) = refs[n_inputs:]

    bb = x_refs[0].shape[0]
    emb = x_refs[0].shape[-1]
    dh = emb // num_heads
    s_total = sum(seq_lens)
    bounds = [0]
    for s_len in seq_lens:
        bounds.append(bounds[-1] + s_len)

    wqkv = wqkv_ref[...]                     # (E, 3E)  (scale folded into Q cols)
    mm_dtype = wqkv.dtype                    # f32 or bf16 (MXU input dtype)
    bqkv = bqkv_ref[...]                     # (1, 3E) f32
    wo = wo_ref[...]                         # (E, E)
    bo = bo_ref[...]                         # (1, E) f32
    bh = bh_ref[...]                         # (1, E_out) f32

    # ---- 1) per-modality LayerNorm (f32) + 2) sequence concat --------------
    normed = []
    for i in range(n_inputs):
        x = x_refs[i][...].astype(jnp.float32)             # (BB, S_i, E)
        mean = jnp.mean(x, axis=-1, keepdims=True)
        var = jnp.mean((x - mean) ** 2, axis=-1, keepdims=True)
        xn = (x - mean) * jax.lax.rsqrt(var + EPS)
        normed.append(xn * g_ref[i] + be_ref[i])            # (BB, S_i, E)
    xc = jnp.concatenate(normed, axis=1)                    # (BB, S_total, E)
    x2d = xc.reshape(bb * s_total, emb)                     # (rows, E)

    # ---- 3) packed QKV projection: ONE (rows,E)@(E,3E) matmul, f32 acc -----
    qkv = jnp.dot(x2d.astype(mm_dtype), wqkv,
                  preferred_element_type=jnp.float32) + bqkv      # (rows, 3E)
    q = qkv[:, 0 * emb:1 * emb].reshape(bb, s_total, emb)
    k = qkv[:, 1 * emb:2 * emb].reshape(bb, s_total, emb)
    v = qkv[:, 2 * emb:3 * emb].reshape(bb, s_total, emb)

    # ---- attention core: static per-head unroll, BB as single batch dim ----
    ctx_parts = []
    for h in range(num_heads):
        lo, hi = h * dh, (h + 1) * dh
        qh = q[:, :, lo:hi].astype(mm_dtype)                # (BB, S, Dh)
        kh = k[:, :, lo:hi].astype(mm_dtype)
        vh = v[:, :, lo:hi].astype(mm_dtype)
        s = jnp.einsum('bqd,bkd->bqk', qh, kh,
                       preferred_element_type=jnp.float32)  # (BB, S, S) f32
        s = s - jnp.max(s, axis=-1, keepdims=True)
        p = jnp.exp(s)
        p = p * pl.reciprocal(jnp.sum(p, axis=-1, keepdims=True), approx=True)
        ctx_parts.append(
            jnp.einsum('bqk,bkd->bqd', p.astype(mm_dtype), vh,
                       preferred_element_type=jnp.float32))  # (BB, S, Dh)
    # heads merged back into lanes -> single (rows,E)@(E,E) output projection
    ctx2d = jnp.concatenate(ctx_parts, axis=-1).reshape(bb * s_total, emb)

    attn = jnp.dot(ctx2d.astype(mm_dtype), wo,
                   preferred_element_type=jnp.float32) + bo       # (rows, E)

    # ---- 4) residual --------------------------------------------------------
    hidden = (x2d + attn).reshape(bb, s_total, emb)          # (BB, S_total, E)

    # ---- 5) mean pool (1/S_i folded into wh) + 6) combination head ----------
    acc = None
    for i, (lo, hi) in enumerate(zip(bounds[:-1], bounds[1:])):
        pooled = jnp.sum(hidden[:, lo:hi, :], axis=1)        # (BB, E)
        term = jnp.dot(pooled.astype(mm_dtype), wh_ref[i],
                       preferred_element_type=jnp.float32)   # (BB, E_out)
        acc = term if acc is None else acc + term
    o_ref[...] = (acc + bh).astype(o_ref.dtype)              # dense (BB,E_out)


# ------------------------------ wrapper ------------------------------------ #

def _default_batch_block(B, s_total, emb, target_steps=4, budget_bytes=16 << 20):
    """Pick a sublane-aligned batch block giving >= target_steps grid steps,
    capped by a rough per-step VMEM working-set budget (v7x: 64 MiB physical)."""
    per_sample = 4 * s_total * (12 * emb + 2 * s_total)      # rough f32 bytes
    cap = max(1, budget_bytes // max(per_sample, 1))
    for bb in range(min(B, cap), 0, -1):
        if B % bb:
            continue
        if bb % 8 == 0 and B // bb >= target_steps:
            return bb
    if B <= cap:
        return B
    return max(d for d in range(1, cap + 1) if B % d == 0)


def self_attention_forward(encoder_outputs, params, num_heads,
                           batch_block=None, use_bf16_matmul=False):
    """encoder_outputs: list of (B, S_i, E) `last_hidden_state` arrays."""
    n_inputs = len(encoder_outputs)
    B, _, E = encoder_outputs[0].shape
    assert E % num_heads == 0, f"emb_size={E} not divisible by num_heads={num_heads}"
    for idx, x in enumerate(encoder_outputs):
        assert x.ndim == 3 and x.shape[0] == B and x.shape[2] == E, \
            f"Unexpected shape {x.shape} for input {idx}"

    seq_lens = tuple(int(x.shape[1]) for x in encoder_outputs)
    s_total = sum(seq_lens)
    head_dim = E // num_heads
    scale = 1.0 / (head_dim ** 0.5)
    mm_dtype = jnp.bfloat16 if use_bf16_matmul else jnp.float32

    # --- host-side weight re-packing: no in-kernel transposes ----------------
    # Packed QKV weight (E, 3E), 1/sqrt(Dh) folded into the Q columns/bias.
    wqkv = jnp.concatenate(
        [(params["wq"] * scale).T, params["wk"].T, params["wv"].T],
        axis=1).astype(mm_dtype)                                     # (E, 3E)
    bqkv = jnp.concatenate(
        [params["bq"] * scale, params["bk"], params["bv"]]
    ).reshape(1, 3 * E).astype(jnp.float32)                          # (1, 3E)
    wo = params["wo"].T.astype(mm_dtype)                             # (E, E)
    bo = params["bo"].reshape(1, E).astype(jnp.float32)              # (1, E)
    # Combination head split per modality, pre-transposed, 1/S_i pooling
    # factor folded in: (N, E, E_out).
    E_out = params["w_head"].shape[0]
    wh_t = params["w_head"].T.reshape(n_inputs, E, E_out)
    inv_s = jnp.asarray([1.0 / s for s in seq_lens],
                        jnp.float32).reshape(n_inputs, 1, 1)
    wh = (wh_t * inv_s).astype(mm_dtype)                             # (N,E,Eo)
    bh = params["b_head"].reshape(1, E_out).astype(jnp.float32)
    ln_g = jnp.stack([g.reshape(1, E) for g in params["ln_gamma"]]
                     ).astype(jnp.float32)                           # (N,1,E)
    ln_b = jnp.stack([b.reshape(1, E) for b in params["ln_beta"]]
                     ).astype(jnp.float32)                           # (N,1,E)

    if batch_block is None:
        batch_block = _default_batch_block(B, s_total, E)
    assert B % batch_block == 0, (B, batch_block)
    grid = (B // batch_block,)

    kern = functools.partial(_fused_self_attention_kernel,
                             num_heads=num_heads, seq_lens=seq_lens)

    x_specs = [pl.BlockSpec((batch_block, s, E), lambda g: (g, 0, 0))
               for s in seq_lens]

    def _full_spec(a):                       # whole-array block, grid-invariant
        return pl.BlockSpec(a.shape, lambda g, _nd=a.ndim: (0,) * _nd)

    param_arrays = (ln_g, ln_b, wqkv, bqkv, wo, bo, wh, bh)

    # --- cost estimate + VMEM limit ------------------------------------------
    rows = B * s_total
    flops = int(2 * rows * E * (3 * E)                       # QKV projection
                + 4 * B * num_heads * s_total * s_total * head_dim  # scores+ctx
                + 2 * rows * E * E                           # output projection
                + 2 * B * n_inputs * E * E_out)              # combination head
    transcendentals = int(B * num_heads * s_total * s_total + B * s_total)
    in_bytes = int(sum(x.size * x.dtype.itemsize for x in encoder_outputs))
    param_bytes = int(sum(a.size * a.dtype.itemsize for a in param_arrays))
    out_bytes = int(B * E_out * jnp.dtype(encoder_outputs[0].dtype).itemsize)
    bytes_accessed = in_bytes + param_bytes + out_bytes

    step_bytes = int(2 * sum(batch_block * s * E * 4 for s in seq_lens)
                     + param_bytes
                     + 12 * batch_block * s_total * E * 4
                     + 2 * batch_block * s_total * s_total * 4)
    vmem_limit = int(max(32 << 20, min(48 << 20, 4 * step_bytes)))

    return pl.pallas_call(
        kern,
        out_shape=jax.ShapeDtypeStruct((B, E_out), encoder_outputs[0].dtype),
        grid=grid,
        in_specs=x_specs + [_full_spec(a) for a in param_arrays],
        out_specs=pl.BlockSpec((batch_block, E_out), lambda g: (g, 0)),
        compiler_params=pltpu.CompilerParams(
            dimension_semantics=("parallel",),
            vmem_limit_bytes=vmem_limit),
        cost_estimate=pl.CostEstimate(flops=flops,
                                      transcendentals=transcendentals,
                                      bytes_accessed=bytes_accessed),
    )(*encoder_outputs, *param_arrays)


# ------------------------------ pure-JAX ref -------------------------------- #

def reference_forward(encoder_outputs, params, num_heads):
    vectors = []
    for i, x in enumerate(encoder_outputs):
        g, b = params["ln_gamma"][i], params["ln_beta"][i]
        mean = x.mean(-1, keepdims=True)
        var = ((x - mean) ** 2).mean(-1, keepdims=True)
        vectors.append((x - mean) / jnp.sqrt(var + EPS) * g + b)
    seq_lens = [v.shape[1] for v in vectors]
    bounds = [0]
    for s in seq_lens:
        bounds.append(bounds[-1] + s)
    h = jnp.concatenate(vectors, axis=1)
    B, S, E = h.shape
    Dh = E // num_heads
    q = h @ params["wq"].T + params["bq"]
    k = h @ params["wk"].T + params["bk"]
    v = h @ params["wv"].T + params["bv"]
    q = q.reshape(B, S, num_heads, Dh).transpose(0, 2, 1, 3) / jnp.sqrt(Dh)
    k = k.reshape(B, S, num_heads, Dh).transpose(0, 2, 1, 3)
    v = v.reshape(B, S, num_heads, Dh).transpose(0, 2, 1, 3)
    s = jnp.einsum("bhqd,bhkd->bhqk", q, k)
    p = jax.nn.softmax(s, axis=-1)
    o = jnp.einsum("bhqk,bhkd->bhqd", p, v).transpose(0, 2, 1, 3).reshape(B, S, E)
    h = h + (o @ params["wo"].T + params["bo"])
    pools = [h[:, b0:e0].mean(axis=1) for b0, e0 in zip(bounds[:-1], bounds[1:])]
    concat = jnp.concatenate(pools, axis=-1)
    return concat @ params["w_head"].T + params["b_head"]


# ---------------------------------- main ------------------------------------ #

if __name__ == "__main__":
    B, E, H, N_INPUTS = 2, 32, 8, 2
    SEQ_LENS = [8, 8]

    key = jax.random.PRNGKey(0)
    ks = jax.random.split(key, 20)

    params = {
        "ln_gamma": [1.0 + 0.1 * jax.random.normal(ks[0 + i], (E,), jnp.float32)
                     for i in range(N_INPUTS)],
        "ln_beta": [0.1 * jax.random.normal(ks[2 + i], (E,), jnp.float32)
                    for i in range(N_INPUTS)],
        "wq": 0.1 * jax.random.normal(ks[4], (E, E), jnp.float32),
        "wk": 0.1 * jax.random.normal(ks[5], (E, E), jnp.float32),
        "wv": 0.1 * jax.random.normal(ks[6], (E, E), jnp.float32),
        "bq": 0.1 * jax.random.normal(ks[7], (E,), jnp.float32),
        "bk": 0.1 * jax.random.normal(ks[8], (E,), jnp.float32),
        "bv": 0.1 * jax.random.normal(ks[9], (E,), jnp.float32),
        "wo": 0.1 * jax.random.normal(ks[10], (E, E), jnp.float32),
        "bo": 0.1 * jax.random.normal(ks[11], (E,), jnp.float32),
        "w_head": 0.1 * jax.random.normal(ks[12], (E, N_INPUTS * E), jnp.float32),
        "b_head": 0.1 * jax.random.normal(ks[13], (E,), jnp.float32),
    }

    # two encoder outputs (last_hidden_state), batch-first (B, S_i, E)
    x1 = jax.random.normal(ks[14], (B, SEQ_LENS[0], E), jnp.float32)
    x2 = jax.random.normal(ks[15], (B, SEQ_LENS[1], E), jnp.float32)

    ref = reference_forward([x1, x2], params, num_heads=H)

    # f32 path (exact up to the EUP approximate-reciprocal softmax)
    out = self_attention_forward([x1, x2], params, num_heads=H)
    out = jax.block_until_ready(out)
    assert out.shape == (B, E), out.shape
    assert jnp.allclose(out, ref, rtol=2e-3, atol=2e-3), \
        f"max abs err {jnp.max(jnp.abs(out - ref))}"

    # bf16-MXU fast path (v6e/v7x): bf16 matmul inputs, f32 accumulation +
    # f32 LayerNorm/softmax/residual; looser tolerance.
    out_bf16 = self_attention_forward([x1, x2], params, num_heads=H,
                                      use_bf16_matmul=True)
    out_bf16 = jax.block_until_ready(out_bf16)
    assert jnp.allclose(out_bf16, ref, rtol=5e-2, atol=5e-2), \
        f"bf16 max abs err {jnp.max(jnp.abs(out_bf16 - ref))}"

    print("KERNEL_OK")
</pallas_src>

<mosaic_0001>
module attributes {stable_mosaic.version = 11 : i64} {
  func.func @_fused_self_attention_kernel(%arg0: i32, %arg1: memref<2x8x32xf32, #tpu.memory_space<vmem>>, %arg2: memref<2x8x32xf32, #tpu.memory_space<vmem>>, %arg3: memref<2x1x32xf32, #tpu.memory_space<vmem>>, %arg4: memref<2x1x32xf32, #tpu.memory_space<vmem>>, %arg5: memref<32x96xf32, #tpu.memory_space<vmem>>, %arg6: memref<1x96xf32, #tpu.memory_space<vmem>>, %arg7: memref<32x32xf32, #tpu.memory_space<vmem>>, %arg8: memref<1x32xf32, #tpu.memory_space<vmem>>, %arg9: memref<2x32x32xf32, #tpu.memory_space<vmem>>, %arg10: memref<1x32xf32, #tpu.memory_space<vmem>>, %arg11: memref<2x32xf32, #tpu.memory_space<vmem>>) attributes {dimension_semantics = [#tpu.dimension_semantics<parallel>], iteration_bounds = array<i64: 1>, scalar_prefetch = 0 : i64, scratch_operands = 0 : i64, tpu.core_type = #tpu.core_type<tc>, window_params = [{transform_indices = @transform_0, window_bounds = array<i64: 2, 8, 32>}, {transform_indices = @transform_1, window_bounds = array<i64: 2, 8, 32>}, {pipeline_mode = #tpu.pipeline_mode<synchronous>, transform_indices = @transform_2, window_bounds = array<i64: 2, 1, 32>}, {pipeline_mode = #tpu.pipeline_mode<synchronous>, transform_indices = @transform_3, window_bounds = array<i64: 2, 1, 32>}, {pipeline_mode = #tpu.pipeline_mode<synchronous>, transform_indices = @transform_4, window_bounds = array<i64: 32, 96>}, {pipeline_mode = #tpu.pipeline_mode<synchronous>, transform_indices = @transform_5, window_bounds = array<i64: 1, 96>}, {pipeline_mode = #tpu.pipeline_mode<synchronous>, transform_indices = @transform_6, window_bounds = array<i64: 32, 32>}, {pipeline_mode = #tpu.pipeline_mode<synchronous>, transform_indices = @transform_7, window_bounds = array<i64: 1, 32>}, {pipeline_mode = #tpu.pipeline_mode<synchronous>, transform_indices = @transform_8, window_bounds = array<i64: 2, 32, 32>}, {pipeline_mode = #tpu.pipeline_mode<synchronous>, transform_indices = @transform_9, window_bounds = array<i64: 1, 32>}, {transform_indices = @transform_10, window_bounds = array<i64: 2, 32>}]} {
    %c0 = arith.constant 0 : index
    %c0_0 = arith.constant 0 : index
    %0 = vector.load %arg5[%c0, %c0_0] : memref<32x96xf32, #tpu.memory_space<vmem>>, vector<32x96xf32>
    %c0_1 = arith.constant 0 : index
    %c0_2 = arith.constant 0 : index
    %1 = vector.load %arg6[%c0_1, %c0_2] : memref<1x96xf32, #tpu.memory_space<vmem>>, vector<1x96xf32>
    %c0_3 = arith.constant 0 : index
    %c0_4 = arith.constant 0 : index
    %2 = vector.load %arg7[%c0_3, %c0_4] : memref<32x32xf32, #tpu.memory_space<vmem>>, vector<32x32xf32>
    %c0_5 = arith.constant 0 : index
    %c0_6 = arith.constant 0 : index
    %3 = vector.load %arg8[%c0_5, %c0_6] : memref<1x32xf32, #tpu.memory_space<vmem>>, vector<1x32xf32>
    %c0_7 = arith.constant 0 : index
    %c0_8 = arith.constant 0 : index
    %4 = vector.load %arg10[%c0_7, %c0_8] : memref<1x32xf32, #tpu.memory_space<vmem>>, vector<1x32xf32>
    %c0_9 = arith.constant 0 : index
    %c0_10 = arith.constant 0 : index
    %c0_11 = arith.constant 0 : index
    %5 = vector.load %arg1[%c0_9, %c0_10, %c0_11] : memref<2x8x32xf32, #tpu.memory_space<vmem>>, vector<2x8x32xf32>
    %cst = arith.constant dense<0.000000e+00> : vector<2x8xf32>
    %6 = vector.multi_reduction <add>, %5, %cst [2] : vector<2x8x32xf32> to vector<2x8xf32>
    %7 = vector.shape_cast %6 : vector<2x8xf32> to vector<2x8x1xf32>
    %cst_12 = arith.constant 3.200000e+01 : f32
    %8 = vector.broadcast %cst_12 : f32 to vector<2x8x1xf32>
    %9 = arith.divf %7, %8 : vector<2x8x1xf32>
    %10 = vector.broadcast %9 : vector<2x8x1xf32> to vector<2x8x32xf32>
    %11 = arith.subf %5, %10 : vector<2x8x32xf32>
    %12 = arith.mulf %11, %11 : vector<2x8x32xf32>
    %cst_13 = arith.constant dense<0.000000e+00> : vector<2x8xf32>
    %13 = vector.multi_reduction <add>, %12, %cst_13 [2] : vector<2x8x32xf32> to vector<2x8xf32>
    %14 = vector.shape_cast %13 : vector<2x8xf32> to vector<2x8x1xf32>
    %cst_14 = arith.constant 3.200000e+01 : f32
    %15 = vector.broadcast %cst_14 : f32 to vector<2x8x1xf32>
    %16 = arith.divf %14, %15 : vector<2x8x1xf32>
    %17 = vector.broadcast %9 : vector<2x8x1xf32> to vector<2x8x32xf32>
    %18 = arith.subf %5, %17 : vector<2x8x32xf32>
    %cst_15 = arith.constant 9.99999974E-6 : f32
    %19 = vector.broadcast %cst_15 : f32 to vector<2x8x1xf32>
    %20 = arith.addf %16, %19 : vector<2x8x1xf32>
    %21 = math.rsqrt %20 : vector<2x8x1xf32>
    %22 = vector.broadcast %21 : vector<2x8x1xf32> to vector<2x8x32xf32>
    %23 = arith.mulf %18, %22 : vector<2x8x32xf32>
    %c0_16 = arith.constant 0 : index
    %c0_17 = arith.constant 0 : index
    %c0_18 = arith.constant 0 : index
    %24 = vector.load %arg3[%c0_16, %c0_17, %c0_18] : memref<2x1x32xf32, #tpu.memory_space<vmem>>, vector<1x1x32xf32>
    %25 = vector.shape_cast %24 : vector<1x1x32xf32> to vector<1x32xf32>
    %26 = vector.shape_cast %25 : vector<1x32xf32> to vector<1x1x32xf32>
    %27 = vector.broadcast %26 : vector<1x1x32xf32> to vector<2x8x32xf32>
    %28 = arith.mulf %23, %27 : vector<2x8x32xf32>
    %c0_19 = arith.constant 0 : index
    %c0_20 = arith.constant 0 : index
    %c0_21 = arith.constant 0 : index
    %29 = vector.load %arg4[%c0_19, %c0_20, %c0_21] : memref<2x1x32xf32, #tpu.memory_space<vmem>>, vector<1x1x32xf32>
    %30 = vector.shape_cast %29 : vector<1x1x32xf32> to vector<1x32xf32>
    %31 = vector.shape_cast %30 : vector<1x32xf32> to vector<1x1x32xf32>
    %32 = vector.broadcast %31 : vector<1x1x32xf32> to vector<2x8x32xf32>
    %33 = arith.addf %28, %32 : vector<2x8x32xf32>
    %c0_22 = arith.constant 0 : index
    %c0_23 = arith.constant 0 : index
    %c0_24 = arith.constant 0 : index
    %34 = vector.load %arg2[%c0_22, %c0_23, %c0_24] : memref<2x8x32xf32, #tpu.memory_space<vmem>>, vector<2x8x32xf32>
    %cst_25 = arith.constant dense<0.000000e+00> : vector<2x8xf32>
    %35 = vector.multi_reduction <add>, %34, %cst_25 [2] : vector<2x8x32xf32> to vector<2x8xf32>
    %36 = vector.shape_cast %35 : vector<2x8xf32> to vector<2x8x1xf32>
    %cst_26 = arith.constant 3.200000e+01 : f32
    %37 = vector.broadcast %cst_26 : f32 to vector<2x8x1xf32>
    %38 = arith.divf %36, %37 : vector<2x8x1xf32>
    %39 = vector.broadcast %38 : vector<2x8x1xf32> to vector<2x8x32xf32>
    %40 = arith.subf %34, %39 : vector<2x8x32xf32>
    %41 = arith.mulf %40, %40 : vector<2x8x32xf32>
    %cst_27 = arith.constant dense<0.000000e+00> : vector<2x8xf32>
    %42 = vector.multi_reduction <add>, %41, %cst_27 [2] : vector<2x8x32xf32> to vector<2x8xf32>
    %43 = vector.shape_cast %42 : vector<2x8xf32> to vector<2x8x1xf32>
    %cst_28 = arith.constant 3.200000e+01 : f32
    %44 = vector.broadcast %cst_28 : f32 to vector<2x8x1xf32>
    %45 = arith.divf %43, %44 : vector<2x8x1xf32>
    %46 = vector.broadcast %38 : vector<2x8x1xf32> to vector<2x8x32xf32>
    %47 = arith.subf %34, %46 : vector<2x8x32xf32>
    %cst_29 = arith.constant 9.99999974E-6 : f32
    %48 = vector.broadcast %cst_29 : f32 to vector<2x8x1xf32>
    %49 = arith.addf %45, %48 : vector<2x8x1xf32>
    %50 = math.rsqrt %49 : vector<2x8x1xf32>
    %51 = vector.broadcast %50 : vector<2x8x1xf32> to vector<2x8x32xf32>
    %52 = arith.mulf %47, %51 : vector<2x8x32xf32>
    %c1 = arith.constant 1 : index
    %c0_30 = arith.constant 0 : index
    %c0_31 = arith.constant 0 : index
    %53 = vector.load %arg3[%c1, %c0_30, %c0_31] : memref<2x1x32xf32, #tpu.memory_space<vmem>>, vector<1x1x32xf32>
    %54 = vector.shape_cast %53 : vector<1x1x32xf32> to vector<1x32xf32>
    %55 = vector.shape_cast %54 : vector<1x32xf32> to vector<1x1x32xf32>
    %56 = vector.broadcast %55 : vector<1x1x32xf32> to vector<2x8x32xf32>
    %57 = arith.mulf %52, %56 : vector<2x8x32xf32>
    %c1_32 = arith.constant 1 : index
    %c0_33 = arith.constant 0 : index
    %c0_34 = arith.constant 0 : index
    %58 = vector.load %arg4[%c1_32, %c0_33, %c0_34] : memref<2x1x32xf32, #tpu.memory_space<vmem>>, vector<1x1x32xf32>
    %59 = vector.shape_cast %58 : vector<1x1x32xf32> to vector<1x32xf32>
    %60 = vector.shape_cast %59 : vector<1x32xf32> to vector<1x1x32xf32>
    %61 = vector.broadcast %60 : vector<1x1x32xf32> to vector<2x8x32xf32>
    %62 = arith.addf %57, %61 : vector<2x8x32xf32>
    %63 = tpu.concatenate %33, %62 in 1 : vector<2x8x32xf32>, vector<2x8x32xf32> -> vector<2x16x32xf32>
    %64 = vector.shape_cast %63 : vector<2x16x32xf32> to vector<32x32xf32>
    %cst_35 = arith.constant dense<0.000000e+00> : vector<32x96xf32>
    %65 = tpu.matmul %64, %0, %cst_35 {dimension_numbers = #tpu.dot_dimension_numbers<[1], [0], [0], [1], [0, 0, 1, 1], [], []>} : vector<32x32xf32>, vector<32x96xf32>, vector<32x96xf32> -> vector<32x96xf32>
    %66 = vector.broadcast %1 : vector<1x96xf32> to vector<32x96xf32>
    %67 = arith.addf %65, %66 : vector<32x96xf32>
    %68 = vector.extract_strided_slice %67 {offsets = [0, 0], sizes = [32, 32], strides = [1, 1]} : vector<32x96xf32> to vector<32x32xf32>
    %69 = vector.shape_cast %68 : vector<32x32xf32> to vector<2x16x32xf32>
    %70 = vector.extract_strided_slice %67 {offsets = [0, 32], sizes = [32, 32], strides = [1, 1]} : vector<32x96xf32> to vector<32x32xf32>
    %71 = vector.shape_cast %70 : vector<32x32xf32> to vector<2x16x32xf32>
    %72 = vector.extract_strided_slice %67 {offsets = [0, 64], sizes = [32, 32], strides = [1, 1]} : vector<32x96xf32> to vector<32x32xf32>
    %73 = vector.shape_cast %72 : vector<32x32xf32> to vector<2x16x32xf32>
    %74 = vector.extract_strided_slice %69 {offsets = [0, 0, 0], sizes = [2, 16, 4], strides = [1, 1, 1]} : vector<2x16x32xf32> to vector<2x16x4xf32>
    %75 = vector.extract_strided_slice %71 {offsets = [0, 0, 0], sizes = [2, 16, 4], strides = [1, 1, 1]} : vector<2x16x32xf32> to vector<2x16x4xf32>
    %76 = vector.extract_strided_slice %73 {offsets = [0, 0, 0], sizes = [2, 16, 4], strides = [1, 1, 1]} : vector<2x16x32xf32> to vector<2x16x4xf32>
    "tpu.trace_start"() <{level = 10 : i32, message = "bqd,bkd->bqk"}> : () -> ()
    %cst_36 = arith.constant dense<0.000000e+00> : vector<2x16x16xf32>
    %77 = tpu.matmul %74, %75, %cst_36 {dimension_numbers = #tpu.dot_dimension_numbers<[2], [2], [1], [1], [0, 0, 0, 1, 1, 1], [0], [0]>} : vector<2x16x4xf32>, vector<2x16x4xf32>, vector<2x16x16xf32> -> vector<2x16x16xf32>
    "tpu.trace_stop"() : () -> ()
    %cst_37 = arith.constant dense<0xFF800000> : vector<2x16xf32>
    %78 = vector.multi_reduction <maximumf>, %77, %cst_37 [2] : vector<2x16x16xf32> to vector<2x16xf32>
    %79 = vector.shape_cast %78 : vector<2x16xf32> to vector<2x16x1xf32>
    %80 = vector.broadcast %79 : vector<2x16x1xf32> to vector<2x16x16xf32>
    %81 = arith.subf %77, %80 : vector<2x16x16xf32>
    %82 = math.exp %81 : vector<2x16x16xf32>
    %cst_38 = arith.constant dense<0.000000e+00> : vector<2x16xf32>
    %83 = vector.multi_reduction <add>, %82, %cst_38 [2] : vector<2x16x16xf32> to vector<2x16xf32>
    %84 = vector.shape_cast %83 : vector<2x16xf32> to vector<2x16x1xf32>
    %85 = tpu.reciprocal %84 {approx = true} : vector<2x16x1xf32> -> vector<2x16x1xf32>
    %86 = vector.broadcast %85 : vector<2x16x1xf32> to vector<2x16x16xf32>
    %87 = arith.mulf %82, %86 : vector<2x16x16xf32>
    "tpu.trace_start"() <{level = 10 : i32, message = "bqk,bkd->bqd"}> : () -> ()
    %cst_39 = arith.constant dense<0.000000e+00> : vector<2x16x4xf32>
    %88 = tpu.matmul %87, %76, %cst_39 {dimension_numbers = #tpu.dot_dimension_numbers<[2], [1], [1], [2], [0, 0, 0, 1, 1, 2], [0], [0]>} : vector<2x16x16xf32>, vector<2x16x4xf32>, vector<2x16x4xf32> -> vector<2x16x4xf32>
    "tpu.trace_stop"() : () -> ()
    %89 = vector.extract_strided_slice %69 {offsets = [0, 0, 4], sizes = [2, 16, 4], strides = [1, 1, 1]} : vector<2x16x32xf32> to vector<2x16x4xf32>
    %90 = vector.extract_strided_slice %71 {offsets = [0, 0, 4], sizes = [2, 16, 4], strides = [1, 1, 1]} : vector<2x16x32xf32> to vector<2x16x4xf32>
    %91 = vector.extract_strided_slice %73 {offsets = [0, 0, 4], sizes = [2, 16, 4], strides = [1, 1, 1]} : vector<2x16x32xf32> to vector<2x16x4xf32>
    "tpu.trace_start"() <{level = 10 : i32, message = "bqd,bkd->bqk"}> : () -> ()
    %cst_40 = arith.constant dense<0.000000e+00> : vector<2x16x16xf32>
    %92 = tpu.matmul %89, %90, %cst_40 {dimension_numbers = #tpu.dot_dimension_numbers<[2], [2], [1], [1], [0, 0, 0, 1, 1, 1], [0], [0]>} : vector<2x16x4xf32>, vector<2x16x4xf32>, vector<2x16x16xf32> -> vector<2x16x16xf32>
    "tpu.trace_stop"() : () -> ()
    %cst_41 = arith.constant dense<0xFF800000> : vector<2x16xf32>
    %93 = vector.multi_reduction <maximumf>, %92, %cst_41 [2] : vector<2x16x16xf32> to vector<2x16xf32>
    %94 = vector.shape_cast %93 : vector<2x16xf32> to vector<2x16x1xf32>
    %95 = vector.broadcast %94 : vector<2x16x1xf32> to vector<2x16x16xf32>
    %96 = arith.subf %92, %95 : vector<2x16x16xf32>
    %97 = math.exp %96 : vector<2x16x16xf32>
    %cst_42 = arith.constant dense<0.000000e+00> : vector<2x16xf32>
    %98 = vector.multi_reduction <add>, %97, %cst_42 [2] : vector<2x16x16xf32> to vector<2x16xf32>
    %99 = vector.shape_cast %98 : vector<2x16xf32> to vector<2x16x1xf32>
    %100 = tpu.reciprocal %99 {approx = true} : vector<2x16x1xf32> -> vector<2x16x1xf32>
    %101 = vector.broadcast %100 : vector<2x16x1xf32> to vector<2x16x16xf32>
    %102 = arith.mulf %97, %101 : vector<2x16x16xf32>
    "tpu.trace_start"() <{level = 10 : i32, message = "bqk,bkd->bqd"}> : () -> ()
    %cst_43 = arith.constant dense<0.000000e+00> : vector<2x16x4xf32>
    %103 = tpu.matmul %102, %91, %cst_43 {dimension_numbers = #tpu.dot_dimension_numbers<[2], [1], [1], [2], [0, 0, 0, 1, 1, 2], [0], [0]>} : vector<2x16x16xf32>, vector<2x16x4xf32>, vector<2x16x4xf32> -> vector<2x16x4xf32>
    "tpu.trace_stop"() : () -> ()
    %104 = vector.extract_strided_slice %69 {offsets = [0, 0, 8], sizes = [2, 16, 4], strides = [1, 1, 1]} : vector<2x16x32xf32> to vector<2x16x4xf32>
    %105 = vector.extract_strided_slice %71 {offsets = [0, 0, 8], sizes = [2, 16, 4], strides = [1, 1, 1]} : vector<2x16x32xf32> to vector<2x16x4xf32>
    %106 = vector.extract_strided_slice %73 {offsets = [0, 0, 8], sizes = [2, 16, 4], strides = [1, 1, 1]} : vector<2x16x32xf32> to vector<2x16x4xf32>
    "tpu.trace_start"() <{level = 10 : i32, message = "bqd,bkd->bqk"}> : () -> ()
    %cst_44 = arith.constant dense<0.000000e+00> : vector<2x16x16xf32>
    %107 = tpu.matmul %104, %105, %cst_44 {dimension_numbers = #tpu.dot_dimension_numbers<[2], [2], [1], [1], [0, 0, 0, 1, 1, 1], [0], [0]>} : vector<2x16x4xf32>, vector<2x16x4xf32>, vector<2x16x16xf32> -> vector<2x16x16xf32>
    "tpu.trace_stop"() : () -> ()
    %cst_45 = arith.constant dense<0xFF800000> : vector<2x16xf32>
    %108 = vector.multi_reduction <maximumf>, %107, %cst_45 [2] : vector<2x16x16xf32> to vector<2x16xf32>
    %109 = vector.shape_cast %108 : vector<2x16xf32> to vector<2x16x1xf32>
    %110 = vector.broadcast %109 : vector<2x16x1xf32> to vector<2x16x16xf32>
    %111 = arith.subf %107, %110 : vector<2x16x16xf32>
    %112 = math.exp %111 : vector<2x16x16xf32>
    %cst_46 = arith.constant dense<0.000000e+00> : vector<2x16xf32>
    %113 = vector.multi_reduction <add>, %112, %cst_46 [2] : vector<2x16x16xf32> to vector<2x16xf32>
    %114 = vector.shape_cast %113 : vector<2x16xf32> to vector<2x16x1xf32>
    %115 = tpu.reciprocal %114 {approx = true} : vector<2x16x1xf32> -> vector<2x16x1xf32>
    %116 = vector.broadcast %115 : vector<2x16x1xf32> to vector<2x16x16xf32>
    %117 = arith.mulf %112, %116 : vector<2x16x16xf32>
    "tpu.trace_start"() <{level = 10 : i32, message = "bqk,bkd->bqd"}> : () -> ()
    %cst_47 = arith.constant dense<0.000000e+00> : vector<2x16x4xf32>
    %118 = tpu.matmul %117, %106, %cst_47 {dimension_numbers = #tpu.dot_dimension_numbers<[2], [1], [1], [2], [0, 0, 0, 1, 1, 2], [0], [0]>} : vector<2x16x16xf32>, vector<2x16x4xf32>, vector<2x16x4xf32> -> vector<2x16x4xf32>
    "tpu.trace_stop"() : () -> ()
    %119 = vector.extract_strided_slice %69 {offsets = [0, 0, 12], sizes = [2, 16, 4], strides = [1, 1, 1]} : vector<2x16x32xf32> to vector<2x16x4xf32>
    %120 = vector.extract_strided_slice %71 {offsets = [0, 0, 12], sizes = [2, 16, 4], strides = [1, 1, 1]} : vector<2x16x32xf32> to vector<2x16x4xf32>
    %121 = vector.extract_strided_slice %73 {offsets = [0, 0, 12], sizes = [2, 16, 4], strides = [1, 1, 1]} : vector<2x16x32xf32> to vector<2x16x4xf32>
    "tpu.trace_start"() <{level = 10 : i32, message = "bqd,bkd->bqk"}> : () -> ()
    %cst_48 = arith.constant dense<0.000000e+00> : vector<2x16x16xf32>
    %122 = tpu.matmul %119, %120, %cst_48 {dimension_numbers = #tpu.dot_dimension_numbers<[2], [2], [1], [1], [0, 0, 0, 1, 1, 1], [0], [0]>} : vector<2x16x4xf32>, vector<2x16x4xf32>, vector<2x16x16xf32> -> vector<2x16x16xf32>
    "tpu.trace_stop"() : () -> ()
    %cst_49 = arith.constant dense<0xFF800000> : vector<2x16xf32>
    %123 = vector.multi_reduction <maximumf>, %122, %cst_49 [2] : vector<2x16x16xf32> to vector<2x16xf32>
    %124 = vector.shape_cast %123 : vector<2x16xf32> to vector<2x16x1xf32>
    %125 = vector.broadcast %124 : vector<2x16x1xf32> to vector<2x16x16xf32>
    %126 = arith.subf %122, %125 : vector<2x16x16xf32>
    %127 = math.exp %126 : vector<2x16x16xf32>
    %cst_50 = arith.constant dense<0.000000e+00> : vector<2x16xf32>
    %128 = vector.multi_reduction <add>, %127, %cst_50 [2] : vector<2x16x16xf32> to vector<2x16xf32>
    %129 = vector.shape_cast %128 : vector<2x16xf32> to vector<2x16x1xf32>
    %130 = tpu.reciprocal %129 {approx = true} : vector<2x16x1xf32> -> vector<2x16x1xf32>
    %131 = vector.broadcast %130 : vector<2x16x1xf32> to vector<2x16x16xf32>
    %132 = arith.mulf %127, %131 : vector<2x16x16xf32>
    "tpu.trace_start"() <{level = 10 : i32, message = "bqk,bkd->bqd"}> : () -> ()
    %cst_51 = arith.constant dense<0.000000e+00> : vector<2x16x4xf32>
    %133 = tpu.matmul %132, %121, %cst_51 {dimension_numbers = #tpu.dot_dimension_numbers<[2], [1], [1], [2], [0, 0, 0, 1, 1, 2], [0], [0]>} : vector<2x16x16xf32>, vector<2x16x4xf32>, vector<2x16x4xf32> -> vector<2x16x4xf32>
    "tpu.trace_stop"() : () -> ()
    %134 = vector.extract_strided_slice %69 {offsets = [0, 0, 16], sizes = [2, 16, 4], strides = [1, 1, 1]} : vector<2x16x32xf32> to vector<2x16x4xf32>
    %135 = vector.extract_strided_slice %71 {offsets = [0, 0, 16], sizes = [2, 16, 4], strides = [1, 1, 1]} : vector<2x16x32xf32> to vector<2x16x4xf32>
    %136 = vector.extract_strided_slice %73 {offsets = [0, 0, 16], sizes = [2, 16, 4], strides = [1, 1, 1]} : vector<2x16x32xf32> to vector<2x16x4xf32>
    "tpu.trace_start"() <{level = 10 : i32, message = "bqd,bkd->bqk"}> : () -> ()
    %cst_52 = arith.constant dense<0.000000e+00> : vector<2x16x16xf32>
    %137 = tpu.matmul %134, %135, %cst_52 {dimension_numbers = #tpu.dot_dimension_numbers<[2], [2], [1], [1], [0, 0, 0, 1, 1, 1], [0], [0]>} : vector<2x16x4xf32>, vector<2x16x4xf32>, vector<2x16x16xf32> -> vector<2x16x16xf32>
    "tpu.trace_stop"() : () -> ()
    %cst_53 = arith.constant dense<0xFF800000> : vector<2x16xf32>
    %138 = vector.multi_reduction <maximumf>, %137, %cst_53 [2] : vector<2x16x16xf32> to vector<2x16xf32>
    %139 = vector.shape_cast %138 : vector<2x16xf32> to vector<2x16x1xf32>
    %140 = vector.broadcast %139 : vector<2x16x1xf32> to vector<2x16x16xf32>
    %141 = arith.subf %137, %140 : vector<2x16x16xf32>
    %142 = math.exp %141 : vector<2x16x16xf32>
    %cst_54 = arith.constant dense<0.000000e+00> : vector<2x16xf32>
    %143 = vector.multi_reduction <add>, %142, %cst_54 [2] : vector<2x16x16xf32> to vector<2x16xf32>
    %144 = vector.shape_cast %143 : vector<2x16xf32> to vector<2x16x1xf32>
    %145 = tpu.reciprocal %144 {approx = true} : vector<2x16x1xf32> -> vector<2x16x1xf32>
    %146 = vector.broadcast %145 : vector<2x16x1xf32> to vector<2x16x16xf32>
    %147 = arith.mulf %142, %146 : vector<2x16x16xf32>
    "tpu.trace_start"() <{level = 10 : i32, message = "bqk,bkd->bqd"}> : () -> ()
    %cst_55 = arith.constant dense<0.000000e+00> : vector<2x16x4xf32>
    %148 = tpu.matmul %147, %136, %cst_55 {dimension_numbers = #tpu.dot_dimension_numbers<[2], [1], [1], [2], [0, 0, 0, 1, 1, 2], [0], [0]>} : vector<2x16x16xf32>, vector<2x16x4xf32>, vector<2x16x4xf32> -> vector<2x16x4xf32>
    "tpu.trace_stop"() : () -> ()
    %149 = vector.extract_strided_slice %69 {offsets = [0, 0, 20], sizes = [2, 16, 4], strides = [1, 1, 1]} : vector<2x16x32xf32> to vector<2x16x4xf32>
    %150 = vector.extract_strided_slice %71 {offsets = [0, 0, 20], sizes = [2, 16, 4], strides = [1, 1, 1]} : vector<2x16x32xf32> to vector<2x16x4xf32>
    %151 = vector.extract_strided_slice %73 {offsets = [0, 0, 20], sizes = [2, 16, 4], strides = [1, 1, 1]} : vector<2x16x32xf32> to vector<2x16x4xf32>
    "tpu.trace_start"() <{level = 10 : i32, message = "bqd,bkd->bqk"}> : () -> ()
    %cst_56 = arith.constant dense<0.000000e+00> : vector<2x16x16xf32>
    %152 = tpu.matmul %149, %150, %cst_56 {dimension_numbers = #tpu.dot_dimension_numbers<[2], [2], [1], [1], [0, 0, 0, 1, 1, 1], [0], [0]>} : vector<2x16x4xf32>, vector<2x16x4xf32>, vector<2x16x16xf32> -> vector<2x16x16xf32>
    "tpu.trace_stop"() : () -> ()
    %cst_57 = arith.constant dense<0xFF800000> : vector<2x16xf32>
    %153 = vector.multi_reduction <maximumf>, %152, %cst_57 [2] : vector<2x16x16xf32> to vector<2x16xf32>
    %154 = vector.shape_cast %153 : vector<2x16xf32> to vector<2x16x1xf32>
    %155 = vector.broadcast %154 : vector<2x16x1xf32> to vector<2x16x16xf32>
    %156 = arith.subf %152, %155 : vector<2x16x16xf32>
    %157 = math.exp %156 : vector<2x16x16xf32>
    %cst_58 = arith.constant dense<0.000000e+00> : vector<2x16xf32>
    %158 = vector.multi_reduction <add>, %157, %cst_58 [2] : vector<2x16x16xf32> to vector<2x16xf32>
    %159 = vector.shape_cast %158 : vector<2x16xf32> to vector<2x16x1xf32>
    %160 = tpu.reciprocal %159 {approx = true} : vector<2x16x1xf32> -> vector<2x16x1xf32>
    %161 = vector.broadcast %160 : vector<2x16x1xf32> to vector<2x16x16xf32>
    %162 = arith.mulf %157, %161 : vector<2x16x16xf32>
    "tpu.trace_start"() <{level = 10 : i32, message = "bqk,bkd->bqd"}> : () -> ()
    %cst_59 = arith.constant dense<0.000000e+00> : vector<2x16x4xf32>
    %163 = tpu.matmul %162, %151, %cst_59 {dimension_numbers = #tpu.dot_dimension_numbers<[2], [1], [1], [2], [0, 0, 0, 1, 1, 2], [0], [0]>} : vector<2x16x16xf32>, vector<2x16x4xf32>, vector<2x16x4xf32> -> vector<2x16x4xf32>
    "tpu.trace_stop"() : () -> ()
    %164 = vector.extract_strided_slice %69 {offsets = [0, 0, 24], sizes = [2, 16, 4], strides = [1, 1, 1]} : vector<2x16x32xf32> to vector<2x16x4xf32>
    %165 = vector.extract_strided_slice %71 {offsets = [0, 0, 24], sizes = [2, 16, 4], strides = [1, 1, 1]} : vector<2x16x32xf32> to vector<2x16x4xf32>
    %166 = vector.extract_strided_slice %73 {offsets = [0, 0, 24], sizes = [2, 16, 4], strides = [1, 1, 1]} : vector<2x16x32xf32> to vector<2x16x4xf32>
    "tpu.trace_start"() <{level = 10 : i32, message = "bqd,bkd->bqk"}> : () -> ()
    %cst_60 = arith.constant dense<0.000000e+00> : vector<2x16x16xf32>
    %167 = tpu.matmul %164, %165, %cst_60 {dimension_numbers = #tpu.dot_dimension_numbers<[2], [2], [1], [1], [0, 0, 0, 1, 1, 1], [0], [0]>} : vector<2x16x4xf32>, vector<2x16x4xf32>, vector<2x16x16xf32> -> vector<2x16x16xf32>
    "tpu.trace_stop"() : () -> ()
    %cst_61 = arith.constant dense<0xFF800000> : vector<2x16xf32>
    %168 = vector.multi_reduction <maximumf>, %167, %cst_61 [2] : vector<2x16x16xf32> to vector<2x16xf32>
    %169 = vector.shape_cast %168 : vector<2x16xf32> to vector<2x16x1xf32>
    %170 = vector.broadcast %169 : vector<2x16x1xf32> to vector<2x16x16xf32>
    %171 = arith.subf %167, %170 : vector<2x16x16xf32>
    %172 = math.exp %171 : vector<2x16x16xf32>
    %cst_62 = arith.constant dense<0.000000e+00> : vector<2x16xf32>
    %173 = vector.multi_reduction <add>, %172, %cst_62 [2] : vector<2x16x16xf32> to vector<2x16xf32>
    %174 = vector.shape_cast %173 : vector<2x16xf32> to vector<2x16x1xf32>
    %175 = tpu.reciprocal %174 {approx = true} : vector<2x16x1xf32> -> vector<2x16x1xf32>
    %176 = vector.broadcast %175 : vector<2x16x1xf32> to vector<2x16x16xf32>
    %177 = arith.mulf %172, %176 : vector<2x16x16xf32>
    "tpu.trace_start"() <{level = 10 : i32, message = "bqk,bkd->bqd"}> : () -> ()
    %cst_63 = arith.constant dense<0.000000e+00> : vector<2x16x4xf32>
    %178 = tpu.matmul %177, %166, %cst_63 {dimension_numbers = #tpu.dot_dimension_numbers<[2], [1], [1], [2], [0, 0, 0, 1, 1, 2], [0], [0]>} : vector<2x16x16xf32>, vector<2x16x4xf32>, vector<2x16x4xf32> -> vector<2x16x4xf32>
    "tpu.trace_stop"() : () -> ()
    %179 = vector.extract_strided_slice %69 {offsets = [0, 0, 28], sizes = [2, 16, 4], strides = [1, 1, 1]} : vector<2x16x32xf32> to vector<2x16x4xf32>
    %180 = vector.extract_strided_slice %71 {offsets = [0, 0, 28], sizes = [2, 16, 4], strides = [1, 1, 1]} : vector<2x16x32xf32> to vector<2x16x4xf32>
    %181 = vector.extract_strided_slice %73 {offsets = [0, 0, 28], sizes = [2, 16, 4], strides = [1, 1, 1]} : vector<2x16x32xf32> to vector<2x16x4xf32>
    "tpu.trace_start"() <{level = 10 : i32, message = "bqd,bkd->bqk"}> : () -> ()
    %cst_64 = arith.constant dense<0.000000e+00> : vector<2x16x16xf32>
    %182 = tpu.matmul %179, %180, %cst_64 {dimension_numbers = #tpu.dot_dimension_numbers<[2], [2], [1], [1], [0, 0, 0, 1, 1, 1], [0], [0]>} : vector<2x16x4xf32>, vector<2x16x4xf32>, vector<2x16x16xf32> -> vector<2x16x16xf32>
    "tpu.trace_stop"() : () -> ()
    %cst_65 = arith.constant dense<0xFF800000> : vector<2x16xf32>
    %183 = vector.multi_reduction <maximumf>, %182, %cst_65 [2] : vector<2x16x16xf32> to vector<2x16xf32>
    %184 = vector.shape_cast %183 : vector<2x16xf32> to vector<2x16x1xf32>
    %185 = vector.broadcast %184 : vector<2x16x1xf32> to vector<2x16x16xf32>
    %186 = arith.subf %182, %185 : vector<2x16x16xf32>
    %187 = math.exp %186 : vector<2x16x16xf32>
    %cst_66 = arith.constant dense<0.000000e+00> : vector<2x16xf32>
    %188 = vector.multi_reduction <add>, %187, %cst_66 [2] : vector<2x16x16xf32> to vector<2x16xf32>
    %189 = vector.shape_cast %188 : vector<2x16xf32> to vector<2x16x1xf32>
    %190 = tpu.reciprocal %189 {approx = true} : vector<2x16x1xf32> -> vector<2x16x1xf32>
    %191 = vector.broadcast %190 : vector<2x16x1xf32> to vector<2x16x16xf32>
    %192 = arith.mulf %187, %191 : vector<2x16x16xf32>
    "tpu.trace_start"() <{level = 10 : i32, message = "bqk,bkd->bqd"}> : () -> ()
    %cst_67 = arith.constant dense<0.000000e+00> : vector<2x16x4xf32>
    %193 = tpu.matmul %192, %181, %cst_67 {dimension_numbers = #tpu.dot_dimension_numbers<[2], [1], [1], [2], [0, 0, 0, 1, 1, 2], [0], [0]>} : vector<2x16x16xf32>, vector<2x16x4xf32>, vector<2x16x4xf32> -> vector<2x16x4xf32>
    "tpu.trace_stop"() : () -> ()
    %194 = tpu.concatenate %88, %103, %118, %133, %148, %163, %178, %193 in 2 : vector<2x16x4xf32>, vector<2x16x4xf32>, vector<2x16x4xf32>, vector<2x16x4xf32>, vector<2x16x4xf32>, vector<2x16x4xf32>, vector<2x16x4xf32>, vector<2x16x4xf32> -> vector<2x16x32xf32>
    %195 = vector.shape_cast %194 : vector<2x16x32xf32> to vector<32x32xf32>
    %cst_68 = arith.constant dense<0.000000e+00> : vector<32x32xf32>
    %196 = tpu.matmul %195, %2, %cst_68 {dimension_numbers = #tpu.dot_dimension_numbers<[1], [0], [0], [1], [0, 0, 1, 1], [], []>} : vector<32x32xf32>, vector<32x32xf32>, vector<32x32xf32> -> vector<32x32xf32>
    %197 = vector.broadcast %3 : vector<1x32xf32> to vector<32x32xf32>
    %198 = arith.addf %196, %197 : vector<32x32xf32>
    %199 = arith.addf %64, %198 : vector<32x32xf32>
    %200 = vector.shape_cast %199 : vector<32x32xf32> to vector<2x16x32xf32>
    %201 = vector.extract_strided_slice %200 {offsets = [0, 0, 0], sizes = [2, 8, 32], strides = [1, 1, 1]} : vector<2x16x32xf32> to vector<2x8x32xf32>
    %cst_69 = arith.constant dense<0.000000e+00> : vector<2x32xf32>
    %202 = vector.multi_reduction <add>, %201, %cst_69 [1] : vector<2x8x32xf32> to vector<2x32xf32>
    %c0_70 = arith.constant 0 : index
    %c0_71 = arith.constant 0 : index
    %c0_72 = arith.constant 0 : index
    %203 = vector.load %arg9[%c0_70, %c0_71, %c0_72] : memref<2x32x32xf32, #tpu.memory_space<vmem>>, vector<1x32x32xf32>
    %204 = vector.shape_cast %203 : vector<1x32x32xf32> to vector<32x32xf32>
    %cst_73 = arith.constant dense<0.000000e+00> : vector<2x32xf32>
    %205 = tpu.matmul %202, %204, %cst_73 {dimension_numbers = #tpu.dot_dimension_numbers<[1], [0], [0], [1], [0, 0, 1, 1], [], []>} : vector<2x32xf32>, vector<32x32xf32>, vector<2x32xf32> -> vector<2x32xf32>
    %206 = vector.extract_strided_slice %200 {offsets = [0, 8, 0], sizes = [2, 8, 32], strides = [1, 1, 1]} : vector<2x16x32xf32> to vector<2x8x32xf32>
    %cst_74 = arith.constant dense<0.000000e+00> : vector<2x32xf32>
    %207 = vector.multi_reduction <add>, %206, %cst_74 [1] : vector<2x8x32xf32> to vector<2x32xf32>
    %c1_75 = arith.constant 1 : index
    %c0_76 = arith.constant 0 : index
    %c0_77 = arith.constant 0 : index
    %208 = vector.load %arg9[%c1_75, %c0_76, %c0_77] : memref<2x32x32xf32, #tpu.memory_space<vmem>>, vector<1x32x32xf32>
    %209 = vector.shape_cast %208 : vector<1x32x32xf32> to vector<32x32xf32>
    %cst_78 = arith.constant dense<0.000000e+00> : vector<2x32xf32>
    %210 = tpu.matmul %207, %209, %cst_78 {dimension_numbers = #tpu.dot_dimension_numbers<[1], [0], [0], [1], [0, 0, 1, 1], [], []>} : vector<2x32xf32>, vector<32x32xf32>, vector<2x32xf32> -> vector<2x32xf32>
    %211 = arith.addf %205, %210 : vector<2x32xf32>
    %212 = vector.broadcast %4 : vector<1x32xf32> to vector<2x32xf32>
    %213 = arith.addf %211, %212 : vector<2x32xf32>
    %c0_79 = arith.constant 0 : index
    %c0_80 = arith.constant 0 : index
    %214 = vector.load %arg11[%c0_79, %c0_80] : memref<2x32xf32, #tpu.memory_space<vmem>>, vector<2x32xf32>
    tpu.vector_store %arg11[%c0_79, %c0_80], %213 {strides = array<i32>} : memref<2x32xf32, #tpu.memory_space<vmem>>, vector<2x32xf32>,
    return
  }
  func.func @transform_0(%arg0: i32) -> (i32, i32, i32) {
    %c0_i32 = arith.constant 0 : i32
    %c0_i32_0 = arith.constant 0 : i32
    %c0_i32_1 = arith.constant 0 : i32
    return %arg0, %c0_i32, %c0_i32_0 : i32, i32, i32
  }
  func.func @transform_1(%arg0: i32) -> (i32, i32, i32) {
    %c0_i32 = arith.constant 0 : i32
    %c0_i32_0 = arith.constant 0 : i32
    %c0_i32_1 = arith.constant 0 : i32
    return %arg0, %c0_i32, %c0_i32_0 : i32, i32, i32
  }
  func.func @transform_2(%arg0: i32) -> (i32, i32, i32) {
    %c0_i32 = arith.constant 0 : i32
    %c0_i32_0 = arith.constant 0 : i32
    %c0_i32_1 = arith.constant 0 : i32
    %c0_i32_2 = arith.constant 0 : i32
    return %c0_i32, %c0_i32_0, %c0_i32_1 : i32, i32, i32
  }
  func.func @transform_3(%arg0: i32) -> (i32, i32, i32) {
    %c0_i32 = arith.constant 0 : i32
    %c0_i32_0 = arith.constant 0 : i32
    %c0_i32_1 = arith.constant 0 : i32
    %c0_i32_2 = arith.constant 0 : i32
    return %c0_i32, %c0_i32_0, %c0_i32_1 : i32, i32, i32
  }
  func.func @transform_4(%arg0: i32) -> (i32, i32) {
    %c0_i32 = arith.constant 0 : i32
    %c0_i32_0 = arith.constant 0 : i32
    %c0_i32_1 = arith.constant 0 : i32
    return %c0_i32, %c0_i32_0 : i32, i32
  }
  func.func @transform_5(%arg0: i32) -> (i32, i32) {
    %c0_i32 = arith.constant 0 : i32
    %c0_i32_0 = arith.constant 0 : i32
    %c0_i32_1 = arith.constant 0 : i32
    return %c0_i32, %c0_i32_0 : i32, i32
  }
  func.func @transform_6(%arg0: i32) -> (i32, i32) {
    %c0_i32 = arith.constant 0 : i32
    %c0_i32_0 = arith.constant 0 : i32
    %c0_i32_1 = arith.constant 0 : i32
    return %c0_i32, %c0_i32_0 : i32, i32
  }
  func.func @transform_7(%arg0: i32) -> (i32, i32) {
    %c0_i32 = arith.constant 0 : i32
    %c0_i32_0 = arith.constant 0 : i32
    %c0_i32_1 = arith.constant 0 : i32
    return %c0_i32, %c0_i32_0 : i32, i32
  }
  func.func @transform_8(%arg0: i32) -> (i32, i32, i32) {
    %c0_i32 = arith.constant 0 : i32
    %c0_i32_0 = arith.constant 0 : i32
    %c0_i32_1 = arith.constant 0 : i32
    %c0_i32_2 = arith.constant 0 : i32
    return %c0_i32, %c0_i32_0, %c0_i32_1 : i32, i32, i32
  }
  func.func @transform_9(%arg0: i32) -> (i32, i32) {
    %c0_i32 = arith.constant 0 : i32
    %c0_i32_0 = arith.constant 0 : i32
    %c0_i32_1 = arith.constant 0 : i32
    return %c0_i32, %c0_i32_0 : i32, i32
  }
  func.func @transform_10(%arg0: i32) -> (i32, i32) {
    %c0_i32 = arith.constant 0 : i32
    %c0_i32_0 = arith.constant 0 : i32
    return %arg0, %c0_i32 : i32, i32
  }
}

</mosaic_0001>

<llo_original>
// kernel: tpu_custom_call.1
$region0: #{tpu_custom_call.1}
  #allocation0 [shape = 'u32[]', space=smem, size = 0x4, offset = 0x4, fixed_abs, tag = 'smem constant byte address 0x4 - core index']
  #allocation1 [shape = 'u32[144,128]{1,0:T(1,128)}', space=vmem, size = 0x12000, scoped, tag = 'internal scratch']
  %s0 = inlined_call_operand.hbm [shape: f32[2,8,32], index: 0, kind: input, shape index: {}]
  %s1 = inlined_call_operand.hbm [shape: f32[2,8,32], index: 1, kind: input, shape index: {}]
  %s2 = inlined_call_operand.vmem [shape: f32[2,1,32], index: 2, kind: input, shape index: {}]
  %s3 = inlined_call_operand.vmem [shape: f32[2,1,32], index: 3, kind: input, shape index: {}]
  %s4 = inlined_call_operand.hbm [shape: f32[32,96], index: 4, kind: input, shape index: {}]
  %s5 = inlined_call_operand.vmem [shape: f32[1,96], index: 5, kind: input, shape index: {}]
  %s6 = inlined_call_operand.hbm [shape: f32[32,32], index: 6, kind: input, shape index: {}]
  %s7 = inlined_call_operand.vmem [shape: f32[1,32], index: 7, kind: input, shape index: {}]
  %s8 = inlined_call_operand.hbm [shape: f32[2,32,32], index: 8, kind: input, shape index: {}]
  %s9 = inlined_call_operand.vmem [shape: f32[1,32], index: 9, kind: input, shape index: {}]
  %s10 = inlined_call_operand.hbm [shape: f32[2,32], index: 10, kind: output, shape index: {}]
  %s11 = sld [smem:[#allocation0]]
  $region70: #{tpu_custom_call.1} parent=0
    _
  %s13 = ssub.s32 1, %s11
  %s14 = scalar_select 0, %s13, %s11
  $region1: #{tpu_custom_call.1} parent=0
    #allocation2 [shape = 'u8[8192]{0}', space=vmem, size = 0x2000, scoped, tag = 'input window, operand 0, single buffered']
    #allocation3 [shape = 's32[1]{0}', space=sflag, size = 0x4, scoped, tag = 'scoped memory for tpu_custom_call.1']
    #allocation4 [shape = 's32[1]{0}', space=sflag, size = 0x4, scoped, tag = 'scoped memory for tpu_custom_call.1']
    #allocation5 [shape = 'u8[8192]{0}', space=vmem, size = 0x2000, scoped, tag = 'input window, operand 1, single buffered']
    #allocation6 [shape = 's32[1]{0}', space=sflag, size = 0x4, scoped, tag = 'scoped memory for tpu_custom_call.1']
    #allocation7 [shape = 'u8[16384]{0}', space=vmem, size = 0x4000, scoped, tag = 'input window, operand 4, single buffered']
    #allocation8 [shape = 'u8[16384]{0}', space=vmem, size = 0x4000, scoped, tag = 'input window, operand 6, single buffered']
    #allocation9 [shape = 's32[1]{0}', space=sflag, size = 0x4, scoped, tag = 'scoped memory for tpu_custom_call.1']
    #allocation10 [shape = 'u8[32768]{0}', space=vmem, size = 0x8000, scoped, tag = 'input window, operand 8, single buffered']
    #allocation11 [shape = 'u8[1024]{0}', space=vmem, size = 0x400, scoped, tag = 'output window, operand 0, single buffered']
    %15 = vsyncpa [#allocation3], 0
    %16 = vsyncpa [#allocation6], 0
    %17 = vsyncpa [#allocation9], 0
    %18 = vsyncpa [#allocation4], 0
    // Predicated region
    $region2: #{tpu_custom_call.1} parent=1 // pred_check
      _
    $region3: #{tpu_custom_call.1} parent=1 // pred_check_branch
      %20 = sbr.rel (0) target = $region5
    $region4: #{tpu_custom_call.1} parent=1 // pred_region
      %s22 = ssub.s32 256, 256
      %23 = vsyncadd [#allocation3], %s22
      %s24 = sshll.u32 [#allocation2], 4
      %s25 = int_to_ptr.vmem [resolvable:$true] %s24
      %30 = dma.hbm_to_vmem [thread:$0]  %s0, 256, %s25, [#allocation3], 128, 128, 8
    $region5: #{tpu_custom_call.1} parent=1 // pred_fallthru
      _
    // Predicated region
    $region6: #{tpu_custom_call.1} parent=1 // pred_check
      _
    $region7: #{tpu_custom_call.1} parent=1 // pred_check_branch
      %32 = sbr.rel (0) target = $region9
    $region8: #{tpu_custom_call.1} parent=1 // pred_region
      %s34 = ssub.s32 256, 256
      %35 = vsyncadd [#allocation6], %s34
      %s36 = sshll.u32 [#allocation5], 4
      %s37 = int_to_ptr.vmem [resolvable:$true] %s36
      %42 = dma.hbm_to_vmem [thread:$0]  %s1, 256, %s37, [#allocation6], 128, 128, 8
    $region9: #{tpu_custom_call.1} parent=1 // pred_fallthru
      _
    // Predicated region
    $region10: #{tpu_custom_call.1} parent=1 // pred_check
      _
    $region11: #{tpu_custom_call.1} parent=1 // pred_check_branch
      %44 = sbr.rel (0) target = $region13
    $region12: #{tpu_custom_call.1} parent=1 // pred_region
      _
    $region13: #{tpu_custom_call.1} parent=1 // pred_fallthru
      _
    // Predicated region
    $region14: #{tpu_custom_call.1} parent=1 // pred_check
      _
    $region15: #{tpu_custom_call.1} parent=1 // pred_check_branch
      %46 = sbr.rel (0) target = $region17
    $region16: #{tpu_custom_call.1} parent=1 // pred_region
      _
    $region17: #{tpu_custom_call.1} parent=1 // pred_fallthru
      _
    // Predicated region
    $region18: #{tpu_custom_call.1} parent=1 // pred_check
      _
    $region19: #{tpu_custom_call.1} parent=1 // pred_check_branch
      %48 = sbr.rel (0) target = $region21
    $region20: #{tpu_custom_call.1} parent=1 // pred_region
      %s50 = ssub.s32 512, 512
      %51 = vsyncadd [#allocation6], %s50
      %s52 = sshll.u32 [#allocation7], 4
      %s53 = int_to_ptr.vmem [resolvable:$true] %s52
      %58 = dma.hbm_to_vmem [thread:$0]  %s4, 512, %s53, [#allocation6], 128, 128, 8
    $region21: #{tpu_custom_call.1} parent=1 // pred_fallthru
      _
    // Predicated region
    $region22: #{tpu_custom_call.1} parent=1 // pred_check
      _
    $region23: #{tpu_custom_call.1} parent=1 // pred_check_branch
      %60 = sbr.rel (0) target = $region25
    $region24: #{tpu_custom_call.1} parent=1 // pred_region
      _
    $region25: #{tpu_custom_call.1} parent=1 // pred_fallthru
      _
    // Predicated region
    $region26: #{tpu_custom_call.1} parent=1 // pred_check
      _
    $region27: #{tpu_custom_call.1} parent=1 // pred_check_branch
      %62 = sbr.rel (0) target = $region29
    $region28: #{tpu_custom_call.1} parent=1 // pred_region
      %s64 = ssub.s32 512, 512
      %65 = vsyncadd [#allocation9], %s64
      %s66 = sshll.u32 [#allocation8], 4
      %s67 = int_to_ptr.vmem [resolvable:$true] %s66
      %72 = dma.hbm_to_vmem [thread:$0]  %s6, 512, %s67, [#allocation9], 128, 128, 8
    $region29: #{tpu_custom_call.1} parent=1 // pred_fallthru
      _
    // Predicated region
    $region30: #{tpu_custom_call.1} parent=1 // pred_check
      _
    $region31: #{tpu_custom_call.1} parent=1 // pred_check_branch
      %74 = sbr.rel (0) target = $region33
    $region32: #{tpu_custom_call.1} parent=1 // pred_region
      _
    $region33: #{tpu_custom_call.1} parent=1 // pred_fallthru
      _
    // Predicated region
    $region34: #{tpu_custom_call.1} parent=1 // pred_check
      _
    $region35: #{tpu_custom_call.1} parent=1 // pred_check_branch
      %76 = sbr.rel (0) target = $region37
    $region36: #{tpu_custom_call.1} parent=1 // pred_region
      %s78 = ssub.s32 1024, 1024
      %79 = vsyncadd [#allocation9], %s78
      %s80 = sshll.u32 [#allocation10], 4
      %s81 = int_to_ptr.vmem [resolvable:$true] %s80
      %86 = dma.hbm_to_vmem [thread:$0]  %s8, 1024, %s81, [#allocation9], 128, 128, 8
    $region37: #{tpu_custom_call.1} parent=1 // pred_fallthru
      _
    // Predicated region
    $region38: #{tpu_custom_call.1} parent=1 // pred_check
      _
    $region39: #{tpu_custom_call.1} parent=1 // pred_check_branch
      %88 = sbr.rel (0) target = $region41
    $region40: #{tpu_custom_call.1} parent=1 // pred_region
      _
    $region41: #{tpu_custom_call.1} parent=1 // pred_fallthru
      _
    // Predicated region
    $region42: #{tpu_custom_call.1} parent=1 // pred_check
      _
    $region43: #{tpu_custom_call.1} parent=1 // pred_check_branch
      %90 = sbr.rel (0) target = $region45
    $region44: #{tpu_custom_call.1} parent=1 // pred_region
      %91 = dma.done [#allocation3], 256
    $region45: #{tpu_custom_call.1} parent=1 // pred_fallthru
      _
    // Predicated region
    $region46: #{tpu_custom_call.1} parent=1 // pred_check
      _
    $region47: #{tpu_custom_call.1} parent=1 // pred_check_branch
      %93 = sbr.rel (0) target = $region49
    $region48: #{tpu_custom_call.1} parent=1 // pred_region
      %94 = dma.done [#allocation6], 256
    $region49: #{tpu_custom_call.1} parent=1 // pred_fallthru
      _
    // Predicated region
    $region50: #{tpu_custom_call.1} parent=1 // pred_check
      _
    $region51: #{tpu_custom_call.1} parent=1 // pred_check_branch
      %96 = sbr.rel (0) target = $region53
    $region52: #{tpu_custom_call.1} parent=1 // pred_region
      %97 = dma.done [#allocation6], 512
    $region53: #{tpu_custom_call.1} parent=1 // pred_fallthru
      _
    // Predicated region
    $region54: #{tpu_custom_call.1} parent=1 // pred_check
      _
    $region55: #{tpu_custom_call.1} parent=1 // pred_check_branch
      %99 = sbr.rel (0) target = $region57
    $region56: #{tpu_custom_call.1} parent=1 // pred_region
      %100 = dma.done [#allocation9], 512
    $region57: #{tpu_custom_call.1} parent=1 // pred_fallthru
      _
    // Predicated region
    $region58: #{tpu_custom_call.1} parent=1 // pred_check
      _
    $region59: #{tpu_custom_call.1} parent=1 // pred_check_branch
      %102 = sbr.rel (0) target = $region61
    $region60: #{tpu_custom_call.1} parent=1 // pred_region
      %103 = dma.done [#allocation9], 1024
    $region61: #{tpu_custom_call.1} parent=1 // pred_fallthru
      _
    %v104 = vld [vmem:[#allocation7] sm:$0xff]
    %v105 = vld [vmem:[#allocation7 + $0x8] sm:$0xff]
    %v106 = vld [vmem:[#allocation7 + $0x10] sm:$0xff]
    %v107 = vld [vmem:[#allocation7 + $0x18] sm:$0xff]
    %v108 = vld [vmem:[%s5] sm:$0x1]
    %v109 = vld [vmem:[#allocation8] sm:$0xff]
    %v110 = vld [vmem:[#allocation8 + $0x8] sm:$0xff]
    %v111 = vld [vmem:[#allocation8 + $0x10] sm:$0xff]
    %v112 = vld [vmem:[#allocation8 + $0x18] sm:$0xff]
    %v113 = vld [vmem:[%s7] sm:$0x1]
    %v114 = vld [vmem:[%s9] sm:$0x1]
    %v115 = vld [vmem:[#allocation2] sm:$0xff]
    %v116 = vld [vmem:[#allocation2 + $0x8] sm:$0xff]
    %vm117 = vcmask 261120
    %v118 = vsel %vm117, %v115, 0.0
    %119 = vadd.xlane.f32.xlu0 %v118
    %v120 = vpop.xlane.xlu0 %119
    %v121 = vsel %vm117, %v116, 0.0
    %122 = vadd.xlane.f32.xlu0 %v121
    %v123 = vpop.xlane.xlu0 %122
    %v124 = vrcp.pop 32.0
    %v125 = vmul.f32 %v120, %v124
    %v126 = vmul.f32 %v123, %v124
    %v127 = vsub.f32 %v115, %v125
    %v128 = vsub.f32 %v116, %v126
    %v129 = vmul.f32 %v127, %v127
    %v130 = vmul.f32 %v128, %v128
    %v131 = vsel %vm117, %v129, 0.0
    %132 = vadd.xlane.f32.xlu0 %v131
    %v133 = vpop.xlane.xlu0 %132
    %v134 = vsel %vm117, %v130, 0.0
    %135 = vadd.xlane.f32.xlu0 %v134
    %v136 = vpop.xlane.xlu0 %135
    %v137 = vmul.f32 %v133, %v124
    %v138 = vmul.f32 %v136, %v124
    %v139 = vadd.f32 %v137, 1e-05
    %v140 = vadd.f32 %v138, 1e-05
    %v141 = vrsqrt.pop %v139
    %v142 = vrsqrt.pop %v140
    %v143 = vmul.f32 %v127, %v141
    %v144 = vmul.f32 %v128, %v142
    %v145 = vld [vmem:[%s2] sm:$0x1]
    %v147 = vlaneseq
    %v148 = vshrl.u32 %v147, 7
    %v149 = vsub.s32 0, %v148
    %v150 = vrot.slane %v145, %v149
    %v152 = vmul.f32 %v143, %v150
    %v153 = vmul.f32 %v144, %v150
    %v154 = vld [vmem:[%s3] sm:$0x1]
    %v156 = vlaneseq
    %v157 = vshrl.u32 %v156, 7
    %v158 = vsub.s32 0, %v157
    %v159 = vrot.slane %v154, %v158
    %v161 = vadd.f32 %v152, %v159
    %v162 = vadd.f32 %v153, %v159
    %v163 = vld [vmem:[#allocation5] sm:$0xff]
    %v164 = vld [vmem:[#allocation5 + $0x8] sm:$0xff]
    %v165 = vsel %vm117, %v163, 0.0
    %166 = vadd.xlane.f32.xlu0 %v165
    %v167 = vpop.xlane.xlu0 %166
    %v168 = vsel %vm117, %v164, 0.0
    %169 = vadd.xlane.f32.xlu0 %v168
    %v170 = vpop.xlane.xlu0 %169
    %v171 = vmul.f32 %v167, %v124
    %v172 = vmul.f32 %v170, %v124
    %v173 = vsub.f32 %v163, %v171
    %v174 = vsub.f32 %v164, %v172
    %v175 = vmul.f32 %v173, %v173
    %v176 = vmul.f32 %v174, %v174
    %v177 = vsel %vm117, %v175, 0.0
    %178 = vadd.xlane.f32.xlu0 %v177
    %v179 = vpop.xlane.xlu0 %178
    %v180 = vsel %vm117, %v176, 0.0
    %181 = vadd.xlane.f32.xlu0 %v180
    %v182 = vpop.xlane.xlu0 %181
    %v183 = vmul.f32 %v179, %v124
    %v184 = vmul.f32 %v182, %v124
    %v185 = vadd.f32 %v183, 1e-05
    %v186 = vadd.f32 %v184, 1e-05
    %v187 = vrsqrt.pop %v185
    %v188 = vrsqrt.pop %v186
    %v189 = vmul.f32 %v173, %v187
    %v190 = vmul.f32 %v174, %v188
    %s191 = scalar_lea.vmem %s2, 1
    %v192 = vld [vmem:[%s191] sm:$0x1]
    %v194 = vlaneseq
    %v195 = vshrl.u32 %v194, 7
    %v196 = vsub.s32 0, %v195
    %v197 = vrot.slane %v192, %v196
    %v199 = vmul.f32 %v189, %v197
    %v200 = vmul.f32 %v190, %v197
    %s201 = scalar_lea.vmem %s3, 1
    %v202 = vld [vmem:[%s201] sm:$0x1]
    %v204 = vlaneseq
    %v205 = vshrl.u32 %v204, 7
    %v206 = vsub.s32 0, %v205
    %v207 = vrot.slane %v202, %v206
    %v209 = vadd.f32 %v199, %v207
    %v210 = vadd.f32 %v200, %v207
    %v212 = vlaneseq
    %v213 = vshrl.u32 %v212, 7
    %v214 = vsub.s32 0, %v213
    %v215 = vrot.slane %v108, %v214
    %v218 = vsel %vm117, %v161, 0
    %v221 = vsel %vm117, %v209, 0
    %v224 = vsel %vm117, %v162, 0
    %v227 = vsel %vm117, %v210, 0
    %229 = vmatprep.subr.mxu0 0.0
    %230 = vmatpush1.msra.mxu0 %v104
    %231 = vmatprep.subr.mxu0 0.0
    %232 = vmatpush1.msra.mxu0 %v105
    %233 = vmatprep.subr.mxu0 0.0
    %234 = vmatpush1.msra.mxu0 %v106
    %235 = vmatprep.subr.mxu0 0.0
    %236 = vmatpush1.msra.mxu0 %v107
    %237 = vmatprep.subr.mxu0 0.0
    %238 = vmatpush1.msra.mxu0 0.0
    %239 = vmatprep.subr.mxu0 0.0
    %240 = vmatpush1.msra.mxu0 0.0
    %241 = vmatprep.subr.mxu0 0.0
    %242 = vmatpush1.msra.mxu0 0.0
    %243 = vmatprep.subr.mxu0 0.0
    %244 = vmatpush1.msra.mxu0 0.0
    %245 = vmatprep.subr.mxu0 0.0
    %246 = vmatpush1.msra.mxu0 0.0
    %247 = vmatprep.subr.mxu0 0.0
    %248 = vmatpush1.msra.mxu0 0.0
    %249 = vmatprep.subr.mxu0 0.0
    %250 = vmatpush1.msra.mxu0 0.0
    %251 = vmatprep.subr.mxu0 0.0
    %252 = vmatpush1.msra.mxu0 0.0
    %253 = vmatprep.subr.mxu0 0.0
    %254 = vmatpush1.msra.mxu0 0.0
    %255 = vmatprep.subr.mxu0 0.0
    %256 = vmatpush1.msra.mxu0 0.0
    %257 = vmatprep.subr.mxu0 0.0
    %258 = vmatpush1.msra.mxu0 0.0
    %259 = vmatprep.subr.mxu0 0.0
    %260 = vmatpush1.msra.mxu0 0.0
    %261 = vmatprep.subr.mxu0 0.0
    %262 = vmatpush1.msra.mxu0 0.0
    %263 = vmatprep.subr.mxu0 0.0
    %264 = vmatpush1.msra.mxu0 0.0
    %265 = vmatprep.subr.mxu0 0.0
    %266 = vmatpush1.msra.mxu0 0.0
    %267 = vmatprep.subr.mxu0 0.0
    %268 = vmatpush1.msra.mxu0 0.0
    %269 = vmatprep.subr.mxu0 0.0
    %270 = vmatpush1.msra.mxu0 0.0
    %271 = vmatprep.subr.mxu0 0.0
    %272 = vmatpush1.msra.mxu0 0.0
    %273 = vmatprep.subr.mxu0 0.0
    %274 = vmatpush1.msra.mxu0 0.0
    %275 = vmatprep.subr.mxu0 0.0
    %276 = vmatpush1.msra.mxu0 0.0
    %277 = vmatprep.subr.mxu0 0.0
    %278 = vmatpush1.msra.mxu0 0.0
    %279 = vmatprep.subr.mxu0 0.0
    %280 = vmatpush1.msra.mxu0 0.0
    %281 = vmatprep.subr.mxu0 0.0
    %282 = vmatpush1.msra.mxu0 0.0
    %283 = vmatprep.subr.mxu0 0.0
    %284 = vmatpush1.msra.mxu0 0.0
    %285 = vmatprep.subr.mxu0 0.0
    %286 = vmatpush1.msra.mxu0 0.0
    %287 = vmatprep.subr.mxu0 0.0
    %288 = vmatpush1.msra.mxu0 0.0
    %289 = vmatprep.subr.mxu0 0.0
    %290 = vmatpush1.msra.mxu0 0.0
    %291 = vmatprep.subr.mxu0 0.0
    %292 = vmatpush1.msra.mxu0 0.0
    %293 = vmatprep.mubr.f32.mxu0 0.0
    %294 = vmatmul.mubr.f32.gmra.mrb[0].mxu0 %v218
    %v295 = vpop.f32.mrb[0].mxu0
    %v296 = vadd.f32 %v215, %v295
    %v297 = vpop.f32.mrb[0].mxu0
    %298 = vmatprep.mubr.f32.mxu0 0.0
    %299 = vmatmul.mubr.f32.gmra.mrb[0].mxu0 %v221
    %v300 = vpop.f32.mrb[0].mxu0
    %v301 = vadd.f32 %v215, %v300
    %v302 = vpop.f32.mrb[0].mxu0
    %303 = vmatprep.mubr.f32.mxu0 0.0
    %304 = vmatmul.mubr.f32.gmra.mrb[0].mxu0 %v224
    %v305 = vpop.f32.mrb[0].mxu0
    %v306 = vadd.f32 %v215, %v305
    %v307 = vpop.f32.mrb[0].mxu0
    %308 = vmatprep.mubr.f32.mxu0 0.0
    %309 = vmatmul.mubr.f32.gmra.mrb[0].mxu0 %v227
    %v310 = vpop.f32.mrb[0].mxu0
    %v311 = vadd.f32 %v215, %v310
    %v312 = vpop.f32.mrb[0].mxu0
    %313 = vdwg.mxu0
    %316 = vrot.lane.b32.xlu0 %v296, 96
    %v317 = vpop.permute.xlu0 %316
    %318 = vrot.lane.b32.xlu0 %v301, 96
    %v319 = vpop.permute.xlu0 %318
    %vm320 = vcmask 31744
    %v321 = vsel %vm320, %v296, 0
    %v323 = vsel %vm320, %v301, 0
    %v325 = vsel %vm320, %v317, 0
    %v327 = vsel %vm320, %v319, 0
    %329 = vmatprep.subr.mxu0 0.0
    %330 = vmatpush1.xpose.msra.mxu0 %v325
    %331 = vmatprep.subr.mxu0 0.0
    %332 = vmatpush1.xpose.msra.mxu0 %v327
    %333 = vmatprep.subr.mxu0 0.0
    %334 = vmatpush1.xpose.msra.mxu0 0.0
    %335 = vmatprep.subr.mxu0 0.0
    %336 = vmatpush1.xpose.msra.mxu0 0.0
    %337 = vmatprep.subr.mxu0 0.0
    %338 = vmatpush1.xpose.msra.mxu0 0.0
    %339 = vmatprep.subr.mxu0 0.0
    %340 = vmatpush1.xpose.msra.mxu0 0.0
    %341 = vmatprep.subr.mxu0 0.0
    %342 = vmatpush1.xpose.msra.mxu0 0.0
    %343 = vmatprep.subr.mxu0 0.0
    %344 = vmatpush1.xpose.msra.mxu0 0.0
    %345 = vmatprep.subr.mxu0 0.0
    %346 = vmatpush1.xpose.msra.mxu0 0.0
    %347 = vmatprep.subr.mxu0 0.0
    %348 = vmatpush1.xpose.msra.mxu0 0.0
    %349 = vmatprep.subr.mxu0 0.0
    %350 = vmatpush1.xpose.msra.mxu0 0.0
    %351 = vmatprep.subr.mxu0 0.0
    %352 = vmatpush1.xpose.msra.mxu0 0.0
    %353 = vmatprep.subr.mxu0 0.0
    %354 = vmatpush1.xpose.msra.mxu0 0.0
    %355 = vmatprep.subr.mxu0 0.0
    %356 = vmatpush1.xpose.msra.mxu0 0.0
    %357 = vmatprep.subr.mxu0 0.0
    %358 = vmatpush1.xpose.msra.mxu0 0.0
    %359 = vmatprep.subr.mxu0 0.0
    %360 = vmatpush1.xpose.msra.mxu0 0.0
    %361 = vmatprep.subr.mxu0 0.0
    %362 = vmatpush1.xpose.msra.mxu0 0.0
    %363 = vmatprep.subr.mxu0 0.0
    %364 = vmatpush1.xpose.msra.mxu0 0.0
    %365 = vmatprep.subr.mxu0 0.0
    %366 = vmatpush1.xpose.msra.mxu0 0.0
    %367 = vmatprep.subr.mxu0 0.0
    %368 = vmatpush1.xpose.msra.mxu0 0.0
    %369 = vmatprep.subr.mxu0 0.0
    %370 = vmatpush1.xpose.msra.mxu0 0.0
    %371 = vmatprep.subr.mxu0 0.0
    %372 = vmatpush1.xpose.msra.mxu0 0.0
    %373 = vmatprep.subr.mxu0 0.0
    %374 = vmatpush1.xpose.msra.mxu0 0.0
    %375 = vmatprep.subr.mxu0 0.0
    %376 = vmatpush1.xpose.msra.mxu0 0.0
    %377 = vmatprep.subr.mxu0 0.0
    %378 = vmatpush1.xpose.msra.mxu0 0.0
    %379 = vmatprep.subr.mxu0 0.0
    %380 = vmatpush1.xpose.msra.mxu0 0.0
    %381 = vmatprep.subr.mxu0 0.0
    %382 = vmatpush1.xpose.msra.mxu0 0.0
    %383 = vmatprep.subr.mxu0 0.0
    %384 = vmatpush1.xpose.msra.mxu0 0.0
    %385 = vmatprep.subr.mxu0 0.0
    %386 = vmatpush1.xpose.msra.mxu0 0.0
    %387 = vmatprep.subr.mxu0 0.0
    %388 = vmatpush1.xpose.msra.mxu0 0.0
    %389 = vmatprep.subr.mxu0 0.0
    %390 = vmatpush1.xpose.msra.mxu0 0.0
    %391 = vmatprep.subr.mxu0 0.0
    %392 = vmatpush1.xpose.msra.mxu0 0.0
    %393 = vmatprep.mubr.f32.mxu0 0.0
    %394 = vmatmul.mubr.f32.gmra.mrb[0].mxu0 %v321
    %v395 = vpop.f32.mrb[0].mxu0
    %v396 = vadd.f32 0.0, %v395
    %v397 = vpop.f32.mrb[0].mxu0
    %398 = vmatprep.mubr.f32.mxu0 0.0
    %399 = vmatmul.mubr.f32.gmra.mrb[0].mxu0 %v323
    %v400 = vpop.f32.mrb[0].mxu0
    %v401 = vadd.f32 0.0, %v400
    %v402 = vpop.f32.mrb[0].mxu0
    %403 = vdwg.mxu0
    %406 = vrot.lane.b32.xlu0 %v306, 96
    %v407 = vpop.permute.xlu0 %406
    %408 = vrot.lane.b32.xlu0 %v311, 96
    %v409 = vpop.permute.xlu0 %408
    %v410 = vsel %vm320, %v306, 0
    %v412 = vsel %vm320, %v311, 0
    %v414 = vsel %vm320, %v407, 0
    %v416 = vsel %vm320, %v409, 0
    %418 = vmatprep.subr.mxu0 0.0
    %419 = vmatpush1.xpose.msra.mxu0 %v414
    %420 = vmatprep.subr.mxu0 0.0
    %421 = vmatpush1.xpose.msra.mxu0 %v416
    %422 = vmatprep.subr.mxu0 0.0
    %423 = vmatpush1.xpose.msra.mxu0 0.0
    %424 = vmatprep.subr.mxu0 0.0
    %425 = vmatpush1.xpose.msra.mxu0 0.0
    %426 = vmatprep.subr.mxu0 0.0
    %427 = vmatpush1.xpose.msra.mxu0 0.0
    %428 = vmatprep.subr.mxu0 0.0
    %429 = vmatpush1.xpose.msra.mxu0 0.0
    %430 = vmatprep.subr.mxu0 0.0
    %431 = vmatpush1.xpose.msra.mxu0 0.0
    %432 = vmatprep.subr.mxu0 0.0
    %433 = vmatpush1.xpose.msra.mxu0 0.0
    %434 = vmatprep.subr.mxu0 0.0
    %435 = vmatpush1.xpose.msra.mxu0 0.0
    %436 = vmatprep.subr.mxu0 0.0
    %437 = vmatpush1.xpose.msra.mxu0 0.0
    %438 = vmatprep.subr.mxu0 0.0
    %439 = vmatpush1.xpose.msra.mxu0 0.0
    %440 = vmatprep.subr.mxu0 0.0
    %441 = vmatpush1.xpose.msra.mxu0 0.0
    %442 = vmatprep.subr.mxu0 0.0
    %443 = vmatpush1.xpose.msra.mxu0 0.0
    %444 = vmatprep.subr.mxu0 0.0
    %445 = vmatpush1.xpose.msra.mxu0 0.0
    %446 = vmatprep.subr.mxu0 0.0
    %447 = vmatpush1.xpose.msra.mxu0 0.0
    %448 = vmatprep.subr.mxu0 0.0
    %449 = vmatpush1.xpose.msra.mxu0 0.0
    %450 = vmatprep.subr.mxu0 0.0
    %451 = vmatpush1.xpose.msra.mxu0 0.0
    %452 = vmatprep.subr.mxu0 0.0
    %453 = vmatpush1.xpose.msra.mxu0 0.0
    %454 = vmatprep.subr.mxu0 0.0
    %455 = vmatpush1.xpose.msra.mxu0 0.0
    %456 = vmatprep.subr.mxu0 0.0
    %457 = vmatpush1.xpose.msra.mxu0 0.0
    %458 = vmatprep.subr.mxu0 0.0
    %459 = vmatpush1.xpose.msra.mxu0 0.0
    %460 = vmatprep.subr.mxu0 0.0
    %461 = vmatpush1.xpose.msra.mxu0 0.0
    %462 = vmatprep.subr.mxu0 0.0
    %463 = vmatpush1.xpose.msra.mxu0 0.0
    %464 = vmatprep.subr.mxu0 0.0
    %465 = vmatpush1.xpose.msra.mxu0 0.0
    %466 = vmatprep.subr.mxu0 0.0
    %467 = vmatpush1.xpose.msra.mxu0 0.0
    %468 = vmatprep.subr.mxu0 0.0
    %469 = vmatpush1.xpose.msra.mxu0 0.0
    %470 = vmatprep.subr.mxu0 0.0
    %471 = vmatpush1.xpose.msra.mxu0 0.0
    %472 = vmatprep.subr.mxu0 0.0
    %473 = vmatpush1.xpose.msra.mxu0 0.0
    %474 = vmatprep.subr.mxu0 0.0
    %475 = vmatpush1.xpose.msra.mxu0 0.0
    %476 = vmatprep.subr.mxu0 0.0
    %477 = vmatpush1.xpose.msra.mxu0 0.0
    %478 = vmatprep.subr.mxu0 0.0
    %479 = vmatpush1.xpose.msra.mxu0 0.0
    %480 = vmatprep.subr.mxu0 0.0
    %481 = vmatpush1.xpose.msra.mxu0 0.0
    %482 = vmatprep.mubr.f32.mxu0 0.0
    %483 = vmatmul.mubr.f32.gmra.mrb[0].mxu0 %v410
    %v484 = vpop.f32.mrb[0].mxu0
    %v485 = vadd.f32 0.0, %v484
    %v486 = vpop.f32.mrb[0].mxu0
    %487 = vmatprep.mubr.f32.mxu0 0.0
    %488 = vmatmul.mubr.f32.gmra.mrb[0].mxu0 %v412
    %v489 = vpop.f32.mrb[0].mxu0
    %v490 = vadd.f32 0.0, %v489
    %v491 = vpop.f32.mrb[0].mxu0
    %492 = vdwg.mxu0
    %vm493 = vcmask 130048
    %v494 = vsel %vm493, %v396, -inf
    %495 = vmax.xlane.f32.xlu0 %v494
    %v496 = vpop.xlane.xlu0 %495
    %v497 = vsel %vm493, %v401, -inf
    %498 = vmax.xlane.f32.xlu0 %v497
    %v499 = vpop.xlane.xlu0 %498
    %v500 = vsel %vm493, %v485, -inf
    %501 = vmax.xlane.f32.xlu0 %v500
    %v502 = vpop.xlane.xlu0 %501
    %v503 = vsel %vm493, %v490, -inf
    %504 = vmax.xlane.f32.xlu0 %v503
    %v505 = vpop.xlane.xlu0 %504
    %v506 = vsub.f32 %v396, %v496
    %v507 = vsub.f32 %v401, %v499
    %v508 = vsub.f32 %v485, %v502
    %v509 = vsub.f32 %v490, %v505
    %v510 = vmul.f32 %v506, 1.442695
    %v511 = vpow.pop %v510
    %v512 = vmul.f32 %v507, 1.442695
    %v513 = vpow.pop %v512
    %v514 = vmul.f32 %v508, 1.442695
    %v515 = vpow.pop %v514
    %v516 = vmul.f32 %v509, 1.442695
    %v517 = vpow.pop %v516
    %v518 = vsel %vm493, %v511, 0.0
    %519 = vadd.xlane.f32.xlu0 %v518
    %v520 = vpop.xlane.xlu0 %519
    %v521 = vsel %vm493, %v513, 0.0
    %522 = vadd.xlane.f32.xlu0 %v521
    %v523 = vpop.xlane.xlu0 %522
    %v524 = vsel %vm493, %v515, 0.0
    %525 = vadd.xlane.f32.xlu0 %v524
    %v526 = vpop.xlane.xlu0 %525
    %v527 = vsel %vm493, %v517, 0.0
    %528 = vadd.xlane.f32.xlu0 %v527
    %v529 = vpop.xlane.xlu0 %528
    %v530 = vrcp.pop %v520
    %v531 = vrcp.pop %v523
    %v532 = vrcp.pop %v526
    %v533 = vrcp.pop %v529
    %v534 = vmul.f32 %v511, %v530
    %v535 = vmul.f32 %v513, %v531
    %v536 = vmul.f32 %v515, %v532
    %v537 = vmul.f32 %v517, %v533
    %538 = vrot.lane.b32.xlu0 %v296, 64
    %v539 = vpop.permute.xlu0 %538
    %540 = vrot.lane.b32.xlu0 %v301, 64
    %v541 = vpop.permute.xlu0 %540
    %v545 = vsel %vm493, %v534, 0
    %v548 = vsel %vm493, %v535, 0
    %550 = vmatprep.subr.mxu0 0.0
    %551 = vmatpush1.msra.mxu0 %v539
    %552 = vmatprep.subr.mxu0 0.0
    %553 = vmatpush1.msra.mxu0 %v541
    %554 = vmatprep.subr.mxu0 0.0
    %555 = vmatpush1.msra.mxu0 0.0
    %556 = vmatprep.subr.mxu0 0.0
    %557 = vmatpush1.msra.mxu0 0.0
    %558 = vmatprep.subr.mxu0 0.0
    %559 = vmatpush1.msra.mxu0 0.0
    %560 = vmatprep.subr.mxu0 0.0
    %561 = vmatpush1.msra.mxu0 0.0
    %562 = vmatprep.subr.mxu0 0.0
    %563 = vmatpush1.msra.mxu0 0.0
    %564 = vmatprep.subr.mxu0 0.0
    %565 = vmatpush1.msra.mxu0 0.0
    %566 = vmatprep.subr.mxu0 0.0
    %567 = vmatpush1.msra.mxu0 0.0
    %568 = vmatprep.subr.mxu0 0.0
    %569 = vmatpush1.msra.mxu0 0.0
    %570 = vmatprep.subr.mxu0 0.0
    %571 = vmatpush1.msra.mxu0 0.0
    %572 = vmatprep.subr.mxu0 0.0
    %573 = vmatpush1.msra.mxu0 0.0
    %574 = vmatprep.subr.mxu0 0.0
    %575 = vmatpush1.msra.mxu0 0.0
    %576 = vmatprep.subr.mxu0 0.0
    %577 = vmatpush1.msra.mxu0 0.0
    %578 = vmatprep.subr.mxu0 0.0
    %579 = vmatpush1.msra.mxu0 0.0
    %580 = vmatprep.subr.mxu0 0.0
    %581 = vmatpush1.msra.mxu0 0.0
    %582 = vmatprep.subr.mxu0 0.0
    %583 = vmatpush1.msra.mxu0 0.0
    %584 = vmatprep.subr.mxu0 0.0
    %585 = vmatpush1.msra.mxu0 0.0
    %586 = vmatprep.subr.mxu0 0.0
    %587 = vmatpush1.msra.mxu0 0.0
    %588 = vmatprep.subr.mxu0 0.0
    %589 = vmatpush1.msra.mxu0 0.0
    %590 = vmatprep.subr.mxu0 0.0
    %591 = vmatpush1.msra.mxu0 0.0
    %592 = vmatprep.subr.mxu0 0.0
    %593 = vmatpush1.msra.mxu0 0.0
    %594 = vmatprep.subr.mxu0 0.0
    %595 = vmatpush1.msra.mxu0 0.0
    %596 = vmatprep.subr.mxu0 0.0
    %597 = vmatpush1.msra.mxu0 0.0
    %598 = vmatprep.subr.mxu0 0.0
    %599 = vmatpush1.msra.mxu0 0.0
    %600 = vmatprep.subr.mxu0 0.0
    %601 = vmatpush1.msra.mxu0 0.0
    %602 = vmatprep.subr.mxu0 0.0
    %603 = vmatpush1.msra.mxu0 0.0
    %604 = vmatprep.subr.mxu0 0.0
    %605 = vmatpush1.msra.mxu0 0.0
    %606 = vmatprep.subr.mxu0 0.0
    %607 = vmatpush1.msra.mxu0 0.0
    %608 = vmatprep.subr.mxu0 0.0
    %609 = vmatpush1.msra.mxu0 0.0
    %610 = vmatprep.subr.mxu0 0.0
    %611 = vmatpush1.msra.mxu0 0.0
    %612 = vmatprep.subr.mxu0 0.0
    %613 = vmatpush1.msra.mxu0 0.0
    %614 = vmatprep.mubr.f32.mxu0 0.0
    %615 = vmatmul.mubr.f32.gmra.mrb[0].mxu0 %v545
    %v616 = vpop.f32.mrb[0].mxu0
    %v617 = vadd.f32 0.0, %v616
    %v618 = vpop.f32.mrb[0].mxu0
    %619 = vmatprep.mubr.f32.mxu0 0.0
    %620 = vmatmul.mubr.f32.gmra.mrb[0].mxu0 %v548
    %v621 = vpop.f32.mrb[0].mxu0
    %v622 = vadd.f32 0.0, %v621
    %v623 = vpop.f32.mrb[0].mxu0
    %624 = vdwg.mxu0
    %625 = vrot.lane.b32.xlu0 %v306, 64
    %v626 = vpop.permute.xlu0 %625
    %627 = vrot.lane.b32.xlu0 %v311, 64
    %v628 = vpop.permute.xlu0 %627
    %v632 = vsel %vm493, %v536, 0
    %v635 = vsel %vm493, %v537, 0
    %637 = vmatprep.subr.mxu0 0.0
    %638 = vmatpush1.msra.mxu0 %v626
    %639 = vmatprep.subr.mxu0 0.0
    %640 = vmatpush1.msra.mxu0 %v628
    %641 = vmatprep.subr.mxu0 0.0
    %642 = vmatpush1.msra.mxu0 0.0
    %643 = vmatprep.subr.mxu0 0.0
    %644 = vmatpush1.msra.mxu0 0.0
    %645 = vmatprep.subr.mxu0 0.0
    %646 = vmatpush1.msra.mxu0 0.0
    %647 = vmatprep.subr.mxu0 0.0
    %648 = vmatpush1.msra.mxu0 0.0
    %649 = vmatprep.subr.mxu0 0.0
    %650 = vmatpush1.msra.mxu0 0.0
    %651 = vmatprep.subr.mxu0 0.0
    %652 = vmatpush1.msra.mxu0 0.0
    %653 = vmatprep.subr.mxu0 0.0
    %654 = vmatpush1.msra.mxu0 0.0
    %655 = vmatprep.subr.mxu0 0.0
    %656 = vmatpush1.msra.mxu0 0.0
    %657 = vmatprep.subr.mxu0 0.0
    %658 = vmatpush1.msra.mxu0 0.0
    %659 = vmatprep.subr.mxu0 0.0
    %660 = vmatpush1.msra.mxu0 0.0
    %661 = vmatprep.subr.mxu0 0.0
    %662 = vmatpush1.msra.mxu0 0.0
    %663 = vmatprep.subr.mxu0 0.0
    %664 = vmatpush1.msra.mxu0 0.0
    %665 = vmatprep.subr.mxu0 0.0
    %666 = vmatpush1.msra.mxu0 0.0
    %667 = vmatprep.subr.mxu0 0.0
    %668 = vmatpush1.msra.mxu0 0.0
    %669 = vmatprep.subr.mxu0 0.0
    %670 = vmatpush1.msra.mxu0 0.0
    %671 = vmatprep.subr.mxu0 0.0
    %672 = vmatpush1.msra.mxu0 0.0
    %673 = vmatprep.subr.mxu0 0.0
    %674 = vmatpush1.msra.mxu0 0.0
    %675 = vmatprep.subr.mxu0 0.0
    %676 = vmatpush1.msra.mxu0 0.0
    %677 = vmatprep.subr.mxu0 0.0
    %678 = vmatpush1.msra.mxu0 0.0
    %679 = vmatprep.subr.mxu0 0.0
    %680 = vmatpush1.msra.mxu0 0.0
    %681 = vmatprep.subr.mxu0 0.0
    %682 = vmatpush1.msra.mxu0 0.0
    %683 = vmatprep.subr.mxu0 0.0
    %684 = vmatpush1.msra.mxu0 0.0
    %685 = vmatprep.subr.mxu0 0.0
    %686 = vmatpush1.msra.mxu0 0.0
    %687 = vmatprep.subr.mxu0 0.0
    %688 = vmatpush1.msra.mxu0 0.0
    %689 = vmatprep.subr.mxu0 0.0
    %690 = vmatpush1.msra.mxu0 0.0
    %691 = vmatprep.subr.mxu0 0.0
    %692 = vmatpush1.msra.mxu0 0.0
    %693 = vmatprep.subr.mxu0 0.0
    %694 = vmatpush1.msra.mxu0 0.0
    %695 = vmatprep.subr.mxu0 0.0
    %696 = vmatpush1.msra.mxu0 0.0
    %697 = vmatprep.subr.mxu0 0.0
    %698 = vmatpush1.msra.mxu0 0.0
    %699 = vmatprep.subr.mxu0 0.0
    %700 = vmatpush1.msra.mxu0 0.0
    %701 = vmatprep.mubr.f32.mxu0 0.0
    %702 = vmatmul.mubr.f32.gmra.mrb[0].mxu0 %v632
    %v703 = vpop.f32.mrb[0].mxu0
    %v704 = vadd.f32 0.0, %v703
    %v705 = vpop.f32.mrb[0].mxu0
    %706 = vmatprep.mubr.f32.mxu0 0.0
    %707 = vmatmul.mubr.f32.gmra.mrb[0].mxu0 %v635
    %v708 = vpop.f32.mrb[0].mxu0
    %v709 = vadd.f32 0.0, %v708
    %v710 = vpop.f32.mrb[0].mxu0
    %711 = vdwg.mxu0
    %712 = vrot.lane.b32.xlu0 %v296, 124
    %v713 = vpop.permute.xlu0 %712
    %714 = vrot.lane.b32.xlu0 %v301, 124
    %v715 = vpop.permute.xlu0 %714
    %716 = vrot.lane.b32.xlu0 %v296, 92
    %v717 = vpop.permute.xlu0 %716
    %718 = vrot.lane.b32.xlu0 %v301, 92
    %v719 = vpop.permute.xlu0 %718
    %v720 = vsel %vm320, %v713, 0
    %v722 = vsel %vm320, %v715, 0
    %v724 = vsel %vm320, %v717, 0
    %v726 = vsel %vm320, %v719, 0
    %728 = vmatprep.subr.mxu0 0.0
    %729 = vmatpush1.xpose.msra.mxu0 %v724
    %730 = vmatprep.subr.mxu0 0.0
    %731 = vmatpush1.xpose.msra.mxu0 %v726
    %732 = vmatprep.subr.mxu0 0.0
    %733 = vmatpush1.xpose.msra.mxu0 0.0
    %734 = vmatprep.subr.mxu0 0.0
    %735 = vmatpush1.xpose.msra.mxu0 0.0
    %736 = vmatprep.subr.mxu0 0.0
    %737 = vmatpush1.xpose.msra.mxu0 0.0
    %738 = vmatprep.subr.mxu0 0.0
    %739 = vmatpush1.xpose.msra.mxu0 0.0
    %740 = vmatprep.subr.mxu0 0.0
    %741 = vmatpush1.xpose.msra.mxu0 0.0
    %742 = vmatprep.subr.mxu0 0.0
    %743 = vmatpush1.xpose.msra.mxu0 0.0
    %744 = vmatprep.subr.mxu0 0.0
    %745 = vmatpush1.xpose.msra.mxu0 0.0
    %746 = vmatprep.subr.mxu0 0.0
    %747 = vmatpush1.xpose.msra.mxu0 0.0
    %748 = vmatprep.subr.mxu0 0.0
    %749 = vmatpush1.xpose.msra.mxu0 0.0
    %750 = vmatprep.subr.mxu0 0.0
    %751 = vmatpush1.xpose.msra.mxu0 0.0
    %752 = vmatprep.subr.mxu0 0.0
    %753 = vmatpush1.xpose.msra.mxu0 0.0
    %754 = vmatprep.subr.mxu0 0.0
    %755 = vmatpush1.xpose.msra.mxu0 0.0
    %756 = vmatprep.subr.mxu0 0.0
    %757 = vmatpush1.xpose.msra.mxu0 0.0
    %758 = vmatprep.subr.mxu0 0.0
    %759 = vmatpush1.xpose.msra.mxu0 0.0
    %760 = vmatprep.subr.mxu0 0.0
    %761 = vmatpush1.xpose.msra.mxu0 0.0
    %762 = vmatprep.subr.mxu0 0.0
    %763 = vmatpush1.xpose.msra.mxu0 0.0
    %764 = vmatprep.subr.mxu0 0.0
    %765 = vmatpush1.xpose.msra.mxu0 0.0
    %766 = vmatprep.subr.mxu0 0.0
    %767 = vmatpush1.xpose.msra.mxu0 0.0
    %768 = vmatprep.subr.mxu0 0.0
    %769 = vmatpush1.xpose.msra.mxu0 0.0
    %770 = vmatprep.subr.mxu0 0.0
    %771 = vmatpush1.xpose.msra.mxu0 0.0
    %772 = vmatprep.subr.mxu0 0.0
    %773 = vmatpush1.xpose.msra.mxu0 0.0
    %774 = vmatprep.subr.mxu0 0.0
    %775 = vmatpush1.xpose.msra.mxu0 0.0
    %776 = vmatprep.subr.mxu0 0.0
    %777 = vmatpush1.xpose.msra.mxu0 0.0
    %778 = vmatprep.subr.mxu0 0.0
    %779 = vmatpush1.xpose.msra.mxu0 0.0
    %780 = vmatprep.subr.mxu0 0.0
    %781 = vmatpush1.xpose.msra.mxu0 0.0
    %782 = vmatprep.subr.mxu0 0.0
    %783 = vmatpush1.xpose.msra.mxu0 0.0
    %784 = vmatprep.subr.mxu0 0.0
    %785 = vmatpush1.xpose.msra.mxu0 0.0
    %786 = vmatprep.subr.mxu0 0.0
    %787 = vmatpush1.xpose.msra.mxu0 0.0
    %788 = vmatprep.subr.mxu0 0.0
    %789 = vmatpush1.xpose.msra.mxu0 0.0
    %790 = vmatprep.subr.mxu0 0.0
    %791 = vmatpush1.xpose.msra.mxu0 0.0
    %792 = vmatprep.mubr.f32.mxu0 0.0
    %793 = vmatmul.mubr.f32.gmra.mrb[0].mxu0 %v720
    %v794 = vpop.f32.mrb[0].mxu0
    %v795 = vadd.f32 0.0, %v794
    %v796 = vpop.f32.mrb[0].mxu0
    %797 = vmatprep.mubr.f32.mxu0 0.0
    %798 = vmatmul.mubr.f32.gmra.mrb[0].mxu0 %v722
    %v799 = vpop.f32.mrb[0].mxu0
    %v800 = vadd.f32 0.0, %v799
    %v801 = vpop.f32.mrb[0].mxu0
    %802 = vdwg.mxu0
    %803 = vrot.lane.b32.xlu0 %v306, 124
    %v804 = vpop.permute.xlu0 %803
    %805 = vrot.lane.b32.xlu0 %v311, 124
    %v806 = vpop.permute.xlu0 %805
    %807 = vrot.lane.b32.xlu0 %v306, 92
    %v808 = vpop.permute.xlu0 %807
    %809 = vrot.lane.b32.xlu0 %v311, 92
    %v810 = vpop.permute.xlu0 %809
    %v811 = vsel %vm320, %v804, 0
    %v813 = vsel %vm320, %v806, 0
    %v815 = vsel %vm320, %v808, 0
    %v817 = vsel %vm320, %v810, 0
    %819 = vmatprep.subr.mxu0 0.0
    %820 = vmatpush1.xpose.msra.mxu0 %v815
    %821 = vmatprep.subr.mxu0 0.0
    %822 = vmatpush1.xpose.msra.mxu0 %v817
    %823 = vmatprep.subr.mxu0 0.0
    %824 = vmatpush1.xpose.msra.mxu0 0.0
    %825 = vmatprep.subr.mxu0 0.0
    %826 = vmatpush1.xpose.msra.mxu0 0.0
    %827 = vmatprep.subr.mxu0 0.0
    %828 = vmatpush1.xpose.msra.mxu0 0.0
    %829 = vmatprep.subr.mxu0 0.0
    %830 = vmatpush1.xpose.msra.mxu0 0.0
    %831 = vmatprep.subr.mxu0 0.0
    %832 = vmatpush1.xpose.msra.mxu0 0.0
    %833 = vmatprep.subr.mxu0 0.0
    %834 = vmatpush1.xpose.msra.mxu0 0.0
    %835 = vmatprep.subr.mxu0 0.0
    %836 = vmatpush1.xpose.msra.mxu0 0.0
    %837 = vmatprep.subr.mxu0 0.0
    %838 = vmatpush1.xpose.msra.mxu0 0.0
    %839 = vmatprep.subr.mxu0 0.0
    %840 = vmatpush1.xpose.msra.mxu0 0.0
    %841 = vmatprep.subr.mxu0 0.0
    %842 = vmatpush1.xpose.msra.mxu0 0.0
    %843 = vmatprep.subr.mxu0 0.0
    %844 = vmatpush1.xpose.msra.mxu0 0.0
    %845 = vmatprep.subr.mxu0 0.0
    %846 = vmatpush1.xpose.msra.mxu0 0.0
    %847 = vmatprep.subr.mxu0 0.0
    %848 = vmatpush1.xpose.msra.mxu0 0.0
    %849 = vmatprep.subr.mxu0 0.0
    %850 = vmatpush1.xpose.msra.mxu0 0.0
    %851 = vmatprep.subr.mxu0 0.0
    %852 = vmatpush1.xpose.msra.mxu0 0.0
    %853 = vmatprep.subr.mxu0 0.0
    %854 = vmatpush1.xpose.msra.mxu0 0.0
    %855 = vmatprep.subr.mxu0 0.0
    %856 = vmatpush1.xpose.msra.mxu0 0.0
    %857 = vmatprep.subr.mxu0 0.0
    %858 = vmatpush1.xpose.msra.mxu0 0.0
    %859 = vmatprep.subr.mxu0 0.0
    %860 = vmatpush1.xpose.msra.mxu0 0.0
    %861 = vmatprep.subr.mxu0 0.0
    %862 = vmatpush1.xpose.msra.mxu0 0.0
    %863 = vmatprep.subr.mxu0 0.0
    %864 = vmatpush1.xpose.msra.mxu0 0.0
    %865 = vmatprep.subr.mxu0 0.0
    %866 = vmatpush1.xpose.msra.mxu0 0.0
    %867 = vmatprep.subr.mxu0 0.0
    %868 = vmatpush1.xpose.msra.mxu0 0.0
    %869 = vmatprep.subr.mxu0 0.0
    %870 = vmatpush1.xpose.msra.mxu0 0.0
    %871 = vmatprep.subr.mxu0 0.0
    %872 = vmatpush1.xpose.msra.mxu0 0.0
    %873 = vmatprep.subr.mxu0 0.0
    %874 = vmatpush1.xpose.msra.mxu0 0.0
    %875 = vmatprep.subr.mxu0 0.0
    %876 = vmatpush1.xpose.msra.mxu0 0.0
    %877 = vmatprep.subr.mxu0 0.0
    %878 = vmatpush1.xpose.msra.mxu0 0.0
    %879 = vmatprep.subr.mxu0 0.0
    %880 = vmatpush1.xpose.msra.mxu0 0.0
    %881 = vmatprep.subr.mxu0 0.0
    %882 = vmatpush1.xpose.msra.mxu0 0.0
    %883 = vmatprep.mubr.f32.mxu0 0.0
    %884 = vmatmul.mubr.f32.gmra.mrb[0].mxu0 %v811
    %v885 = vpop.f32.mrb[0].mxu0
    %v886 = vadd.f32 0.0, %v885
    %v887 = vpop.f32.mrb[0].mxu0
    %888 = vmatprep.mubr.f32.mxu0 0.0
    %889 = vmatmul.mubr.f32.gmra.mrb[0].mxu0 %v813
    %v890 = vpop.f32.mrb[0].mxu0
    %v891 = vadd.f32 0.0, %v890
    %v892 = vpop.f32.mrb[0].mxu0
    %893 = vdwg.mxu0
    %v894 = vsel %vm493, %v795, -inf
    %895 = vmax.xlane.f32.xlu0 %v894
    %v896 = vpop.xlane.xlu0 %895
    %v897 = vsel %vm493, %v800, -inf
    %898 = vmax.xlane.f32.xlu0 %v897
    %v899 = vpop.xlane.xlu0 %898
    %v900 = vsel %vm493, %v886, -inf
    %901 = vmax.xlane.f32.xlu0 %v900
    %v902 = vpop.xlane.xlu0 %901
    %v903 = vsel %vm493, %v891, -inf
    %904 = vmax.xlane.f32.xlu0 %v903
    %v905 = vpop.xlane.xlu0 %904
    %v906 = vsub.f32 %v795, %v896
    %v907 = vsub.f32 %v800, %v899
    %v908 = vsub.f32 %v886, %v902
    %v909 = vsub.f32 %v891, %v905
    %v910 = vmul.f32 %v906, 1.442695
    %v911 = vpow.pop %v910
    %v912 = vmul.f32 %v907, 1.442695
    %v913 = vpow.pop %v912
    %v914 = vmul.f32 %v908, 1.442695
    %v915 = vpow.pop %v914
    %v916 = vmul.f32 %v909, 1.442695
    %v917 = vpow.pop %v916
    %v918 = vsel %vm493, %v911, 0.0
    %919 = vadd.xlane.f32.xlu0 %v918
    %v920 = vpop.xlane.xlu0 %919
    %v921 = vsel %vm493, %v913, 0.0
    %922 = vadd.xlane.f32.xlu0 %v921
    %v923 = vpop.xlane.xlu0 %922
    %v924 = vsel %vm493, %v915, 0.0
    %925 = vadd.xlane.f32.xlu0 %v924
    %v926 = vpop.xlane.xlu0 %925
    %v927 = vsel %vm493, %v917, 0.0
    %928 = vadd.xlane.f32.xlu0 %v927
    %v929 = vpop.xlane.xlu0 %928
    %v930 = vrcp.pop %v920
    %v931 = vrcp.pop %v923
    %v932 = vrcp.pop %v926
    %v933 = vrcp.pop %v929
    %v934 = vmul.f32 %v911, %v930
    %v935 = vmul.f32 %v913, %v931
    %v936 = vmul.f32 %v915, %v932
    %v937 = vmul.f32 %v917, %v933
    %938 = vrot.lane.b32.xlu0 %v296, 60
    %v939 = vpop.permute.xlu0 %938
    %940 = vrot.lane.b32.xlu0 %v301, 60
    %v941 = vpop.permute.xlu0 %940
    %v945 = vsel %vm493, %v934, 0
    %v948 = vsel %vm493, %v935, 0
    %950 = vmatprep.subr.mxu0 0.0
    %951 = vmatpush1.msra.mxu0 %v939
    %952 = vmatprep.subr.mxu0 0.0
    %953 = vmatpush1.msra.mxu0 %v941
    %954 = vmatprep.subr.mxu0 0.0
    %955 = vmatpush1.msra.mxu0 0.0
    %956 = vmatprep.subr.mxu0 0.0
    %957 = vmatpush1.msra.mxu0 0.0
    %958 = vmatprep.subr.mxu0 0.0
    %959 = vmatpush1.msra.mxu0 0.0
    %960 = vmatprep.subr.mxu0 0.0
    %961 = vmatpush1.msra.mxu0 0.0
    %962 = vmatprep.subr.mxu0 0.0
    %963 = vmatpush1.msra.mxu0 0.0
    %964 = vmatprep.subr.mxu0 0.0
    %965 = vmatpush1.msra.mxu0 0.0
    %966 = vmatprep.subr.mxu0 0.0
    %967 = vmatpush1.msra.mxu0 0.0
    %968 = vmatprep.subr.mxu0 0.0
    %969 = vmatpush1.msra.mxu0 0.0
    %970 = vmatprep.subr.mxu0 0.0
    %971 = vmatpush1.msra.mxu0 0.0
    %972 = vmatprep.subr.mxu0 0.0
    %973 = vmatpush1.msra.mxu0 0.0
    %974 = vmatprep.subr.mxu0 0.0
    %975 = vmatpush1.msra.mxu0 0.0
    %976 = vmatprep.subr.mxu0 0.0
    %977 = vmatpush1.msra.mxu0 0.0
    %978 = vmatprep.subr.mxu0 0.0
    %979 = vmatpush1.msra.mxu0 0.0
    %980 = vmatprep.subr.mxu0 0.0
    %981 = vmatpush1.msra.mxu0 0.0
    %982 = vmatprep.subr.mxu0 0.0
    %983 = vmatpush1.msra.mxu0 0.0
    %984 = vmatprep.subr.mxu0 0.0
    %985 = vmatpush1.msra.mxu0 0.0
    %986 = vmatprep.subr.mxu0 0.0
    %987 = vmatpush1.msra.mxu0 0.0
    %988 = vmatprep.subr.mxu0 0.0
    %989 = vmatpush1.msra.mxu0 0.0
    %990 = vmatprep.subr.mxu0 0.0
    %991 = vmatpush1.msra.mxu0 0.0
    %992 = vmatprep.subr.mxu0 0.0
    %993 = vmatpush1.msra.mxu0 0.0
    %994 = vmatprep.subr.mxu0 0.0
    %995 = vmatpush1.msra.mxu0 0.0
    %996 = vmatprep.subr.mxu0 0.0
    %997 = vmatpush1.msra.mxu0 0.0
    %998 = vmatprep.subr.mxu0 0.0
    %999 = vmatpush1.msra.mxu0 0.0
    %1000 = vmatprep.subr.mxu0 0.0
    %1001 = vmatpush1.msra.mxu0 0.0
    %1002 = vmatprep.subr.mxu0 0.0
    %1003 = vmatpush1.msra.mxu0 0.0
    %1004 = vmatprep.subr.mxu0 0.0
    %1005 = vmatpush1.msra.mxu0 0.0
    %1006 = vmatprep.subr.mxu0 0.0
    %1007 = vmatpush1.msra.mxu0 0.0
    %1008 = vmatprep.subr.mxu0 0.0
    %1009 = vmatpush1.msra.mxu0 0.0
    %1010 = vmatprep.subr.mxu0 0.0
    %1011 = vmatpush1.msra.mxu0 0.0
    %1012 = vmatprep.subr.mxu0 0.0
    %1013 = vmatpush1.msra.mxu0 0.0
    %1014 = vmatprep.mubr.f32.mxu0 0.0
    %1015 = vmatmul.mubr.f32.gmra.mrb[0].mxu0 %v945
    %v1016 = vpop.f32.mrb[0].mxu0
    %v1017 = vadd.f32 0.0, %v1016
    %v1018 = vpop.f32.mrb[0].mxu0
    %1019 = vmatprep.mubr.f32.mxu0 0.0
    %1020 = vmatmul.mubr.f32.gmra.mrb[0].mxu0 %v948
    %v1021 = vpop.f32.mrb[0].mxu0
    %v1022 = vadd.f32 0.0, %v1021
    %v1023 = vpop.f32.mrb[0].mxu0
    %1024 = vdwg.mxu0
    %1025 = vrot.lane.b32.xlu0 %v306, 60
    %v1026 = vpop.permute.xlu0 %1025
    %1027 = vrot.lane.b32.xlu0 %v311, 60
    %v1028 = vpop.permute.xlu0 %1027
    %v1032 = vsel %vm493, %v936, 0
    %v1035 = vsel %vm493, %v937, 0
    %1037 = vmatprep.subr.mxu0 0.0
    %1038 = vmatpush1.msra.mxu0 %v1026
    %1039 = vmatprep.subr.mxu0 0.0
    %1040 = vmatpush1.msra.mxu0 %v1028
    %1041 = vmatprep.subr.mxu0 0.0
    %1042 = vmatpush1.msra.mxu0 0.0
    %1043 = vmatprep.subr.mxu0 0.0
    %1044 = vmatpush1.msra.mxu0 0.0
    %1045 = vmatprep.subr.mxu0 0.0
    %1046 = vmatpush1.msra.mxu0 0.0
    %1047 = vmatprep.subr.mxu0 0.0
    %1048 = vmatpush1.msra.mxu0 0.0
    %1049 = vmatprep.subr.mxu0 0.0
    %1050 = vmatpush1.msra.mxu0 0.0
    %1051 = vmatprep.subr.mxu0 0.0
    %1052 = vmatpush1.msra.mxu0 0.0
    %1053 = vmatprep.subr.mxu0 0.0
    %1054 = vmatpush1.msra.mxu0 0.0
    %1055 = vmatprep.subr.mxu0 0.0
    %1056 = vmatpush1.msra.mxu0 0.0
    %1057 = vmatprep.subr.mxu0 0.0
    %1058 = vmatpush1.msra.mxu0 0.0
    %1059 = vmatprep.subr.mxu0 0.0
    %1060 = vmatpush1.msra.mxu0 0.0
    %1061 = vmatprep.subr.mxu0 0.0
    %1062 = vmatpush1.msra.mxu0 0.0
    %1063 = vmatprep.subr.mxu0 0.0
    %1064 = vmatpush1.msra.mxu0 0.0
    %1065 = vmatprep.subr.mxu0 0.0
    %1066 = vmatpush1.msra.mxu0 0.0
    %1067 = vmatprep.subr.mxu0 0.0
    %1068 = vmatpush1.msra.mxu0 0.0
    %1069 = vmatprep.subr.mxu0 0.0
    %1070 = vmatpush1.msra.mxu0 0.0
    %1071 = vmatprep.subr.mxu0 0.0
    %1072 = vmatpush1.msra.mxu0 0.0
    %1073 = vmatprep.subr.mxu0 0.0
    %1074 = vmatpush1.msra.mxu0 0.0
    %1075 = vmatprep.subr.mxu0 0.0
    %1076 = vmatpush1.msra.mxu0 0.0
    %1077 = vmatprep.subr.mxu0 0.0
    %1078 = vmatpush1.msra.mxu0 0.0
    %1079 = vmatprep.subr.mxu0 0.0
    %1080 = vmatpush1.msra.mxu0 0.0
    %1081 = vmatprep.subr.mxu0 0.0
    %1082 = vmatpush1.msra.mxu0 0.0
    %1083 = vmatprep.subr.mxu0 0.0
    %1084 = vmatpush1.msra.mxu0 0.0
    %1085 = vmatprep.subr.mxu0 0.0
    %1086 = vmatpush1.msra.mxu0 0.0
    %1087 = vmatprep.subr.mxu0 0.0
    %1088 = vmatpush1.msra.mxu0 0.0
    %1089 = vmatprep.subr.mxu0 0.0
    %1090 = vmatpush1.msra.mxu0 0.0
    %1091 = vmatprep.subr.mxu0 0.0
    %1092 = vmatpush1.msra.mxu0 0.0
    %1093 = vmatprep.subr.mxu0 0.0
    %1094 = vmatpush1.msra.mxu0 0.0
    %1095 = vmatprep.subr.mxu0 0.0
    %1096 = vmatpush1.msra.mxu0 0.0
    %1097 = vmatprep.subr.mxu0 0.0
    %1098 = vmatpush1.msra.mxu0 0.0
    %1099 = vmatprep.subr.mxu0 0.0
    %1100 = vmatpush1.msra.mxu0 0.0
    %1101 = vmatprep.mubr.f32.mxu0 0.0
    %1102 = vmatmul.mubr.f32.gmra.mrb[0].mxu0 %v1032
    %v1103 = vpop.f32.mrb[0].mxu0
    %v1104 = vadd.f32 0.0, %v1103
    %v1105 = vpop.f32.mrb[0].mxu0
    %1106 = vmatprep.mubr.f32.mxu0 0.0
    %1107 = vmatmul.mubr.f32.gmra.mrb[0].mxu0 %v1035
    %v1108 = vpop.f32.mrb[0].mxu0
    %v1109 = vadd.f32 0.0, %v1108
    %v1110 = vpop.f32.mrb[0].mxu0
    %1111 = vdwg.mxu0
    %1112 = vrot.lane.b32.xlu0 %v296, 120
    %v1113 = vpop.permute.xlu0 %1112
    %1114 = vrot.lane.b32.xlu0 %v301, 120
    %v1115 = vpop.permute.xlu0 %1114
    %1116 = vrot.lane.b32.xlu0 %v296, 88
    %v1117 = vpop.permute.xlu0 %1116
    %1118 = vrot.lane.b32.xlu0 %v301, 88
    %v1119 = vpop.permute.xlu0 %1118
    %v1120 = vsel %vm320, %v1113, 0
    %v1122 = vsel %vm320, %v1115, 0
    %v1124 = vsel %vm320, %v1117, 0
    %v1126 = vsel %vm320, %v1119, 0
    %1128 = vmatprep.subr.mxu0 0.0
    %1129 = vmatpush1.xpose.msra.mxu0 %v1124
    %1130 = vmatprep.subr.mxu0 0.0
    %1131 = vmatpush1.xpose.msra.mxu0 %v1126
    %1132 = vmatprep.subr.mxu0 0.0
    %1133 = vmatpush1.xpose.msra.mxu0 0.0
    %1134 = vmatprep.subr.mxu0 0.0
    %1135 = vmatpush1.xpose.msra.mxu0 0.0
    %1136 = vmatprep.subr.mxu0 0.0
    %1137 = vmatpush1.xpose.msra.mxu0 0.0
    %1138 = vmatprep.subr.mxu0 0.0
    %1139 = vmatpush1.xpose.msra.mxu0 0.0
    %1140 = vmatprep.subr.mxu0 0.0
    %1141 = vmatpush1.xpose.msra.mxu0 0.0
    %1142 = vmatprep.subr.mxu0 0.0
    %1143 = vmatpush1.xpose.msra.mxu0 0.0
    %1144 = vmatprep.subr.mxu0 0.0
    %1145 = vmatpush1.xpose.msra.mxu0 0.0
    %1146 = vmatprep.subr.mxu0 0.0
    %1147 = vmatpush1.xpose.msra.mxu0 0.0
    %1148 = vmatprep.subr.mxu0 0.0
    %1149 = vmatpush1.xpose.msra.mxu0 0.0
    %1150 = vmatprep.subr.mxu0 0.0
    %1151 = vmatpush1.xpose.msra.mxu0 0.0
    %1152 = vmatprep.subr.mxu0 0.0
    %1153 = vmatpush1.xpose.msra.mxu0 0.0
    %1154 = vmatprep.subr.mxu0 0.0
    %1155 = vmatpush1.xpose.msra.mxu0 0.0
    %1156 = vmatprep.subr.mxu0 0.0
    %1157 = vmatpush1.xpose.msra.mxu0 0.0
    %1158 = vmatprep.subr.mxu0 0.0
    %1159 = vmatpush1.xpose.msra.mxu0 0.0
    %1160 = vmatprep.subr.mxu0 0.0
    %1161 = vmatpush1.xpose.msra.mxu0 0.0
    %1162 = vmatprep.subr.mxu0 0.0
    %1163 = vmatpush1.xpose.msra.mxu0 0.0
    %1164 = vmatprep.subr.mxu0 0.0
    %1165 = vmatpush1.xpose.msra.mxu0 0.0
    %1166 = vmatprep.subr.mxu0 0.0
    %1167 = vmatpush1.xpose.msra.mxu0 0.0
    %1168 = vmatprep.subr.mxu0 0.0
    %1169 = vmatpush1.xpose.msra.mxu0 0.0
    %1170 = vmatprep.subr.mxu0 0.0
    %1171 = vmatpush1.xpose.msra.mxu0 0.0
    %1172 = vmatprep.subr.mxu0 0.0
    %1173 = vmatpush1.xpose.msra.mxu0 0.0
    %1174 = vmatprep.subr.mxu0 0.0
    %1175 = vmatpush1.xpose.msra.mxu0 0.0
    %1176 = vmatprep.subr.mxu0 0.0
    %1177 = vmatpush1.xpose.msra.mxu0 0.0
    %1178 = vmatprep.subr.mxu0 0.0
    %1179 = vmatpush1.xpose.msra.mxu0 0.0
    %1180 = vmatprep.subr.mxu0 0.0
    %1181 = vmatpush1.xpose.msra.mxu0 0.0
    %1182 = vmatprep.subr.mxu0 0.0
    %1183 = vmatpush1.xpose.msra.mxu0 0.0
    %1184 = vmatprep.subr.mxu0 0.0
    %1185 = vmatpush1.xpose.msra.mxu0 0.0
    %1186 = vmatprep.subr.mxu0 0.0
    %1187 = vmatpush1.xpose.msra.mxu0 0.0
    %1188 = vmatprep.subr.mxu0 0.0
    %1189 = vmatpush1.xpose.msra.mxu0 0.0
    %1190 = vmatprep.subr.mxu0 0.0
    %1191 = vmatpush1.xpose.msra.mxu0 0.0
    %1192 = vmatprep.mubr.f32.mxu0 0.0
    %1193 = vmatmul.mubr.f32.gmra.mrb[0].mxu0 %v1120
    %v1194 = vpop.f32.mrb[0].mxu0
    %v1195 = vadd.f32 0.0, %v1194
    %v1196 = vpop.f32.mrb[0].mxu0
    %1197 = vmatprep.mubr.f32.mxu0 0.0
    %1198 = vmatmul.mubr.f32.gmra.mrb[0].mxu0 %v1122
    %v1199 = vpop.f32.mrb[0].mxu0
    %v1200 = vadd.f32 0.0, %v1199
    %v1201 = vpop.f32.mrb[0].mxu0
    %1202 = vdwg.mxu0
    %1203 = vrot.lane.b32.xlu0 %v306, 120
    %v1204 = vpop.permute.xlu0 %1203
    %1205 = vrot.lane.b32.xlu0 %v311, 120
    %v1206 = vpop.permute.xlu0 %1205
    %1207 = vrot.lane.b32.xlu0 %v306, 88
    %v1208 = vpop.permute.xlu0 %1207
    %1209 = vrot.lane.b32.xlu0 %v311, 88
    %v1210 = vpop.permute.xlu0 %1209
    %v1211 = vsel %vm320, %v1204, 0
    %v1213 = vsel %vm320, %v1206, 0
    %v1215 = vsel %vm320, %v1208, 0
    %v1217 = vsel %vm320, %v1210, 0
    %1219 = vmatprep.subr.mxu0 0.0
    %1220 = vmatpush1.xpose.msra.mxu0 %v1215
    %1221 = vmatprep.subr.mxu0 0.0
    %1222 = vmatpush1.xpose.msra.mxu0 %v1217
    %1223 = vmatprep.subr.mxu0 0.0
    %1224 = vmatpush1.xpose.msra.mxu0 0.0
    %1225 = vmatprep.subr.mxu0 0.0
    %1226 = vmatpush1.xpose.msra.mxu0 0.0
    %1227 = vmatprep.subr.mxu0 0.0
    %1228 = vmatpush1.xpose.msra.mxu0 0.0
    %1229 = vmatprep.subr.mxu0 0.0
    %1230 = vmatpush1.xpose.msra.mxu0 0.0
    %1231 = vmatprep.subr.mxu0 0.0
    %1232 = vmatpush1.xpose.msra.mxu0 0.0
    %1233 = vmatprep.subr.mxu0 0.0
    %1234 = vmatpush1.xpose.msra.mxu0 0.0
    %1235 = vmatprep.subr.mxu0 0.0
    %1236 = vmatpush1.xpose.msra.mxu0 0.0
    %1237 = vmatprep.subr.mxu0 0.0
    %1238 = vmatpush1.xpose.msra.mxu0 0.0
    %1239 = vmatprep.subr.mxu0 0.0
    %1240 = vmatpush1.xpose.msra.mxu0 0.0
    %1241 = vmatprep.subr.mxu0 0.0
    %1242 = vmatpush1.xpose.msra.mxu0 0.0
    %1243 = vmatprep.subr.mxu0 0.0
    %1244 = vmatpush1.xpose.msra.mxu0 0.0
    %1245 = vmatprep.subr.mxu0 0.0
    %1246 = vmatpush1.xpose.msra.mxu0 0.0
    %1247 = vmatprep.subr.mxu0 0.0
    %1248 = vmatpush1.xpose.msra.mxu0 0.0
    %1249 = vmatprep.subr.mxu0 0.0
    %1250 = vmatpush1.xpose.msra.mxu0 0.0
    %1251 = vmatprep.subr.mxu0 0.0
    %1252 = vmatpush1.xpose.msra.mxu0 0.0
    %1253 = vmatprep.subr.mxu0 0.0
    %1254 = vmatpush1.xpose.msra.mxu0 0.0
    %1255 = vmatprep.subr.mxu0 0.0
    %1256 = vmatpush1.xpose.msra.mxu0 0.0
    %1257 = vmatprep.subr.mxu0 0.0
    %1258 = vmatpush1.xpose.msra.mxu0 0.0
    %1259 = vmatprep.subr.mxu0 0.0
    %1260 = vmatpush1.xpose.msra.mxu0 0.0
    %1261 = vmatprep.subr.mxu0 0.0
    %1262 = vmatpush1.xpose.msra.mxu0 0.0
    %1263 = vmatprep.subr.mxu0 0.0
    %1264 = vmatpush1.xpose.msra.mxu0 0.0
    %1265 = vmatprep.subr.mxu0 0.0
    %1266 = vmatpush1.xpose.msra.mxu0 0.0
    %1267 = vmatprep.subr.mxu0 0.0
    %1268 = vmatpush1.xpose.msra.mxu0 0.0
    %1269 = vmatprep.subr.mxu0 0.0
    %1270 = vmatpush1.xpose.msra.mxu0 0.0
    %1271 = vmatprep.subr.mxu0 0.0
    %1272 = vmatpush1.xpose.msra.mxu0 0.0
    %1273 = vmatprep.subr.mxu0 0.0
    %1274 = vmatpush1.xpose.msra.mxu0 0.0
    %1275 = vmatprep.subr.mxu0 0.0
    %1276 = vmatpush1.xpose.msra.mxu0 0.0
    %1277 = vmatprep.subr.mxu0 0.0
    %1278 = vmatpush1.xpose.msra.mxu0 0.0
    %1279 = vmatprep.subr.mxu0 0.0
    %1280 = vmatpush1.xpose.msra.mxu0 0.0
    %1281 = vmatprep.subr.mxu0 0.0
    %1282 = vmatpush1.xpose.msra.mxu0 0.0
    %1283 = vmatprep.mubr.f32.mxu0 0.0
    %1284 = vmatmul.mubr.f32.gmra.mrb[0].mxu0 %v1211
    %v1285 = vpop.f32.mrb[0].mxu0
    %v1286 = vadd.f32 0.0, %v1285
    %v1287 = vpop.f32.mrb[0].mxu0
    %1288 = vmatprep.mubr.f32.mxu0 0.0
    %1289 = vmatmul.mubr.f32.gmra.mrb[0].mxu0 %v1213
    %v1290 = vpop.f32.mrb[0].mxu0
    %v1291 = vadd.f32 0.0, %v1290
    %v1292 = vpop.f32.mrb[0].mxu0
    %1293 = vdwg.mxu0
    %v1294 = vsel %vm493, %v1195, -inf
    %1295 = vmax.xlane.f32.xlu0 %v1294
    %v1296 = vpop.xlane.xlu0 %1295
    %v1297 = vsel %vm493, %v1200, -inf
    %1298 = vmax.xlane.f32.xlu0 %v1297
    %v1299 = vpop.xlane.xlu0 %1298
    %v1300 = vsel %vm493, %v1286, -inf
    %1301 = vmax.xlane.f32.xlu0 %v1300
    %v1302 = vpop.xlane.xlu0 %1301
    %v1303 = vsel %vm493, %v1291, -inf
    %1304 = vmax.xlane.f32.xlu0 %v1303
    %v1305 = vpop.xlane.xlu0 %1304
    %v1306 = vsub.f32 %v1195, %v1296
    %v1307 = vsub.f32 %v1200, %v1299
    %v1308 = vsub.f32 %v1286, %v1302
    %v1309 = vsub.f32 %v1291, %v1305
    %v1310 = vmul.f32 %v1306, 1.442695
    %v1311 = vpow.pop %v1310
    %v1312 = vmul.f32 %v1307, 1.442695
    %v1313 = vpow.pop %v1312
    %v1314 = vmul.f32 %v1308, 1.442695
    %v1315 = vpow.pop %v1314
    %v1316 = vmul.f32 %v1309, 1.442695
    %v1317 = vpow.pop %v1316
    %v1318 = vsel %vm493, %v1311, 0.0
    %1319 = vadd.xlane.f32.xlu0 %v1318
    %v1320 = vpop.xlane.xlu0 %1319
    %v1321 = vsel %vm493, %v1313, 0.0
    %1322 = vadd.xlane.f32.xlu0 %v1321
    %v1323 = vpop.xlane.xlu0 %1322
    %v1324 = vsel %vm493, %v1315, 0.0
    %1325 = vadd.xlane.f32.xlu0 %v1324
    %v1326 = vpop.xlane.xlu0 %1325
    %v1327 = vsel %vm493, %v1317, 0.0
    %1328 = vadd.xlane.f32.xlu0 %v1327
    %v1329 = vpop.xlane.xlu0 %1328
    %v1330 = vrcp.pop %v1320
    %v1331 = vrcp.pop %v1323
    %v1332 = vrcp.pop %v1326
    %v1333 = vrcp.pop %v1329
    %v1334 = vmul.f32 %v1311, %v1330
    %v1335 = vmul.f32 %v1313, %v1331
    %v1336 = vmul.f32 %v1315, %v1332
    %v1337 = vmul.f32 %v1317, %v1333
    %1338 = vrot.lane.b32.xlu0 %v296, 56
    %v1339 = vpop.permute.xlu0 %1338
    %1340 = vrot.lane.b32.xlu0 %v301, 56
    %v1341 = vpop.permute.xlu0 %1340
    %v1345 = vsel %vm493, %v1334, 0
    %v1348 = vsel %vm493, %v1335, 0
    %1350 = vmatprep.subr.mxu0 0.0
    %1351 = vmatpush1.msra.mxu0 %v1339
    %1352 = vmatprep.subr.mxu0 0.0
    %1353 = vmatpush1.msra.mxu0 %v1341
    %1354 = vmatprep.subr.mxu0 0.0
    %1355 = vmatpush1.msra.mxu0 0.0
    %1356 = vmatprep.subr.mxu0 0.0
    %1357 = vmatpush1.msra.mxu0 0.0
    %1358 = vmatprep.subr.mxu0 0.0
    %1359 = vmatpush1.msra.mxu0 0.0
    %1360 = vmatprep.subr.mxu0 0.0
    %1361 = vmatpush1.msra.mxu0 0.0
    %1362 = vmatprep.subr.mxu0 0.0
    %1363 = vmatpush1.msra.mxu0 0.0
    %1364 = vmatprep.subr.mxu0 0.0
    %1365 = vmatpush1.msra.mxu0 0.0
    %1366 = vmatprep.subr.mxu0 0.0
    %1367 = vmatpush1.msra.mxu0 0.0
    %1368 = vmatprep.subr.mxu0 0.0
    %1369 = vmatpush1.msra.mxu0 0.0
    %1370 = vmatprep.subr.mxu0 0.0
    %1371 = vmatpush1.msra.mxu0 0.0
    %1372 = vmatprep.subr.mxu0 0.0
    %1373 = vmatpush1.msra.mxu0 0.0
    %1374 = vmatprep.subr.mxu0 0.0
    %1375 = vmatpush1.msra.mxu0 0.0
    %1376 = vmatprep.subr.mxu0 0.0
    %1377 = vmatpush1.msra.mxu0 0.0
    %1378 = vmatprep.subr.mxu0 0.0
    %1379 = vmatpush1.msra.mxu0 0.0
    %1380 = vmatprep.subr.mxu0 0.0
    %1381 = vmatpush1.msra.mxu0 0.0
    %1382 = vmatprep.subr.mxu0 0.0
    %1383 = vmatpush1.msra.mxu0 0.0
    %1384 = vmatprep.subr.mxu0 0.0
    %1385 = vmatpush1.msra.mxu0 0.0
    %1386 = vmatprep.subr.mxu0 0.0
    %1387 = vmatpush1.msra.mxu0 0.0
    %1388 = vmatprep.subr.mxu0 0.0
    %1389 = vmatpush1.msra.mxu0 0.0
    %1390 = vmatprep.subr.mxu0 0.0
    %1391 = vmatpush1.msra.mxu0 0.0
    %1392 = vmatprep.subr.mxu0 0.0
    %1393 = vmatpush1.msra.mxu0 0.0
    %1394 = vmatprep.subr.mxu0 0.0
    %1395 = vmatpush1.msra.mxu0 0.0
    %1396 = vmatprep.subr.mxu0 0.0
    %1397 = vmatpush1.msra.mxu0 0.0
    %1398 = vmatprep.subr.mxu0 0.0
    %1399 = vmatpush1.msra.mxu0 0.0
    %1400 = vmatprep.subr.mxu0 0.0
    %1401 = vmatpush1.msra.mxu0 0.0
    %1402 = vmatprep.subr.mxu0 0.0
    %1403 = vmatpush1.msra.mxu0 0.0
    %1404 = vmatprep.subr.mxu0 0.0
    %1405 = vmatpush1.msra.mxu0 0.0
    %1406 = vmatprep.subr.mxu0 0.0
    %1407 = vmatpush1.msra.mxu0 0.0
    %1408 = vmatprep.subr.mxu0 0.0
    %1409 = vmatpush1.msra.mxu0 0.0
    %1410 = vmatprep.subr.mxu0 0.0
    %1411 = vmatpush1.msra.mxu0 0.0
    %1412 = vmatprep.subr.mxu0 0.0
    %1413 = vmatpush1.msra.mxu0 0.0
    %1414 = vmatprep.mubr.f32.mxu0 0.0
    %1415 = vmatmul.mubr.f32.gmra.mrb[0].mxu0 %v1345
    %v1416 = vpop.f32.mrb[0].mxu0
    %v1417 = vadd.f32 0.0, %v1416
    %v1418 = vpop.f32.mrb[0].mxu0
    %1419 = vmatprep.mubr.f32.mxu0 0.0
    %1420 = vmatmul.mubr.f32.gmra.mrb[0].mxu0 %v1348
    %v1421 = vpop.f32.mrb[0].mxu0
    %v1422 = vadd.f32 0.0, %v1421
    %v1423 = vpop.f32.mrb[0].mxu0
    %1424 = vdwg.mxu0
    %1425 = vrot.lane.b32.xlu0 %v306, 56
    %v1426 = vpop.permute.xlu0 %1425
    %1427 = vrot.lane.b32.xlu0 %v311, 56
    %v1428 = vpop.permute.xlu0 %1427
    %v1432 = vsel %vm493, %v1336, 0
    %v1435 = vsel %vm493, %v1337, 0
    %1437 = vmatprep.subr.mxu0 0.0
    %1438 = vmatpush1.msra.mxu0 %v1426
    %1439 = vmatprep.subr.mxu0 0.0
    %1440 = vmatpush1.msra.mxu0 %v1428
    %1441 = vmatprep.subr.mxu0 0.0
    %1442 = vmatpush1.msra.mxu0 0.0
    %1443 = vmatprep.subr.mxu0 0.0
    %1444 = vmatpush1.msra.mxu0 0.0
    %1445 = vmatprep.subr.mxu0 0.0
    %1446 = vmatpush1.msra.mxu0 0.0
    %1447 = vmatprep.subr.mxu0 0.0
    %1448 = vmatpush1.msra.mxu0 0.0
    %1449 = vmatprep.subr.mxu0 0.0
    %1450 = vmatpush1.msra.mxu0 0.0
    %1451 = vmatprep.subr.mxu0 0.0
    %1452 = vmatpush1.msra.mxu0 0.0
    %1453 = vmatprep.subr.mxu0 0.0
    %1454 = vmatpush1.msra.mxu0 0.0
    %1455 = vmatprep.subr.mxu0 0.0
    %1456 = vmatpush1.msra.mxu0 0.0
    %1457 = vmatprep.subr.mxu0 0.0
    %1458 = vmatpush1.msra.mxu0 0.0
    %1459 = vmatprep.subr.mxu0 0.0
    %1460 = vmatpush1.msra.mxu0 0.0
    %1461 = vmatprep.subr.mxu0 0.0
    %1462 = vmatpush1.msra.mxu0 0.0
    %1463 = vmatprep.subr.mxu0 0.0
    %1464 = vmatpush1.msra.mxu0 0.0
    %1465 = vmatprep.subr.mxu0 0.0
    %1466 = vmatpush1.msra.mxu0 0.0
    %1467 = vmatprep.subr.mxu0 0.0
    %1468 = vmatpush1.msra.mxu0 0.0
    %1469 = vmatprep.subr.mxu0 0.0
    %1470 = vmatpush1.msra.mxu0 0.0
    %1471 = vmatprep.subr.mxu0 0.0
    %1472 = vmatpush1.msra.mxu0 0.0
    %1473 = vmatprep.subr.mxu0 0.0
    %1474 = vmatpush1.msra.mxu0 0.0
    %1475 = vmatprep.subr.mxu0 0.0
    %1476 = vmatpush1.msra.mxu0 0.0
    %1477 = vmatprep.subr.mxu0 0.0
    %1478 = vmatpush1.msra.mxu0 0.0
    %1479 = vmatprep.subr.mxu0 0.0
    %1480 = vmatpush1.msra.mxu0 0.0
    %1481 = vmatprep.subr.mxu0 0.0
    %1482 = vmatpush1.msra.mxu0 0.0
    %1483 = vmatprep.subr.mxu0 0.0
    %1484 = vmatpush1.msra.mxu0 0.0
    %1485 = vmatprep.subr.mxu0 0.0
    %1486 = vmatpush1.msra.mxu0 0.0
    %1487 = vmatprep.subr.mxu0 0.0
    %1488 = vmatpush1.msra.mxu0 0.0
    %1489 = vmatprep.subr.mxu0 0.0
    %1490 = vmatpush1.msra.mxu0 0.0
    %1491 = vmatprep.subr.mxu0 0.0
    %1492 = vmatpush1.msra.mxu0 0.0
    %1493 = vmatprep.subr.mxu0 0.0
    %1494 = vmatpush1.msra.mxu0 0.0
    %1495 = vmatprep.subr.mxu0 0.0
    %1496 = vmatpush1.msra.mxu0 0.0
    %1497 = vmatprep.subr.mxu0 0.0
    %1498 = vmatpush1.msra.mxu0 0.0
    %1499 = vmatprep.subr.mxu0 0.0
    %1500 = vmatpush1.msra.mxu0 0.0
    %1501 = vmatprep.mubr.f32.mxu0 0.0
    %1502 = vmatmul.mubr.f32.gmra.mrb[0].mxu0 %v1432
    %v1503 = vpop.f32.mrb[0].mxu0
    %v1504 = vadd.f32 0.0, %v1503
    %v1505 = vpop.f32.mrb[0].mxu0
    %1506 = vmatprep.mubr.f32.mxu0 0.0
    %1507 = vmatmul.mubr.f32.gmra.mrb[0].mxu0 %v1435
    %v1508 = vpop.f32.mrb[0].mxu0
    %v1509 = vadd.f32 0.0, %v1508
    %v1510 = vpop.f32.mrb[0].mxu0
    %1511 = vdwg.mxu0
    %1512 = vrot.lane.b32.xlu0 %v296, 116
    %v1513 = vpop.permute.xlu0 %1512
    %1514 = vrot.lane.b32.xlu0 %v301, 116
    %v1515 = vpop.permute.xlu0 %1514
    %1516 = vrot.lane.b32.xlu0 %v296, 84
    %v1517 = vpop.permute.xlu0 %1516
    %1518 = vrot.lane.b32.xlu0 %v301, 84
    %v1519 = vpop.permute.xlu0 %1518
    %v1520 = vsel %vm320, %v1513, 0
    %v1522 = vsel %vm320, %v1515, 0
    %v1524 = vsel %vm320, %v1517, 0
    %v1526 = vsel %vm320, %v1519, 0
    %1528 = vmatprep.subr.mxu0 0.0
    %1529 = vmatpush1.xpose.msra.mxu0 %v1524
    %1530 = vmatprep.subr.mxu0 0.0
    %1531 = vmatpush1.xpose.msra.mxu0 %v1526
    %1532 = vmatprep.subr.mxu0 0.0
    %1533 = vmatpush1.xpose.msra.mxu0 0.0
    %1534 = vmatprep.subr.mxu0 0.0
    %1535 = vmatpush1.xpose.msra.mxu0 0.0
    %1536 = vmatprep.subr.mxu0 0.0
    %1537 = vmatpush1.xpose.msra.mxu0 0.0
    %1538 = vmatprep.subr.mxu0 0.0
    %1539 = vmatpush1.xpose.msra.mxu0 0.0
    %1540 = vmatprep.subr.mxu0 0.0
    %1541 = vmatpush1.xpose.msra.mxu0 0.0
    %1542 = vmatprep.subr.mxu0 0.0
    %1543 = vmatpush1.xpose.msra.mxu0 0.0
    %1544 = vmatprep.subr.mxu0 0.0
    %1545 = vmatpush1.xpose.msra.mxu0 0.0
    %1546 = vmatprep.subr.mxu0 0.0
    %1547 = vmatpush1.xpose.msra.mxu0 0.0
    %1548 = vmatprep.subr.mxu0 0.0
    %1549 = vmatpush1.xpose.msra.mxu0 0.0
    %1550 = vmatprep.subr.mxu0 0.0
    %1551 = vmatpush1.xpose.msra.mxu0 0.0
    %1552 = vmatprep.subr.mxu0 0.0
    %1553 = vmatpush1.xpose.msra.mxu0 0.0
    %1554 = vmatprep.subr.mxu0 0.0
    %1555 = vmatpush1.xpose.msra.mxu0 0.0
    %1556 = vmatprep.subr.mxu0 0.0
    %1557 = vmatpush1.xpose.msra.mxu0 0.0
    %1558 = vmatprep.subr.mxu0 0.0
    %1559 = vmatpush1.xpose.msra.mxu0 0.0
    %1560 = vmatprep.subr.mxu0 0.0
    %1561 = vmatpush1.xpose.msra.mxu0 0.0
    %1562 = vmatprep.subr.mxu0 0.0
    %1563 = vmatpush1.xpose.msra.mxu0 0.0
    %1564 = vmatprep.subr.mxu0 0.0
    %1565 = vmatpush1.xpose.msra.mxu0 0.0
    %1566 = vmatprep.subr.mxu0 0.0
    %1567 = vmatpush1.xpose.msra.mxu0 0.0
    %1568 = vmatprep.subr.mxu0 0.0
    %1569 = vmatpush1.xpose.msra.mxu0 0.0
    %1570 = vmatprep.subr.mxu0 0.0
    %1571 = vmatpush1.xpose.msra.mxu0 0.0
    %1572 = vmatprep.subr.mxu0 0.0
    %1573 = vmatpush1.xpose.msra.mxu0 0.0
    %1574 = vmatprep.subr.mxu0 0.0
    %1575 = vmatpush1.xpose.msra.mxu0 0.0
    %1576 = vmatprep.subr.mxu0 0.0
    %1577 = vmatpush1.xpose.msra.mxu0 0.0
    %1578 = vmatprep.subr.mxu0 0.0
    %1579 = vmatpush1.xpose.msra.mxu0 0.0
    %1580 = vmatprep.subr.mxu0 0.0
    %1581 = vmatpush1.xpose.msra.mxu0 0.0
    %1582 = vmatprep.subr.mxu0 0.0
    %1583 = vmatpush1.xpose.msra.mxu0 0.0
    %1584 = vmatprep.subr.mxu0 0.0
    %1585 = vmatpush1.xpose.msra.mxu0 0.0
    %1586 = vmatprep.subr.mxu0 0.0
    %1587 = vmatpush1.xpose.msra.mxu0 0.0
    %1588 = vmatprep.subr.mxu0 0.0
    %1589 = vmatpush1.xpose.msra.mxu0 0.0
    %1590 = vmatprep.subr.mxu0 0.0
    %1591 = vmatpush1.xpose.msra.mxu0 0.0
    %1592 = vmatprep.mubr.f32.mxu0 0.0
    %1593 = vmatmul.mubr.f32.gmra.mrb[0].mxu0 %v1520
    %v1594 = vpop.f32.mrb[0].mxu0
    %v1595 = vadd.f32 0.0, %v1594
    %v1596 = vpop.f32.mrb[0].mxu0
    %1597 = vmatprep.mubr.f32.mxu0 0.0
    %1598 = vmatmul.mubr.f32.gmra.mrb[0].mxu0 %v1522
    %v1599 = vpop.f32.mrb[0].mxu0
    %v1600 = vadd.f32 0.0, %v1599
    %v1601 = vpop.f32.mrb[0].mxu0
    %1602 = vdwg.mxu0
    %1603 = vrot.lane.b32.xlu0 %v306, 116
    %v1604 = vpop.permute.xlu0 %1603
    %1605 = vrot.lane.b32.xlu0 %v311, 116
    %v1606 = vpop.permute.xlu0 %1605
    %1607 = vrot.lane.b32.xlu0 %v306, 84
    %v1608 = vpop.permute.xlu0 %1607
    %1609 = vrot.lane.b32.xlu0 %v311, 84
    %v1610 = vpop.permute.xlu0 %1609
    %v1611 = vsel %vm320, %v1604, 0
    %v1613 = vsel %vm320, %v1606, 0
    %v1615 = vsel %vm320, %v1608, 0
    %v1617 = vsel %vm320, %v1610, 0
    %1619 = vmatprep.subr.mxu0 0.0
    %1620 = vmatpush1.xpose.msra.mxu0 %v1615
    %1621 = vmatprep.subr.mxu0 0.0
    %1622 = vmatpush1.xpose.msra.mxu0 %v1617
    %1623 = vmatprep.subr.mxu0 0.0
    %1624 = vmatpush1.xpose.msra.mxu0 0.0
    %1625 = vmatprep.subr.mxu0 0.0
    %1626 = vmatpush1.xpose.msra.mxu0 0.0
    %1627 = vmatprep.subr.mxu0 0.0
    %1628 = vmatpush1.xpose.msra.mxu0 0.0
    %1629 = vmatprep.subr.mxu0 0.0
    %1630 = vmatpush1.xpose.msra.mxu0 0.0
    %1631 = vmatprep.subr.mxu0 0.0
    %1632 = vmatpush1.xpose.msra.mxu0 0.0
    %1633 = vmatprep.subr.mxu0 0.0
    %1634 = vmatpush1.xpose.msra.mxu0 0.0
    %1635 = vmatprep.subr.mxu0 0.0
    %1636 = vmatpush1.xpose.msra.mxu0 0.0
    %1637 = vmatprep.subr.mxu0 0.0
    %1638 = vmatpush1.xpose.msra.mxu0 0.0
    %1639 = vmatprep.subr.mxu0 0.0
    %1640 = vmatpush1.xpose.msra.mxu0 0.0
    %1641 = vmatprep.subr.mxu0 0.0
    %1642 = vmatpush1.xpose.msra.mxu0 0.0
    %1643 = vmatprep.subr.mxu0 0.0
    %1644 = vmatpush1.xpose.msra.mxu0 0.0
    %1645 = vmatprep.subr.mxu0 0.0
    %1646 = vmatpush1.xpose.msra.mxu0 0.0
    %1647 = vmatprep.subr.mxu0 0.0
    %1648 = vmatpush1.xpose.msra.mxu0 0.0
    %1649 = vmatprep.subr.mxu0 0.0
    %1650 = vmatpush1.xpose.msra.mxu0 0.0
    %1651 = vmatprep.subr.mxu0 0.0
    %1652 = vmatpush1.xpose.msra.mxu0 0.0
    %1653 = vmatprep.subr.mxu0 0.0
    %1654 = vmatpush1.xpose.msra.mxu0 0.0
    %1655 = vmatprep.subr.mxu0 0.0
    %1656 = vmatpush1.xpose.msra.mxu0 0.0
    %1657 = vmatprep.subr.mxu0 0.0
    %1658 = vmatpush1.xpose.msra.mxu0 0.0
    %1659 = vmatprep.subr.mxu0 0.0
    %1660 = vmatpush1.xpose.msra.mxu0 0.0
    %1661 = vmatprep.subr.mxu0 0.0
    %1662 = vmatpush1.xpose.msra.mxu0 0.0
    %1663 = vmatprep.subr.mxu0 0.0
    %1664 = vmatpush1.xpose.msra.mxu0 0.0
    %1665 = vmatprep.subr.mxu0 0.0
    %1666 = vmatpush1.xpose.msra.mxu0 0.0
    %1667 = vmatprep.subr.mxu0 0.0
    %1668 = vmatpush1.xpose.msra.mxu0 0.0
    %1669 = vmatprep.subr.mxu0 0.0
    %1670 = vmatpush1.xpose.msra.mxu0 0.0
    %1671 = vmatprep.subr.mxu0 0.0
    %1672 = vmatpush1.xpose.msra.mxu0 0.0
    %1673 = vmatprep.subr.mxu0 0.0
    %1674 = vmatpush1.xpose.msra.mxu0 0.0
    %1675 = vmatprep.subr.mxu0 0.0
    %1676 = vmatpush1.xpose.msra.mxu0 0.0
    %1677 = vmatprep.subr.mxu0 0.0
    %1678 = vmatpush1.xpose.msra.mxu0 0.0
    %1679 = vmatprep.subr.mxu0 0.0
    %1680 = vmatpush1.xpose.msra.mxu0 0.0
    %1681 = vmatprep.subr.mxu0 0.0
    %1682 = vmatpush1.xpose.msra.mxu0 0.0
    %1683 = vmatprep.mubr.f32.mxu0 0.0
    %1684 = vmatmul.mubr.f32.gmra.mrb[0].mxu0 %v1611
    %v1685 = vpop.f32.mrb[0].mxu0
    %v1686 = vadd.f32 0.0, %v1685
    %v1687 = vpop.f32.mrb[0].mxu0
    %1688 = vmatprep.mubr.f32.mxu0 0.0
    %1689 = vmatmul.mubr.f32.gmra.mrb[0].mxu0 %v1613
    %v1690 = vpop.f32.mrb[0].mxu0
    %v1691 = vadd.f32 0.0, %v1690
    %v1692 = vpop.f32.mrb[0].mxu0
    %1693 = vdwg.mxu0
    %v1694 = vsel %vm493, %v1595, -inf
    %1695 = vmax.xlane.f32.xlu0 %v1694
    %v1696 = vpop.xlane.xlu0 %1695
    %v1697 = vsel %vm493, %v1600, -inf
    %1698 = vmax.xlane.f32.xlu0 %v1697
    %v1699 = vpop.xlane.xlu0 %1698
    %v1700 = vsel %vm493, %v1686, -inf
    %1701 = vmax.xlane.f32.xlu0 %v1700
    %v1702 = vpop.xlane.xlu0 %1701
    %v1703 = vsel %vm493, %v1691, -inf
    %1704 = vmax.xlane.f32.xlu0 %v1703
    %v1705 = vpop.xlane.xlu0 %1704
    %v1706 = vsub.f32 %v1595, %v1696
    %v1707 = vsub.f32 %v1600, %v1699
    %v1708 = vsub.f32 %v1686, %v1702
    %v1709 = vsub.f32 %v1691, %v1705
    %v1710 = vmul.f32 %v1706, 1.442695
    %v1711 = vpow.pop %v1710
    %v1712 = vmul.f32 %v1707, 1.442695
    %v1713 = vpow.pop %v1712
    %v1714 = vmul.f32 %v1708, 1.442695
    %v1715 = vpow.pop %v1714
    %v1716 = vmul.f32 %v1709, 1.442695
    %v1717 = vpow.pop %v1716
    %v1718 = vsel %vm493, %v1711, 0.0
    %1719 = vadd.xlane.f32.xlu0 %v1718
    %v1720 = vpop.xlane.xlu0 %1719
    %v1721 = vsel %vm493, %v1713, 0.0
    %1722 = vadd.xlane.f32.xlu0 %v1721
    %v1723 = vpop.xlane.xlu0 %1722
    %v1724 = vsel %vm493, %v1715, 0.0
    %1725 = vadd.xlane.f32.xlu0 %v1724
    %v1726 = vpop.xlane.xlu0 %1725
    %v1727 = vsel %vm493, %v1717, 0.0
    %1728 = vadd.xlane.f32.xlu0 %v1727
    %v1729 = vpop.xlane.xlu0 %1728
    %v1730 = vrcp.pop %v1720
    %v1731 = vrcp.pop %v1723
    %v1732 = vrcp.pop %v1726
    %v1733 = vrcp.pop %v1729
    %v1734 = vmul.f32 %v1711, %v1730
    %v1735 = vmul.f32 %v1713, %v1731
    %v1736 = vmul.f32 %v1715, %v1732
    %v1737 = vmul.f32 %v1717, %v1733
    %1738 = vrot.lane.b32.xlu0 %v296, 52
    %v1739 = vpop.permute.xlu0 %1738
    %1740 = vrot.lane.b32.xlu0 %v301, 52
    %v1741 = vpop.permute.xlu0 %1740
    %v1745 = vsel %vm493, %v1734, 0
    %v1748 = vsel %vm493, %v1735, 0
    %1750 = vmatprep.subr.mxu0 0.0
    %1751 = vmatpush1.msra.mxu0 %v1739
    %1752 = vmatprep.subr.mxu0 0.0
    %1753 = vmatpush1.msra.mxu0 %v1741
    %1754 = vmatprep.subr.mxu0 0.0
    %1755 = vmatpush1.msra.mxu0 0.0
    %1756 = vmatprep.subr.mxu0 0.0
    %1757 = vmatpush1.msra.mxu0 0.0
    %1758 = vmatprep.subr.mxu0 0.0
    %1759 = vmatpush1.msra.mxu0 0.0
    %1760 = vmatprep.subr.mxu0 0.0
    %1761 = vmatpush1.msra.mxu0 0.0
    %1762 = vmatprep.subr.mxu0 0.0
    %1763 = vmatpush1.msra.mxu0 0.0
    %1764 = vmatprep.subr.mxu0 0.0
    %1765 = vmatpush1.msra.mxu0 0.0
    %1766 = vmatprep.subr.mxu0 0.0
    %1767 = vmatpush1.msra.mxu0 0.0
    %1768 = vmatprep.subr.mxu0 0.0
    %1769 = vmatpush1.msra.mxu0 0.0
    %1770 = vmatprep.subr.mxu0 0.0
    %1771 = vmatpush1.msra.mxu0 0.0
    %1772 = vmatprep.subr.mxu0 0.0
    %1773 = vmatpush1.msra.mxu0 0.0
    %1774 = vmatprep.subr.mxu0 0.0
    %1775 = vmatpush1.msra.mxu0 0.0
    %1776 = vmatprep.subr.mxu0 0.0
    %1777 = vmatpush1.msra.mxu0 0.0
    %1778 = vmatprep.subr.mxu0 0.0
    %1779 = vmatpush1.msra.mxu0 0.0
    %1780 = vmatprep.subr.mxu0 0.0
    %1781 = vmatpush1.msra.mxu0 0.0
    %1782 = vmatprep.subr.mxu0 0.0
    %1783 = vmatpush1.msra.mxu0 0.0
    %1784 = vmatprep.subr.mxu0 0.0
    %1785 = vmatpush1.msra.mxu0 0.0
    %1786 = vmatprep.subr.mxu0 0.0
    %1787 = vmatpush1.msra.mxu0 0.0
    %1788 = vmatprep.subr.mxu0 0.0
    %1789 = vmatpush1.msra.mxu0 0.0
    %1790 = vmatprep.subr.mxu0 0.0
    %1791 = vmatpush1.msra.mxu0 0.0
    %1792 = vmatprep.subr.mxu0 0.0
    %1793 = vmatpush1.msra.mxu0 0.0
    %1794 = vmatprep.subr.mxu0 0.0
    %1795 = vmatpush1.msra.mxu0 0.0
    %1796 = vmatprep.subr.mxu0 0.0
    %1797 = vmatpush1.msra.mxu0 0.0
    %1798 = vmatprep.subr.mxu0 0.0
    %1799 = vmatpush1.msra.mxu0 0.0
    %1800 = vmatprep.subr.mxu0 0.0
    %1801 = vmatpush1.msra.mxu0 0.0
    %1802 = vmatprep.subr.mxu0 0.0
    %1803 = vmatpush1.msra.mxu0 0.0
    %1804 = vmatprep.subr.mxu0 0.0
    %1805 = vmatpush1.msra.mxu0 0.0
    %1806 = vmatprep.subr.mxu0 0.0
    %1807 = vmatpush1.msra.mxu0 0.0
    %1808 = vmatprep.subr.mxu0 0.0
    %1809 = vmatpush1.msra.mxu0 0.0
    %1810 = vmatprep.subr.mxu0 0.0
    %1811 = vmatpush1.msra.mxu0 0.0
    %1812 = vmatprep.subr.mxu0 0.0
    %1813 = vmatpush1.msra.mxu0 0.0
    %1814 = vmatprep.mubr.f32.mxu0 0.0
    %1815 = vmatmul.mubr.f32.gmra.mrb[0].mxu0 %v1745
    %v1816 = vpop.f32.mrb[0].mxu0
    %v1817 = vadd.f32 0.0, %v1816
    %v1818 = vpop.f32.mrb[0].mxu0
    %1819 = vmatprep.mubr.f32.mxu0 0.0
    %1820 = vmatmul.mubr.f32.gmra.mrb[0].mxu0 %v1748
    %v1821 = vpop.f32.mrb[0].mxu0
    %v1822 = vadd.f32 0.0, %v1821
    %v1823 = vpop.f32.mrb[0].mxu0
    %1824 = vdwg.mxu0
    %1825 = vrot.lane.b32.xlu0 %v306, 52
    %v1826 = vpop.permute.xlu0 %1825
    %1827 = vrot.lane.b32.xlu0 %v311, 52
    %v1828 = vpop.permute.xlu0 %1827
    %v1832 = vsel %vm493, %v1736, 0
    %v1835 = vsel %vm493, %v1737, 0
    %1837 = vmatprep.subr.mxu0 0.0
    %1838 = vmatpush1.msra.mxu0 %v1826
    %1839 = vmatprep.subr.mxu0 0.0
    %1840 = vmatpush1.msra.mxu0 %v1828
    %1841 = vmatprep.subr.mxu0 0.0
    %1842 = vmatpush1.msra.mxu0 0.0
    %1843 = vmatprep.subr.mxu0 0.0
    %1844 = vmatpush1.msra.mxu0 0.0
    %1845 = vmatprep.subr.mxu0 0.0
    %1846 = vmatpush1.msra.mxu0 0.0
    %1847 = vmatprep.subr.mxu0 0.0
    %1848 = vmatpush1.msra.mxu0 0.0
    %1849 = vmatprep.subr.mxu0 0.0
    %1850 = vmatpush1.msra.mxu0 0.0
    %1851 = vmatprep.subr.mxu0 0.0
    %1852 = vmatpush1.msra.mxu0 0.0
    %1853 = vmatprep.subr.mxu0 0.0
    %1854 = vmatpush1.msra.mxu0 0.0
    %1855 = vmatprep.subr.mxu0 0.0
    %1856 = vmatpush1.msra.mxu0 0.0
    %1857 = vmatprep.subr.mxu0 0.0
    %1858 = vmatpush1.msra.mxu0 0.0
    %1859 = vmatprep.subr.mxu0 0.0
    %1860 = vmatpush1.msra.mxu0 0.0
    %1861 = vmatprep.subr.mxu0 0.0
    %1862 = vmatpush1.msra.mxu0 0.0
    %1863 = vmatprep.subr.mxu0 0.0
    %1864 = vmatpush1.msra.mxu0 0.0
    %1865 = vmatprep.subr.mxu0 0.0
    %1866 = vmatpush1.msra.mxu0 0.0
    %1867 = vmatprep.subr.mxu0 0.0
    %1868 = vmatpush1.msra.mxu0 0.0
    %1869 = vmatprep.subr.mxu0 0.0
    %1870 = vmatpush1.msra.mxu0 0.0
    %1871 = vmatprep.subr.mxu0 0.0
    %1872 = vmatpush1.msra.mxu0 0.0
    %1873 = vmatprep.subr.mxu0 0.0
    %1874 = vmatpush1.msra.mxu0 0.0
    %1875 = vmatprep.subr.mxu0 0.0
    %1876 = vmatpush1.msra.mxu0 0.0
    %1877 = vmatprep.subr.mxu0 0.0
    %1878 = vmatpush1.msra.mxu0 0.0
    %1879 = vmatprep.subr.mxu0 0.0
    %1880 = vmatpush1.msra.mxu0 0.0
    %1881 = vmatprep.subr.mxu0 0.0
    %1882 = vmatpush1.msra.mxu0 0.0
    %1883 = vmatprep.subr.mxu0 0.0
    %1884 = vmatpush1.msra.mxu0 0.0
    %1885 = vmatprep.subr.mxu0 0.0
    %1886 = vmatpush1.msra.mxu0 0.0
    %1887 = vmatprep.subr.mxu0 0.0
    %1888 = vmatpush1.msra.mxu0 0.0
    %1889 = vmatprep.subr.mxu0 0.0
    %1890 = vmatpush1.msra.mxu0 0.0
    %1891 = vmatprep.subr.mxu0 0.0
    %1892 = vmatpush1.msra.mxu0 0.0
    %1893 = vmatprep.subr.mxu0 0.0
    %1894 = vmatpush1.msra.mxu0 0.0
    %1895 = vmatprep.subr.mxu0 0.0
    %1896 = vmatpush1.msra.mxu0 0.0
    %1897 = vmatprep.subr.mxu0 0.0
    %1898 = vmatpush1.msra.mxu0 0.0
    %1899 = vmatprep.subr.mxu0 0.0
    %1900 = vmatpush1.msra.mxu0 0.0
    %1901 = vmatprep.mubr.f32.mxu0 0.0
    %1902 = vmatmul.mubr.f32.gmra.mrb[0].mxu0 %v1832
    %v1903 = vpop.f32.mrb[0].mxu0
    %v1904 = vadd.f32 0.0, %v1903
    %v1905 = vpop.f32.mrb[0].mxu0
    %1906 = vmatprep.mubr.f32.mxu0 0.0
    %1907 = vmatmul.mubr.f32.gmra.mrb[0].mxu0 %v1835
    %v1908 = vpop.f32.mrb[0].mxu0
    %v1909 = vadd.f32 0.0, %v1908
    %v1910 = vpop.f32.mrb[0].mxu0
    %1911 = vdwg.mxu0
    %1912 = vrot.lane.b32.xlu0 %v296, 112
    %v1913 = vpop.permute.xlu0 %1912
    %1914 = vrot.lane.b32.xlu0 %v301, 112
    %v1915 = vpop.permute.xlu0 %1914
    %1916 = vrot.lane.b32.xlu0 %v296, 80
    %v1917 = vpop.permute.xlu0 %1916
    %1918 = vrot.lane.b32.xlu0 %v301, 80
    %v1919 = vpop.permute.xlu0 %1918
    %v1920 = vsel %vm320, %v1913, 0
    %v1922 = vsel %vm320, %v1915, 0
    %v1924 = vsel %vm320, %v1917, 0
    %v1926 = vsel %vm320, %v1919, 0
    %1928 = vmatprep.subr.mxu0 0.0
    %1929 = vmatpush1.xpose.msra.mxu0 %v1924
    %1930 = vmatprep.subr.mxu0 0.0
    %1931 = vmatpush1.xpose.msra.mxu0 %v1926
    %1932 = vmatprep.subr.mxu0 0.0
    %1933 = vmatpush1.xpose.msra.mxu0 0.0
    %1934 = vmatprep.subr.mxu0 0.0
    %1935 = vmatpush1.xpose.msra.mxu0 0.0
    %1936 = vmatprep.subr.mxu0 0.0
    %1937 = vmatpush1.xpose.msra.mxu0 0.0
    %1938 = vmatprep.subr.mxu0 0.0
    %1939 = vmatpush1.xpose.msra.mxu0 0.0
    %1940 = vmatprep.subr.mxu0 0.0
    %1941 = vmatpush1.xpose.msra.mxu0 0.0
    %1942 = vmatprep.subr.mxu0 0.0
    %1943 = vmatpush1.xpose.msra.mxu0 0.0
    %1944 = vmatprep.subr.mxu0 0.0
    %1945 = vmatpush1.xpose.msra.mxu0 0.0
    %1946 = vmatprep.subr.mxu0 0.0
    %1947 = vmatpush1.xpose.msra.mxu0 0.0
    %1948 = vmatprep.subr.mxu0 0.0
    %1949 = vmatpush1.xpose.msra.mxu0 0.0
    %1950 = vmatprep.subr.mxu0 0.0
    %1951 = vmatpush1.xpose.msra.mxu0 0.0
    %1952 = vmatprep.subr.mxu0 0.0
    %1953 = vmatpush1.xpose.msra.mxu0 0.0
    %1954 = vmatprep.subr.mxu0 0.0
    %1955 = vmatpush1.xpose.msra.mxu0 0.0
    %1956 = vmatprep.subr.mxu0 0.0
    %1957 = vmatpush1.xpose.msra.mxu0 0.0
    %1958 = vmatprep.subr.mxu0 0.0
    %1959 = vmatpush1.xpose.msra.mxu0 0.0
    %1960 = vmatprep.subr.mxu0 0.0
    %1961 = vmatpush1.xpose.msra.mxu0 0.0
    %1962 = vmatprep.subr.mxu0 0.0
    %1963 = vmatpush1.xpose.msra.mxu0 0.0
    %1964 = vmatprep.subr.mxu0 0.0
    %1965 = vmatpush1.xpose.msra.mxu0 0.0
    %1966 = vmatprep.subr.mxu0 0.0
    %1967 = vmatpush1.xpose.msra.mxu0 0.0
    %1968 = vmatprep.subr.mxu0 0.0
    %1969 = vmatpush1.xpose.msra.mxu0 0.0
    %1970 = vmatprep.subr.mxu0 0.0
    %1971 = vmatpush1.xpose.msra.mxu0 0.0
    %1972 = vmatprep.subr.mxu0 0.0
    %1973 = vmatpush1.xpose.msra.mxu0 0.0
    %1974 = vmatprep.subr.mxu0 0.0
    %1975 = vmatpush1.xpose.msra.mxu0 0.0
    %1976 = vmatprep.subr.mxu0 0.0
    %1977 = vmatpush1.xpose.msra.mxu0 0.0
    %1978 = vmatprep.subr.mxu0 0.0
    %1979 = vmatpush1.xpose.msra.mxu0 0.0
    %1980 = vmatprep.subr.mxu0 0.0
    %1981 = vmatpush1.xpose.msra.mxu0 0.0
    %1982 = vmatprep.subr.mxu0 0.0
    %1983 = vmatpush1.xpose.msra.mxu0 0.0
    %1984 = vmatprep.subr.mxu0 0.0
    %1985 = vmatpush1.xpose.msra.mxu0 0.0
    %1986 = vmatprep.subr.mxu0 0.0
    %1987 = vmatpush1.xpose.msra.mxu0 0.0
    %1988 = vmatprep.subr.mxu0 0.0
    %1989 = vmatpush1.xpose.msra.mxu0 0.0
    %1990 = vmatprep.subr.mxu0 0.0
    %1991 = vmatpush1.xpose.msra.mxu0 0.0
    %1992 = vmatprep.mubr.f32.mxu0 0.0
    %1993 = vmatmul.mubr.f32.gmra.mrb[0].mxu0 %v1920
    %v1994 = vpop.f32.mrb[0].mxu0
    %v1995 = vadd.f32 0.0, %v1994
    %v1996 = vpop.f32.mrb[0].mxu0
    %1997 = vmatprep.mubr.f32.mxu0 0.0
    %1998 = vmatmul.mubr.f32.gmra.mrb[0].mxu0 %v1922
    %v1999 = vpop.f32.mrb[0].mxu0
    %v2000 = vadd.f32 0.0, %v1999
    %v2001 = vpop.f32.mrb[0].mxu0
    %2002 = vdwg.mxu0
    %2003 = vrot.lane.b32.xlu0 %v306, 112
    %v2004 = vpop.permute.xlu0 %2003
    %2005 = vrot.lane.b32.xlu0 %v311, 112
    %v2006 = vpop.permute.xlu0 %2005
    %2007 = vrot.lane.b32.xlu0 %v306, 80
    %v2008 = vpop.permute.xlu0 %2007
    %2009 = vrot.lane.b32.xlu0 %v311, 80
    %v2010 = vpop.permute.xlu0 %2009
    %v2011 = vsel %vm320, %v2004, 0
    %v2013 = vsel %vm320, %v2006, 0
    %v2015 = vsel %vm320, %v2008, 0
    %v2017 = vsel %vm320, %v2010, 0
    %2019 = vmatprep.subr.mxu0 0.0
    %2020 = vmatpush1.xpose.msra.mxu0 %v2015
    %2021 = vmatprep.subr.mxu0 0.0
    %2022 = vmatpush1.xpose.msra.mxu0 %v2017
    %2023 = vmatprep.subr.mxu0 0.0
    %2024 = vmatpush1.xpose.msra.mxu0 0.0
    %2025 = vmatprep.subr.mxu0 0.0
    %2026 = vmatpush1.xpose.msra.mxu0 0.0
    %2027 = vmatprep.subr.mxu0 0.0
    %2028 = vmatpush1.xpose.msra.mxu0 0.0
    %2029 = vmatprep.subr.mxu0 0.0
    %2030 = vmatpush1.xpose.msra.mxu0 0.0
    %2031 = vmatprep.subr.mxu0 0.0
    %2032 = vmatpush1.xpose.msra.mxu0 0.0
    %2033 = vmatprep.subr.mxu0 0.0
    %2034 = vmatpush1.xpose.msra.mxu0 0.0
    %2035 = vmatprep.subr.mxu0 0.0
    %2036 = vmatpush1.xpose.msra.mxu0 0.0
    %2037 = vmatprep.subr.mxu0 0.0
    %2038 = vmatpush1.xpose.msra.mxu0 0.0
    %2039 = vmatprep.subr.mxu0 0.0
    %2040 = vmatpush1.xpose.msra.mxu0 0.0
    %2041 = vmatprep.subr.mxu0 0.0
    %2042 = vmatpush1.xpose.msra.mxu0 0.0
    %2043 = vmatprep.subr.mxu0 0.0
    %2044 = vmatpush1.xpose.msra.mxu0 0.0
    %2045 = vmatprep.subr.mxu0 0.0
    %2046 = vmatpush1.xpose.msra.mxu0 0.0
    %2047 = vmatprep.subr.mxu0 0.0
    %2048 = vmatpush1.xpose.msra.mxu0 0.0
    %2049 = vmatprep.subr.mxu0 0.0
    %2050 = vmatpush1.xpose.msra.mxu0 0.0
    %2051 = vmatprep.subr.mxu0 0.0
    %2052 = vmatpush1.xpose.msra.mxu0 0.0
    %2053 = vmatprep.subr.mxu0 0.0
    %2054 = vmatpush1.xpose.msra.mxu0 0.0
    %2055 = vmatprep.subr.mxu0 0.0
    %2056 = vmatpush1.xpose.msra.mxu0 0.0
    %2057 = vmatprep.subr.mxu0 0.0
    %2058 = vmatpush1.xpose.msra.mxu0 0.0
    %2059 = vmatprep.subr.mxu0 0.0
    %2060 = vmatpush1.xpose.msra.mxu0 0.0
    %2061 = vmatprep.subr.mxu0 0.0
    %2062 = vmatpush1.xpose.msra.mxu0 0.0
    %2063 = vmatprep.subr.mxu0 0.0
    %2064 = vmatpush1.xpose.msra.mxu0 0.0
    %2065 = vmatprep.subr.mxu0 0.0
    %2066 = vmatpush1.xpose.msra.mxu0 0.0
    %2067 = vmatprep.subr.mxu0 0.0
    %2068 = vmatpush1.xpose.msra.mxu0 0.0
    %2069 = vmatprep.subr.mxu0 0.0
    %2070 = vmatpush1.xpose.msra.mxu0 0.0
    %2071 = vmatprep.subr.mxu0 0.0
    %2072 = vmatpush1.xpose.msra.mxu0 0.0
    %2073 = vmatprep.subr.mxu0 0.0
    %2074 = vmatpush1.xpose.msra.mxu0 0.0
    %2075 = vmatprep.subr.mxu0 0.0
    %2076 = vmatpush1.xpose.msra.mxu0 0.0
    %2077 = vmatprep.subr.mxu0 0.0
    %2078 = vmatpush1.xpose.msra.mxu0 0.0
    %2079 = vmatprep.subr.mxu0 0.0
    %2080 = vmatpush1.xpose.msra.mxu0 0.0
    %2081 = vmatprep.subr.mxu0 0.0
    %2082 = vmatpush1.xpose.msra.mxu0 0.0
    %2083 = vmatprep.mubr.f32.mxu0 0.0
    %2084 = vmatmul.mubr.f32.gmra.mrb[0].mxu0 %v2011
    %v2085 = vpop.f32.mrb[0].mxu0
    %v2086 = vadd.f32 0.0, %v2085
    %v2087 = vpop.f32.mrb[0].mxu0
    %2088 = vmatprep.mubr.f32.mxu0 0.0
    %2089 = vmatmul.mubr.f32.gmra.mrb[0].mxu0 %v2013
    %v2090 = vpop.f32.mrb[0].mxu0
    %v2091 = vadd.f32 0.0, %v2090
    %v2092 = vpop.f32.mrb[0].mxu0
    %2093 = vdwg.mxu0
    %v2094 = vsel %vm493, %v1995, -inf
    %2095 = vmax.xlane.f32.xlu0 %v2094
    %v2096 = vpop.xlane.xlu0 %2095
    %v2097 = vsel %vm493, %v2000, -inf
    %2098 = vmax.xlane.f32.xlu0 %v2097
    %v2099 = vpop.xlane.xlu0 %2098
    %v2100 = vsel %vm493, %v2086, -inf
    %2101 = vmax.xlane.f32.xlu0 %v2100
    %v2102 = vpop.xlane.xlu0 %2101
    %v2103 = vsel %vm493, %v2091, -inf
    %2104 = vmax.xlane.f32.xlu0 %v2103
    %v2105 = vpop.xlane.xlu0 %2104
    %v2106 = vsub.f32 %v1995, %v2096
    %v2107 = vsub.f32 %v2000, %v2099
    %v2108 = vsub.f32 %v2086, %v2102
    %v2109 = vsub.f32 %v2091, %v2105
    %v2110 = vmul.f32 %v2106, 1.442695
    %v2111 = vpow.pop %v2110
    %v2112 = vmul.f32 %v2107, 1.442695
    %v2113 = vpow.pop %v2112
    %v2114 = vmul.f32 %v2108, 1.442695
    %v2115 = vpow.pop %v2114
    %v2116 = vmul.f32 %v2109, 1.442695
    %v2117 = vpow.pop %v2116
    %v2118 = vsel %vm493, %v2111, 0.0
    %2119 = vadd.xlane.f32.xlu0 %v2118
    %v2120 = vpop.xlane.xlu0 %2119
    %v2121 = vsel %vm493, %v2113, 0.0
    %2122 = vadd.xlane.f32.xlu0 %v2121
    %v2123 = vpop.xlane.xlu0 %2122
    %v2124 = vsel %vm493, %v2115, 0.0
    %2125 = vadd.xlane.f32.xlu0 %v2124
    %v2126 = vpop.xlane.xlu0 %2125
    %v2127 = vsel %vm493, %v2117, 0.0
    %2128 = vadd.xlane.f32.xlu0 %v2127
    %v2129 = vpop.xlane.xlu0 %2128
    %v2130 = vrcp.pop %v2120
    %v2131 = vrcp.pop %v2123
    %v2132 = vrcp.pop %v2126
    %v2133 = vrcp.pop %v2129
    %v2134 = vmul.f32 %v2111, %v2130
    %v2135 = vmul.f32 %v2113, %v2131
    %v2136 = vmul.f32 %v2115, %v2132
    %v2137 = vmul.f32 %v2117, %v2133
    %2138 = vrot.lane.b32.xlu0 %v296, 48
    %v2139 = vpop.permute.xlu0 %2138
    %2140 = vrot.lane.b32.xlu0 %v301, 48
    %v2141 = vpop.permute.xlu0 %2140
    %v2145 = vsel %vm493, %v2134, 0
    %v2148 = vsel %vm493, %v2135, 0
    %2150 = vmatprep.subr.mxu0 0.0
    %2151 = vmatpush1.msra.mxu0 %v2139
    %2152 = vmatprep.subr.mxu0 0.0
    %2153 = vmatpush1.msra.mxu0 %v2141
    %2154 = vmatprep.subr.mxu0 0.0
    %2155 = vmatpush1.msra.mxu0 0.0
    %2156 = vmatprep.subr.mxu0 0.0
    %2157 = vmatpush1.msra.mxu0 0.0
    %2158 = vmatprep.subr.mxu0 0.0
    %2159 = vmatpush1.msra.mxu0 0.0
    %2160 = vmatprep.subr.mxu0 0.0
    %2161 = vmatpush1.msra.mxu0 0.0
    %2162 = vmatprep.subr.mxu0 0.0
    %2163 = vmatpush1.msra.mxu0 0.0
    %2164 = vmatprep.subr.mxu0 0.0
    %2165 = vmatpush1.msra.mxu0 0.0
    %2166 = vmatprep.subr.mxu0 0.0
    %2167 = vmatpush1.msra.mxu0 0.0
    %2168 = vmatprep.subr.mxu0 0.0
    %2169 = vmatpush1.msra.mxu0 0.0
    %2170 = vmatprep.subr.mxu0 0.0
    %2171 = vmatpush1.msra.mxu0 0.0
    %2172 = vmatprep.subr.mxu0 0.0
    %2173 = vmatpush1.msra.mxu0 0.0
    %2174 = vmatprep.subr.mxu0 0.0
    %2175 = vmatpush1.msra.mxu0 0.0
    %2176 = vmatprep.subr.mxu0 0.0
    %2177 = vmatpush1.msra.mxu0 0.0
    %2178 = vmatprep.subr.mxu0 0.0
    %2179 = vmatpush1.msra.mxu0 0.0
    %2180 = vmatprep.subr.mxu0 0.0
    %2181 = vmatpush1.msra.mxu0 0.0
    %2182 = vmatprep.subr.mxu0 0.0
    %2183 = vmatpush1.msra.mxu0 0.0
    %2184 = vmatprep.subr.mxu0 0.0
    %2185 = vmatpush1.msra.mxu0 0.0
    %2186 = vmatprep.subr.mxu0 0.0
    %2187 = vmatpush1.msra.mxu0 0.0
    %2188 = vmatprep.subr.mxu0 0.0
    %2189 = vmatpush1.msra.mxu0 0.0
    %2190 = vmatprep.subr.mxu0 0.0
    %2191 = vmatpush1.msra.mxu0 0.0
    %2192 = vmatprep.subr.mxu0 0.0
    %2193 = vmatpush1.msra.mxu0 0.0
    %2194 = vmatprep.subr.mxu0 0.0
    %2195 = vmatpush1.msra.mxu0 0.0
    %2196 = vmatprep.subr.mxu0 0.0
    %2197 = vmatpush1.msra.mxu0 0.0
    %2198 = vmatprep.subr.mxu0 0.0
    %2199 = vmatpush1.msra.mxu0 0.0
    %2200 = vmatprep.subr.mxu0 0.0
    %2201 = vmatpush1.msra.mxu0 0.0
    %2202 = vmatprep.subr.mxu0 0.0
    %2203 = vmatpush1.msra.mxu0 0.0
    %2204 = vmatprep.subr.mxu0 0.0
    %2205 = vmatpush1.msra.mxu0 0.0
    %2206 = vmatprep.subr.mxu0 0.0
    %2207 = vmatpush1.msra.mxu0 0.0
    %2208 = vmatprep.subr.mxu0 0.0
    %2209 = vmatpush1.msra.mxu0 0.0
    %2210 = vmatprep.subr.mxu0 0.0
    %2211 = vmatpush1.msra.mxu0 0.0
    %2212 = vmatprep.subr.mxu0 0.0
    %2213 = vmatpush1.msra.mxu0 0.0
    %2214 = vmatprep.mubr.f32.mxu0 0.0
    %2215 = vmatmul.mubr.f32.gmra.mrb[0].mxu0 %v2145
    %v2216 = vpop.f32.mrb[0].mxu0
    %v2217 = vadd.f32 0.0, %v2216
    %v2218 = vpop.f32.mrb[0].mxu0
    %2219 = vmatprep.mubr.f32.mxu0 0.0
    %2220 = vmatmul.mubr.f32.gmra.mrb[0].mxu0 %v2148
    %v2221 = vpop.f32.mrb[0].mxu0
    %v2222 = vadd.f32 0.0, %v2221
    %v2223 = vpop.f32.mrb[0].mxu0
    %2224 = vdwg.mxu0
    %2225 = vrot.lane.b32.xlu0 %v306, 48
    %v2226 = vpop.permute.xlu0 %2225
    %2227 = vrot.lane.b32.xlu0 %v311, 48
    %v2228 = vpop.permute.xlu0 %2227
    %v2232 = vsel %vm493, %v2136, 0
    %v2235 = vsel %vm493, %v2137, 0
    %2237 = vmatprep.subr.mxu0 0.0
    %2238 = vmatpush1.msra.mxu0 %v2226
    %2239 = vmatprep.subr.mxu0 0.0
    %2240 = vmatpush1.msra.mxu0 %v2228
    %2241 = vmatprep.subr.mxu0 0.0
    %2242 = vmatpush1.msra.mxu0 0.0
    %2243 = vmatprep.subr.mxu0 0.0
    %2244 = vmatpush1.msra.mxu0 0.0
    %2245 = vmatprep.subr.mxu0 0.0
    %2246 = vmatpush1.msra.mxu0 0.0
    %2247 = vmatprep.subr.mxu0 0.0
    %2248 = vmatpush1.msra.mxu0 0.0
    %2249 = vmatprep.subr.mxu0 0.0
    %2250 = vmatpush1.msra.mxu0 0.0
    %2251 = vmatprep.subr.mxu0 0.0
    %2252 = vmatpush1.msra.mxu0 0.0
    %2253 = vmatprep.subr.mxu0 0.0
    %2254 = vmatpush1.msra.mxu0 0.0
    %2255 = vmatprep.subr.mxu0 0.0
    %2256 = vmatpush1.msra.mxu0 0.0
    %2257 = vmatprep.subr.mxu0 0.0
    %2258 = vmatpush1.msra.mxu0 0.0
    %2259 = vmatprep.subr.mxu0 0.0
    %2260 = vmatpush1.msra.mxu0 0.0
    %2261 = vmatprep.subr.mxu0 0.0
    %2262 = vmatpush1.msra.mxu0 0.0
    %2263 = vmatprep.subr.mxu0 0.0
    %2264 = vmatpush1.msra.mxu0 0.0
    %2265 = vmatprep.subr.mxu0 0.0
    %2266 = vmatpush1.msra.mxu0 0.0
    %2267 = vmatprep.subr.mxu0 0.0
    %2268 = vmatpush1.msra.mxu0 0.0
    %2269 = vmatprep.subr.mxu0 0.0
    %2270 = vmatpush1.msra.mxu0 0.0
    %2271 = vmatprep.subr.mxu0 0.0
    %2272 = vmatpush1.msra.mxu0 0.0
    %2273 = vmatprep.subr.mxu0 0.0
    %2274 = vmatpush1.msra.mxu0 0.0
    %2275 = vmatprep.subr.mxu0 0.0
    %2276 = vmatpush1.msra.mxu0 0.0
    %2277 = vmatprep.subr.mxu0 0.0
    %2278 = vmatpush1.msra.mxu0 0.0
    %2279 = vmatprep.subr.mxu0 0.0
    %2280 = vmatpush1.msra.mxu0 0.0
    %2281 = vmatprep.subr.mxu0 0.0
    %2282 = vmatpush1.msra.mxu0 0.0
    %2283 = vmatprep.subr.mxu0 0.0
    %2284 = vmatpush1.msra.mxu0 0.0
    %2285 = vmatprep.subr.mxu0 0.0
    %2286 = vmatpush1.msra.mxu0 0.0
    %2287 = vmatprep.subr.mxu0 0.0
    %2288 = vmatpush1.msra.mxu0 0.0
    %2289 = vmatprep.subr.mxu0 0.0
    %2290 = vmatpush1.msra.mxu0 0.0
    %2291 = vmatprep.subr.mxu0 0.0
    %2292 = vmatpush1.msra.mxu0 0.0
    %2293 = vmatprep.subr.mxu0 0.0
    %2294 = vmatpush1.msra.mxu0 0.0
    %2295 = vmatprep.subr.mxu0 0.0
    %2296 = vmatpush1.msra.mxu0 0.0
    %2297 = vmatprep.subr.mxu0 0.0
    %2298 = vmatpush1.msra.mxu0 0.0
    %2299 = vmatprep.subr.mxu0 0.0
    %2300 = vmatpush1.msra.mxu0 0.0
    %2301 = vmatprep.mubr.f32.mxu0 0.0
    %2302 = vmatmul.mubr.f32.gmra.mrb[0].mxu0 %v2232
    %v2303 = vpop.f32.mrb[0].mxu0
    %v2304 = vadd.f32 0.0, %v2303
    %v2305 = vpop.f32.mrb[0].mxu0
    %2306 = vmatprep.mubr.f32.mxu0 0.0
    %2307 = vmatmul.mubr.f32.gmra.mrb[0].mxu0 %v2235
    %v2308 = vpop.f32.mrb[0].mxu0
    %v2309 = vadd.f32 0.0, %v2308
    %v2310 = vpop.f32.mrb[0].mxu0
    %2311 = vdwg.mxu0
    %2312 = vrot.lane.b32.xlu0 %v296, 108
    %v2313 = vpop.permute.xlu0 %2312
    %2314 = vrot.lane.b32.xlu0 %v301, 108
    %v2315 = vpop.permute.xlu0 %2314
    %2316 = vrot.lane.b32.xlu0 %v296, 76
    %v2317 = vpop.permute.xlu0 %2316
    %2318 = vrot.lane.b32.xlu0 %v301, 76
    %v2319 = vpop.permute.xlu0 %2318
    %v2320 = vsel %vm320, %v2313, 0
    %v2322 = vsel %vm320, %v2315, 0
    %v2324 = vsel %vm320, %v2317, 0
    %v2326 = vsel %vm320, %v2319, 0
    %2328 = vmatprep.subr.mxu0 0.0
    %2329 = vmatpush1.xpose.msra.mxu0 %v2324
    %2330 = vmatprep.subr.mxu0 0.0
    %2331 = vmatpush1.xpose.msra.mxu0 %v2326
    %2332 = vmatprep.subr.mxu0 0.0
    %2333 = vmatpush1.xpose.msra.mxu0 0.0
    %2334 = vmatprep.subr.mxu0 0.0
    %2335 = vmatpush1.xpose.msra.mxu0 0.0
    %2336 = vmatprep.subr.mxu0 0.0
    %2337 = vmatpush1.xpose.msra.mxu0 0.0
    %2338 = vmatprep.subr.mxu0 0.0
    %2339 = vmatpush1.xpose.msra.mxu0 0.0
    %2340 = vmatprep.subr.mxu0 0.0
    %2341 = vmatpush1.xpose.msra.mxu0 0.0
    %2342 = vmatprep.subr.mxu0 0.0
    %2343 = vmatpush1.xpose.msra.mxu0 0.0
    %2344 = vmatprep.subr.mxu0 0.0
    %2345 = vmatpush1.xpose.msra.mxu0 0.0
    %2346 = vmatprep.subr.mxu0 0.0
    %2347 = vmatpush1.xpose.msra.mxu0 0.0
    %2348 = vmatprep.subr.mxu0 0.0
    %2349 = vmatpush1.xpose.msra.mxu0 0.0
    %2350 = vmatprep.subr.mxu0 0.0
    %2351 = vmatpush1.xpose.msra.mxu0 0.0
    %2352 = vmatprep.subr.mxu0 0.0
    %2353 = vmatpush1.xpose.msra.mxu0 0.0
    %2354 = vmatprep.subr.mxu0 0.0
    %2355 = vmatpush1.xpose.msra.mxu0 0.0
    %2356 = vmatprep.subr.mxu0 0.0
    %2357 = vmatpush1.xpose.msra.mxu0 0.0
    %2358 = vmatprep.subr.mxu0 0.0
    %2359 = vmatpush1.xpose.msra.mxu0 0.0
    %2360 = vmatprep.subr.mxu0 0.0
    %2361 = vmatpush1.xpose.msra.mxu0 0.0
    %2362 = vmatprep.subr.mxu0 0.0
    %2363 = vmatpush1.xpose.msra.mxu0 0.0
    %2364 = vmatprep.subr.mxu0 0.0
    %2365 = vmatpush1.xpose.msra.mxu0 0.0
    %2366 = vmatprep.subr.mxu0 0.0
    %2367 = vmatpush1.xpose.msra.mxu0 0.0
    %2368 = vmatprep.subr.mxu0 0.0
    %2369 = vmatpush1.xpose.msra.mxu0 0.0
    %2370 = vmatprep.subr.mxu0 0.0
    %2371 = vmatpush1.xpose.msra.mxu0 0.0
    %2372 = vmatprep.subr.mxu0 0.0
    %2373 = vmatpush1.xpose.msra.mxu0 0.0
    %2374 = vmatprep.subr.mxu0 0.0
    %2375 = vmatpush1.xpose.msra.mxu0 0.0
    %2376 = vmatprep.subr.mxu0 0.0
    %2377 = vmatpush1.xpose.msra.mxu0 0.0
    %2378 = vmatprep.subr.mxu0 0.0
    %2379 = vmatpush1.xpose.msra.mxu0 0.0
    %2380 = vmatprep.subr.mxu0 0.0
    %2381 = vmatpush1.xpose.msra.mxu0 0.0
    %2382 = vmatprep.subr.mxu0 0.0
    %2383 = vmatpush1.xpose.msra.mxu0 0.0
    %2384 = vmatprep.subr.mxu0 0.0
    %2385 = vmatpush1.xpose.msra.mxu0 0.0
    %2386 = vmatprep.subr.mxu0 0.0
    %2387 = vmatpush1.xpose.msra.mxu0 0.0
    %2388 = vmatprep.subr.mxu0 0.0
    %2389 = vmatpush1.xpose.msra.mxu0 0.0
    %2390 = vmatprep.subr.mxu0 0.0
    %2391 = vmatpush1.xpose.msra.mxu0 0.0
    %2392 = vmatprep.mubr.f32.mxu0 0.0
    %2393 = vmatmul.mubr.f32.gmra.mrb[0].mxu0 %v2320
    %v2394 = vpop.f32.mrb[0].mxu0
    %v2395 = vadd.f32 0.0, %v2394
    %v2396 = vpop.f32.mrb[0].mxu0
    %2397 = vmatprep.mubr.f32.mxu0 0.0
    %2398 = vmatmul.mubr.f32.gmra.mrb[0].mxu0 %v2322
    %v2399 = vpop.f32.mrb[0].mxu0
    %v2400 = vadd.f32 0.0, %v2399
    %v2401 = vpop.f32.mrb[0].mxu0
    %2402 = vdwg.mxu0
    %2403 = vrot.lane.b32.xlu0 %v306, 108
    %v2404 = vpop.permute.xlu0 %2403
    %2405 = vrot.lane.b32.xlu0 %v311, 108
    %v2406 = vpop.permute.xlu0 %2405
    %2407 = vrot.lane.b32.xlu0 %v306, 76
    %v2408 = vpop.permute.xlu0 %2407
    %2409 = vrot.lane.b32.xlu0 %v311, 76
    %v2410 = vpop.permute.xlu0 %2409
    %v2411 = vsel %vm320, %v2404, 0
    %v2413 = vsel %vm320, %v2406, 0
    %v2415 = vsel %vm320, %v2408, 0
    %v2417 = vsel %vm320, %v2410, 0
    %2419 = vmatprep.subr.mxu0 0.0
    %2420 = vmatpush1.xpose.msra.mxu0 %v2415
    %2421 = vmatprep.subr.mxu0 0.0
    %2422 = vmatpush1.xpose.msra.mxu0 %v2417
    %2423 = vmatprep.subr.mxu0 0.0
    %2424 = vmatpush1.xpose.msra.mxu0 0.0
    %2425 = vmatprep.subr.mxu0 0.0
    %2426 = vmatpush1.xpose.msra.mxu0 0.0
    %2427 = vmatprep.subr.mxu0 0.0
    %2428 = vmatpush1.xpose.msra.mxu0 0.0
    %2429 = vmatprep.subr.mxu0 0.0
    %2430 = vmatpush1.xpose.msra.mxu0 0.0
    %2431 = vmatprep.subr.mxu0 0.0
    %2432 = vmatpush1.xpose.msra.mxu0 0.0
    %2433 = vmatprep.subr.mxu0 0.0
    %2434 = vmatpush1.xpose.msra.mxu0 0.0
    %2435 = vmatprep.subr.mxu0 0.0
    %2436 = vmatpush1.xpose.msra.mxu0 0.0
    %2437 = vmatprep.subr.mxu0 0.0
    %2438 = vmatpush1.xpose.msra.mxu0 0.0
    %2439 = vmatprep.subr.mxu0 0.0
    %2440 = vmatpush1.xpose.msra.mxu0 0.0
    %2441 = vmatprep.subr.mxu0 0.0
    %2442 = vmatpush1.xpose.msra.mxu0 0.0
    %2443 = vmatprep.subr.mxu0 0.0
    %2444 = vmatpush1.xpose.msra.mxu0 0.0
    %2445 = vmatprep.subr.mxu0 0.0
    %2446 = vmatpush1.xpose.msra.mxu0 0.0
    %2447 = vmatprep.subr.mxu0 0.0
    %2448 = vmatpush1.xpose.msra.mxu0 0.0
    %2449 = vmatprep.subr.mxu0 0.0
    %2450 = vmatpush1.xpose.msra.mxu0 0.0
    %2451 = vmatprep.subr.mxu0 0.0
    %2452 = vmatpush1.xpose.msra.mxu0 0.0
    %2453 = vmatprep.subr.mxu0 0.0
    %2454 = vmatpush1.xpose.msra.mxu0 0.0
    %2455 = vmatprep.subr.mxu0 0.0
    %2456 = vmatpush1.xpose.msra.mxu0 0.0
    %2457 = vmatprep.subr.mxu0 0.0
    %2458 = vmatpush1.xpose.msra.mxu0 0.0
    %2459 = vmatprep.subr.mxu0 0.0
    %2460 = vmatpush1.xpose.msra.mxu0 0.0
    %2461 = vmatprep.subr.mxu0 0.0
    %2462 = vmatpush1.xpose.msra.mxu0 0.0
    %2463 = vmatprep.subr.mxu0 0.0
    %2464 = vmatpush1.xpose.msra.mxu0 0.0
    %2465 = vmatprep.subr.mxu0 0.0
    %2466 = vmatpush1.xpose.msra.mxu0 0.0
    %2467 = vmatprep.subr.mxu0 0.0
    %2468 = vmatpush1.xpose.msra.mxu0 0.0
    %2469 = vmatprep.subr.mxu0 0.0
    %2470 = vmatpush1.xpose.msra.mxu0 0.0
    %2471 = vmatprep.subr.mxu0 0.0
    %2472 = vmatpush1.xpose.msra.mxu0 0.0
    %2473 = vmatprep.subr.mxu0 0.0
    %2474 = vmatpush1.xpose.msra.mxu0 0.0
    %2475 = vmatprep.subr.mxu0 0.0
    %2476 = vmatpush1.xpose.msra.mxu0 0.0
    %2477 = vmatprep.subr.mxu0 0.0
    %2478 = vmatpush1.xpose.msra.mxu0 0.0
    %2479 = vmatprep.subr.mxu0 0.0
    %2480 = vmatpush1.xpose.msra.mxu0 0.0
    %2481 = vmatprep.subr.mxu0 0.0
    %2482 = vmatpush1.xpose.msra.mxu0 0.0
    %2483 = vmatprep.mubr.f32.mxu0 0.0
    %2484 = vmatmul.mubr.f32.gmra.mrb[0].mxu0 %v2411
    %v2485 = vpop.f32.mrb[0].mxu0
    %v2486 = vadd.f32 0.0, %v2485
    %v2487 = vpop.f32.mrb[0].mxu0
    %2488 = vmatprep.mubr.f32.mxu0 0.0
    %2489 = vmatmul.mubr.f32.gmra.mrb[0].mxu0 %v2413
    %v2490 = vpop.f32.mrb[0].mxu0
    %v2491 = vadd.f32 0.0, %v2490
    %v2492 = vpop.f32.mrb[0].mxu0
    %2493 = vdwg.mxu0
    %v2494 = vsel %vm493, %v2395, -inf
    %2495 = vmax.xlane.f32.xlu0 %v2494
    %v2496 = vpop.xlane.xlu0 %2495
    %v2497 = vsel %vm493, %v2400, -inf
    %2498 = vmax.xlane.f32.xlu0 %v2497
    %v2499 = vpop.xlane.xlu0 %2498
    %v2500 = vsel %vm493, %v2486, -inf
    %2501 = vmax.xlane.f32.xlu0 %v2500
    %v2502 = vpop.xlane.xlu0 %2501
    %v2503 = vsel %vm493, %v2491, -inf
    %2504 = vmax.xlane.f32.xlu0 %v2503
    %v2505 = vpop.xlane.xlu0 %2504
    %v2506 = vsub.f32 %v2395, %v2496
    %v2507 = vsub.f32 %v2400, %v2499
    %v2508 = vsub.f32 %v2486, %v2502
    %v2509 = vsub.f32 %v2491, %v2505
    %v2510 = vmul.f32 %v2506, 1.442695
    %v2511 = vpow.pop %v2510
    %v2512 = vmul.f32 %v2507, 1.442695
    %v2513 = vpow.pop %v2512
    %v2514 = vmul.f32 %v2508, 1.442695
    %v2515 = vpow.pop %v2514
    %v2516 = vmul.f32 %v2509, 1.442695
    %v2517 = vpow.pop %v2516
    %v2518 = vsel %vm493, %v2511, 0.0
    %2519 = vadd.xlane.f32.xlu0 %v2518
    %v2520 = vpop.xlane.xlu0 %2519
    %v2521 = vsel %vm493, %v2513, 0.0
    %2522 = vadd.xlane.f32.xlu0 %v2521
    %v2523 = vpop.xlane.xlu0 %2522
    %v2524 = vsel %vm493, %v2515, 0.0
    %2525 = vadd.xlane.f32.xlu0 %v2524
    %v2526 = vpop.xlane.xlu0 %2525
    %v2527 = vsel %vm493, %v2517, 0.0
    %2528 = vadd.xlane.f32.xlu0 %v2527
    %v2529 = vpop.xlane.xlu0 %2528
    %v2530 = vrcp.pop %v2520
    %v2531 = vrcp.pop %v2523
    %v2532 = vrcp.pop %v2526
    %v2533 = vrcp.pop %v2529
    %v2534 = vmul.f32 %v2511, %v2530
    %v2535 = vmul.f32 %v2513, %v2531
    %v2536 = vmul.f32 %v2515, %v2532
    %v2537 = vmul.f32 %v2517, %v2533
    %2538 = vrot.lane.b32.xlu0 %v296, 44
    %v2539 = vpop.permute.xlu0 %2538
    %2540 = vrot.lane.b32.xlu0 %v301, 44
    %v2541 = vpop.permute.xlu0 %2540
    %v2545 = vsel %vm493, %v2534, 0
    %v2548 = vsel %vm493, %v2535, 0
    %2550 = vmatprep.subr.mxu0 0.0
    %2551 = vmatpush1.msra.mxu0 %v2539
    %2552 = vmatprep.subr.mxu0 0.0
    %2553 = vmatpush1.msra.mxu0 %v2541
    %2554 = vmatprep.subr.mxu0 0.0
    %2555 = vmatpush1.msra.mxu0 0.0
    %2556 = vmatprep.subr.mxu0 0.0
    %2557 = vmatpush1.msra.mxu0 0.0
    %2558 = vmatprep.subr.mxu0 0.0
    %2559 = vmatpush1.msra.mxu0 0.0
    %2560 = vmatprep.subr.mxu0 0.0
    %2561 = vmatpush1.msra.mxu0 0.0
    %2562 = vmatprep.subr.mxu0 0.0
    %2563 = vmatpush1.msra.mxu0 0.0
    %2564 = vmatprep.subr.mxu0 0.0
    %2565 = vmatpush1.msra.mxu0 0.0
    %2566 = vmatprep.subr.mxu0 0.0
    %2567 = vmatpush1.msra.mxu0 0.0
    %2568 = vmatprep.subr.mxu0 0.0
    %2569 = vmatpush1.msra.mxu0 0.0
    %2570 = vmatprep.subr.mxu0 0.0
    %2571 = vmatpush1.msra.mxu0 0.0
    %2572 = vmatprep.subr.mxu0 0.0
    %2573 = vmatpush1.msra.mxu0 0.0
    %2574 = vmatprep.subr.mxu0 0.0
    %2575 = vmatpush1.msra.mxu0 0.0
    %2576 = vmatprep.subr.mxu0 0.0
    %2577 = vmatpush1.msra.mxu0 0.0
    %2578 = vmatprep.subr.mxu0 0.0
    %2579 = vmatpush1.msra.mxu0 0.0
    %2580 = vmatprep.subr.mxu0 0.0
    %2581 = vmatpush1.msra.mxu0 0.0
    %2582 = vmatprep.subr.mxu0 0.0
    %2583 = vmatpush1.msra.mxu0 0.0
    %2584 = vmatprep.subr.mxu0 0.0
    %2585 = vmatpush1.msra.mxu0 0.0
    %2586 = vmatprep.subr.mxu0 0.0
    %2587 = vmatpush1.msra.mxu0 0.0
    %2588 = vmatprep.subr.mxu0 0.0
    %2589 = vmatpush1.msra.mxu0 0.0
    %2590 = vmatprep.subr.mxu0 0.0
    %2591 = vmatpush1.msra.mxu0 0.0
    %2592 = vmatprep.subr.mxu0 0.0
    %2593 = vmatpush1.msra.mxu0 0.0
    %2594 = vmatprep.subr.mxu0 0.0
    %2595 = vmatpush1.msra.mxu0 0.0
    %2596 = vmatprep.subr.mxu0 0.0
    %2597 = vmatpush1.msra.mxu0 0.0
    %2598 = vmatprep.subr.mxu0 0.0
    %2599 = vmatpush1.msra.mxu0 0.0
    %2600 = vmatprep.subr.mxu0 0.0
    %2601 = vmatpush1.msra.mxu0 0.0
    %2602 = vmatprep.subr.mxu0 0.0
    %2603 = vmatpush1.msra.mxu0 0.0
    %2604 = vmatprep.subr.mxu0 0.0
    %2605 = vmatpush1.msra.mxu0 0.0
    %2606 = vmatprep.subr.mxu0 0.0
    %2607 = vmatpush1.msra.mxu0 0.0
    %2608 = vmatprep.subr.mxu0 0.0
    %2609 = vmatpush1.msra.mxu0 0.0
    %2610 = vmatprep.subr.mxu0 0.0
    %2611 = vmatpush1.msra.mxu0 0.0
    %2612 = vmatprep.subr.mxu0 0.0
    %2613 = vmatpush1.msra.mxu0 0.0
    %2614 = vmatprep.mubr.f32.mxu0 0.0
    %2615 = vmatmul.mubr.f32.gmra.mrb[0].mxu0 %v2545
    %v2616 = vpop.f32.mrb[0].mxu0
    %v2617 = vadd.f32 0.0, %v2616
    %v2618 = vpop.f32.mrb[0].mxu0
    %2619 = vmatprep.mubr.f32.mxu0 0.0
    %2620 = vmatmul.mubr.f32.gmra.mrb[0].mxu0 %v2548
    %v2621 = vpop.f32.mrb[0].mxu0
    %v2622 = vadd.f32 0.0, %v2621
    %v2623 = vpop.f32.mrb[0].mxu0
    %2624 = vdwg.mxu0
    %2625 = vrot.lane.b32.xlu0 %v306, 44
    %v2626 = vpop.permute.xlu0 %2625
    %2627 = vrot.lane.b32.xlu0 %v311, 44
    %v2628 = vpop.permute.xlu0 %2627
    %v2632 = vsel %vm493, %v2536, 0
    %v2635 = vsel %vm493, %v2537, 0
    %2637 = vmatprep.subr.mxu0 0.0
    %2638 = vmatpush1.msra.mxu0 %v2626
    %2639 = vmatprep.subr.mxu0 0.0
    %2640 = vmatpush1.msra.mxu0 %v2628
    %2641 = vmatprep.subr.mxu0 0.0
    %2642 = vmatpush1.msra.mxu0 0.0
    %2643 = vmatprep.subr.mxu0 0.0
    %2644 = vmatpush1.msra.mxu0 0.0
    %2645 = vmatprep.subr.mxu0 0.0
    %2646 = vmatpush1.msra.mxu0 0.0
    %2647 = vmatprep.subr.mxu0 0.0
    %2648 = vmatpush1.msra.mxu0 0.0
    %2649 = vmatprep.subr.mxu0 0.0
    %2650 = vmatpush1.msra.mxu0 0.0
    %2651 = vmatprep.subr.mxu0 0.0
    %2652 = vmatpush1.msra.mxu0 0.0
    %2653 = vmatprep.subr.mxu0 0.0
    %2654 = vmatpush1.msra.mxu0 0.0
    %2655 = vmatprep.subr.mxu0 0.0
    %2656 = vmatpush1.msra.mxu0 0.0
    %2657 = vmatprep.subr.mxu0 0.0
    %2658 = vmatpush1.msra.mxu0 0.0
    %2659 = vmatprep.subr.mxu0 0.0
    %2660 = vmatpush1.msra.mxu0 0.0
    %2661 = vmatprep.subr.mxu0 0.0
    %2662 = vmatpush1.msra.mxu0 0.0
    %2663 = vmatprep.subr.mxu0 0.0
    %2664 = vmatpush1.msra.mxu0 0.0
    %2665 = vmatprep.subr.mxu0 0.0
    %2666 = vmatpush1.msra.mxu0 0.0
    %2667 = vmatprep.subr.mxu0 0.0
    %2668 = vmatpush1.msra.mxu0 0.0
    %2669 = vmatprep.subr.mxu0 0.0
    %2670 = vmatpush1.msra.mxu0 0.0
    %2671 = vmatprep.subr.mxu0 0.0
    %2672 = vmatpush1.msra.mxu0 0.0
    %2673 = vmatprep.subr.mxu0 0.0
    %2674 = vmatpush1.msra.mxu0 0.0
    %2675 = vmatprep.subr.mxu0 0.0
    %2676 = vmatpush1.msra.mxu0 0.0
    %2677 = vmatprep.subr.mxu0 0.0
    %2678 = vmatpush1.msra.mxu0 0.0
    %2679 = vmatprep.subr.mxu0 0.0
    %2680 = vmatpush1.msra.mxu0 0.0
    %2681 = vmatprep.subr.mxu0 0.0
    %2682 = vmatpush1.msra.mxu0 0.0
    %2683 = vmatprep.subr.mxu0 0.0
    %2684 = vmatpush1.msra.mxu0 0.0
    %2685 = vmatprep.subr.mxu0 0.0
    %2686 = vmatpush1.msra.mxu0 0.0
    %2687 = vmatprep.subr.mxu0 0.0
    %2688 = vmatpush1.msra.mxu0 0.0
    %2689 = vmatprep.subr.mxu0 0.0
    %2690 = vmatpush1.msra.mxu0 0.0
    %2691 = vmatprep.subr.mxu0 0.0
    %2692 = vmatpush1.msra.mxu0 0.0
    %2693 = vmatprep.subr.mxu0 0.0
    %2694 = vmatpush1.msra.mxu0 0.0
    %2695 = vmatprep.subr.mxu0 0.0
    %2696 = vmatpush1.msra.mxu0 0.0
    %2697 = vmatprep.subr.mxu0 0.0
    %2698 = vmatpush1.msra.mxu0 0.0
    %2699 = vmatprep.subr.mxu0 0.0
    %2700 = vmatpush1.msra.mxu0 0.0
    %2701 = vmatprep.mubr.f32.mxu0 0.0
    %2702 = vmatmul.mubr.f32.gmra.mrb[0].mxu0 %v2632
    %v2703 = vpop.f32.mrb[0].mxu0
    %v2704 = vadd.f32 0.0, %v2703
    %v2705 = vpop.f32.mrb[0].mxu0
    %2706 = vmatprep.mubr.f32.mxu0 0.0
    %2707 = vmatmul.mubr.f32.gmra.mrb[0].mxu0 %v2635
    %v2708 = vpop.f32.mrb[0].mxu0
    %v2709 = vadd.f32 0.0, %v2708
    %v2710 = vpop.f32.mrb[0].mxu0
    %2711 = vdwg.mxu0
    %2712 = vrot.lane.b32.xlu0 %v296, 104
    %v2713 = vpop.permute.xlu0 %2712
    %2714 = vrot.lane.b32.xlu0 %v301, 104
    %v2715 = vpop.permute.xlu0 %2714
    %2716 = vrot.lane.b32.xlu0 %v296, 72
    %v2717 = vpop.permute.xlu0 %2716
    %2718 = vrot.lane.b32.xlu0 %v301, 72
    %v2719 = vpop.permute.xlu0 %2718
    %v2720 = vsel %vm320, %v2713, 0
    %v2722 = vsel %vm320, %v2715, 0
    %v2724 = vsel %vm320, %v2717, 0
    %v2726 = vsel %vm320, %v2719, 0
    %2728 = vmatprep.subr.mxu0 0.0
    %2729 = vmatpush1.xpose.msra.mxu0 %v2724
    %2730 = vmatprep.subr.mxu0 0.0
    %2731 = vmatpush1.xpose.msra.mxu0 %v2726
    %2732 = vmatprep.subr.mxu0 0.0
    %2733 = vmatpush1.xpose.msra.mxu0 0.0
    %2734 = vmatprep.subr.mxu0 0.0
    %2735 = vmatpush1.xpose.msra.mxu0 0.0
    %2736 = vmatprep.subr.mxu0 0.0
    %2737 = vmatpush1.xpose.msra.mxu0 0.0
    %2738 = vmatprep.subr.mxu0 0.0
    %2739 = vmatpush1.xpose.msra.mxu0 0.0
    %2740 = vmatprep.subr.mxu0 0.0
    %2741 = vmatpush1.xpose.msra.mxu0 0.0
    %2742 = vmatprep.subr.mxu0 0.0
    %2743 = vmatpush1.xpose.msra.mxu0 0.0
    %2744 = vmatprep.subr.mxu0 0.0
    %2745 = vmatpush1.xpose.msra.mxu0 0.0
    %2746 = vmatprep.subr.mxu0 0.0
    %2747 = vmatpush1.xpose.msra.mxu0 0.0
    %2748 = vmatprep.subr.mxu0 0.0
    %2749 = vmatpush1.xpose.msra.mxu0 0.0
    %2750 = vmatprep.subr.mxu0 0.0
    %2751 = vmatpush1.xpose.msra.mxu0 0.0
    %2752 = vmatprep.subr.mxu0 0.0
    %2753 = vmatpush1.xpose.msra.mxu0 0.0
    %2754 = vmatprep.subr.mxu0 0.0
    %2755 = vmatpush1.xpose.msra.mxu0 0.0
    %2756 = vmatprep.subr.mxu0 0.0
    %2757 = vmatpush1.xpose.msra.mxu0 0.0
    %2758 = vmatprep.subr.mxu0 0.0
    %2759 = vmatpush1.xpose.msra.mxu0 0.0
    %2760 = vmatprep.subr.mxu0 0.0
    %2761 = vmatpush1.xpose.msra.mxu0 0.0
    %2762 = vmatprep.subr.mxu0 0.0
    %2763 = vmatpush1.xpose.msra.mxu0 0.0
    %2764 = vmatprep.subr.mxu0 0.0
    %2765 = vmatpush1.xpose.msra.mxu0 0.0
    %2766 = vmatprep.subr.mxu0 0.0
    %2767 = vmatpush1.xpose.msra.mxu0 0.0
    %2768 = vmatprep.subr.mxu0 0.0
    %2769 = vmatpush1.xpose.msra.mxu0 0.0
    %2770 = vmatprep.subr.mxu0 0.0
    %2771 = vmatpush1.xpose.msra.mxu0 0.0
    %2772 = vmatprep.subr.mxu0 0.0
    %2773 = vmatpush1.xpose.msra.mxu0 0.0
    %2774 = vmatprep.subr.mxu0 0.0
    %2775 = vmatpush1.xpose.msra.mxu0 0.0
    %2776 = vmatprep.subr.mxu0 0.0
    %2777 = vmatpush1.xpose.msra.mxu0 0.0
    %2778 = vmatprep.subr.mxu0 0.0
    %2779 = vmatpush1.xpose.msra.mxu0 0.0
    %2780 = vmatprep.subr.mxu0 0.0
    %2781 = vmatpush1.xpose.msra.mxu0 0.0
    %2782 = vmatprep.subr.mxu0 0.0
    %2783 = vmatpush1.xpose.msra.mxu0 0.0
    %2784 = vmatprep.subr.mxu0 0.0
    %2785 = vmatpush1.xpose.msra.mxu0 0.0
    %2786 = vmatprep.subr.mxu0 0.0
    %2787 = vmatpush1.xpose.msra.mxu0 0.0
    %2788 = vmatprep.subr.mxu0 0.0
    %2789 = vmatpush1.xpose.msra.mxu0 0.0
    %2790 = vmatprep.subr.mxu0 0.0
    %2791 = vmatpush1.xpose.msra.mxu0 0.0
    %2792 = vmatprep.mubr.f32.mxu0 0.0
    %2793 = vmatmul.mubr.f32.gmra.mrb[0].mxu0 %v2720
    %v2794 = vpop.f32.mrb[0].mxu0
    %v2795 = vadd.f32 0.0, %v2794
    %v2796 = vpop.f32.mrb[0].mxu0
    %2797 = vmatprep.mubr.f32.mxu0 0.0
    %2798 = vmatmul.mubr.f32.gmra.mrb[0].mxu0 %v2722
    %v2799 = vpop.f32.mrb[0].mxu0
    %v2800 = vadd.f32 0.0, %v2799
    %v2801 = vpop.f32.mrb[0].mxu0
    %2802 = vdwg.mxu0
    %2803 = vrot.lane.b32.xlu0 %v306, 104
    %v2804 = vpop.permute.xlu0 %2803
    %2805 = vrot.lane.b32.xlu0 %v311, 104
    %v2806 = vpop.permute.xlu0 %2805
    %2807 = vrot.lane.b32.xlu0 %v306, 72
    %v2808 = vpop.permute.xlu0 %2807
    %2809 = vrot.lane.b32.xlu0 %v311, 72
    %v2810 = vpop.permute.xlu0 %2809
    %v2811 = vsel %vm320, %v2804, 0
    %v2813 = vsel %vm320, %v2806, 0
    %v2815 = vsel %vm320, %v2808, 0
    %v2817 = vsel %vm320, %v2810, 0
    %2819 = vmatprep.subr.mxu0 0.0
    %2820 = vmatpush1.xpose.msra.mxu0 %v2815
    %2821 = vmatprep.subr.mxu0 0.0
    %2822 = vmatpush1.xpose.msra.mxu0 %v2817
    %2823 = vmatprep.subr.mxu0 0.0
    %2824 = vmatpush1.xpose.msra.mxu0 0.0
    %2825 = vmatprep.subr.mxu0 0.0
    %2826 = vmatpush1.xpose.msra.mxu0 0.0
    %2827 = vmatprep.subr.mxu0 0.0
    %2828 = vmatpush1.xpose.msra.mxu0 0.0
    %2829 = vmatprep.subr.mxu0 0.0
    %2830 = vmatpush1.xpose.msra.mxu0 0.0
    %2831 = vmatprep.subr.mxu0 0.0
    %2832 = vmatpush1.xpose.msra.mxu0 0.0
    %2833 = vmatprep.subr.mxu0 0.0
    %2834 = vmatpush1.xpose.msra.mxu0 0.0
    %2835 = vmatprep.subr.mxu0 0.0
    %2836 = vmatpush1.xpose.msra.mxu0 0.0
    %2837 = vmatprep.subr.mxu0 0.0
    %2838 = vmatpush1.xpose.msra.mxu0 0.0
    %2839 = vmatprep.subr.mxu0 0.0
    %2840 = vmatpush1.xpose.msra.mxu0 0.0
    %2841 = vmatprep.subr.mxu0 0.0
    %2842 = vmatpush1.xpose.msra.mxu0 0.0
    %2843 = vmatprep.subr.mxu0 0.0
    %2844 = vmatpush1.xpose.msra.mxu0 0.0
    %2845 = vmatprep.subr.mxu0 0.0
    %2846 = vmatpush1.xpose.msra.mxu0 0.0
    %2847 = vmatprep.subr.mxu0 0.0
    %2848 = vmatpush1.xpose.msra.mxu0 0.0
    %2849 = vmatprep.subr.mxu0 0.0
    %2850 = vmatpush1.xpose.msra.mxu0 0.0
    %2851 = vmatprep.subr.mxu0 0.0
    %2852 = vmatpush1.xpose.msra.mxu0 0.0
    %2853 = vmatprep.subr.mxu0 0.0
    %2854 = vmatpush1.xpose.msra.mxu0 0.0
    %2855 = vmatprep.subr.mxu0 0.0
    %2856 = vmatpush1.xpose.msra.mxu0 0.0
    %2857 = vmatprep.subr.mxu0 0.0
    %2858 = vmatpush1.xpose.msra.mxu0 0.0
    %2859 = vmatprep.subr.mxu0 0.0
    %2860 = vmatpush1.xpose.msra.mxu0 0.0
    %2861 = vmatprep.subr.mxu0 0.0
    %2862 = vmatpush1.xpose.msra.mxu0 0.0
    %2863 = vmatprep.subr.mxu0 0.0
    %2864 = vmatpush1.xpose.msra.mxu0 0.0
    %2865 = vmatprep.subr.mxu0 0.0
    %2866 = vmatpush1.xpose.msra.mxu0 0.0
    %2867 = vmatprep.subr.mxu0 0.0
    %2868 = vmatpush1.xpose.msra.mxu0 0.0
    %2869 = vmatprep.subr.mxu0 0.0
    %2870 = vmatpush1.xpose.msra.mxu0 0.0
    %2871 = vmatprep.subr.mxu0 0.0
    %2872 = vmatpush1.xpose.msra.mxu0 0.0
    %2873 = vmatprep.subr.mxu0 0.0
    %2874 = vmatpush1.xpose.msra.mxu0 0.0
    %2875 = vmatprep.subr.mxu0 0.0
    %2876 = vmatpush1.xpose.msra.mxu0 0.0
    %2877 = vmatprep.subr.mxu0 0.0
    %2878 = vmatpush1.xpose.msra.mxu0 0.0
    %2879 = vmatprep.subr.mxu0 0.0
    %2880 = vmatpush1.xpose.msra.mxu0 0.0
    %2881 = vmatprep.subr.mxu0 0.0
    %2882 = vmatpush1.xpose.msra.mxu0 0.0
    %2883 = vmatprep.mubr.f32.mxu0 0.0
    %2884 = vmatmul.mubr.f32.gmra.mrb[0].mxu0 %v2811
    %v2885 = vpop.f32.mrb[0].mxu0
    %v2886 = vadd.f32 0.0, %v2885
    %v2887 = vpop.f32.mrb[0].mxu0
    %2888 = vmatprep.mubr.f32.mxu0 0.0
    %2889 = vmatmul.mubr.f32.gmra.mrb[0].mxu0 %v2813
    %v2890 = vpop.f32.mrb[0].mxu0
    %v2891 = vadd.f32 0.0, %v2890
    %v2892 = vpop.f32.mrb[0].mxu0
    %2893 = vdwg.mxu0
    %v2894 = vsel %vm493, %v2795, -inf
    %2895 = vmax.xlane.f32.xlu0 %v2894
    %v2896 = vpop.xlane.xlu0 %2895
    %v2897 = vsel %vm493, %v2800, -inf
    %2898 = vmax.xlane.f32.xlu0 %v2897
    %v2899 = vpop.xlane.xlu0 %2898
    %v2900 = vsel %vm493, %v2886, -inf
    %2901 = vmax.xlane.f32.xlu0 %v2900
    %v2902 = vpop.xlane.xlu0 %2901
    %v2903 = vsel %vm493, %v2891, -inf
    %2904 = vmax.xlane.f32.xlu0 %v2903
    %v2905 = vpop.xlane.xlu0 %2904
    %v2906 = vsub.f32 %v2795, %v2896
    %v2907 = vsub.f32 %v2800, %v2899
    %v2908 = vsub.f32 %v2886, %v2902
    %v2909 = vsub.f32 %v2891, %v2905
    %v2910 = vmul.f32 %v2906, 1.442695
    %v2911 = vpow.pop %v2910
    %v2912 = vmul.f32 %v2907, 1.442695
    %v2913 = vpow.pop %v2912
    %v2914 = vmul.f32 %v2908, 1.442695
    %v2915 = vpow.pop %v2914
    %v2916 = vmul.f32 %v2909, 1.442695
    %v2917 = vpow.pop %v2916
    %v2918 = vsel %vm493, %v2911, 0.0
    %2919 = vadd.xlane.f32.xlu0 %v2918
    %v2920 = vpop.xlane.xlu0 %2919
    %v2921 = vsel %vm493, %v2913, 0.0
    %2922 = vadd.xlane.f32.xlu0 %v2921
    %v2923 = vpop.xlane.xlu0 %2922
    %v2924 = vsel %vm493, %v2915, 0.0
    %2925 = vadd.xlane.f32.xlu0 %v2924
    %v2926 = vpop.xlane.xlu0 %2925
    %v2927 = vsel %vm493, %v2917, 0.0
    %2928 = vadd.xlane.f32.xlu0 %v2927
    %v2929 = vpop.xlane.xlu0 %2928
    %v2930 = vrcp.pop %v2920
    %v2931 = vrcp.pop %v2923
    %v2932 = vrcp.pop %v2926
    %v2933 = vrcp.pop %v2929
    %v2934 = vmul.f32 %v2911, %v2930
    %v2935 = vmul.f32 %v2913, %v2931
    %v2936 = vmul.f32 %v2915, %v2932
    %v2937 = vmul.f32 %v2917, %v2933
    %2938 = vrot.lane.b32.xlu0 %v296, 40
    %v2939 = vpop.permute.xlu0 %2938
    %2940 = vrot.lane.b32.xlu0 %v301, 40
    %v2941 = vpop.permute.xlu0 %2940
    %v2945 = vsel %vm493, %v2934, 0
    %v2948 = vsel %vm493, %v2935, 0
    %2950 = vmatprep.subr.mxu0 0.0
    %2951 = vmatpush1.msra.mxu0 %v2939
    %2952 = vmatprep.subr.mxu0 0.0
    %2953 = vmatpush1.msra.mxu0 %v2941
    %2954 = vmatprep.subr.mxu0 0.0
    %2955 = vmatpush1.msra.mxu0 0.0
    %2956 = vmatprep.subr.mxu0 0.0
    %2957 = vmatpush1.msra.mxu0 0.0
    %2958 = vmatprep.subr.mxu0 0.0
    %2959 = vmatpush1.msra.mxu0 0.0
    %2960 = vmatprep.subr.mxu0 0.0
    %2961 = vmatpush1.msra.mxu0 0.0
    %2962 = vmatprep.subr.mxu0 0.0
    %2963 = vmatpush1.msra.mxu0 0.0
    %2964 = vmatprep.subr.mxu0 0.0
    %2965 = vmatpush1.msra.mxu0 0.0
    %2966 = vmatprep.subr.mxu0 0.0
    %2967 = vmatpush1.msra.mxu0 0.0
    %2968 = vmatprep.subr.mxu0 0.0
    %2969 = vmatpush1.msra.mxu0 0.0
    %2970 = vmatprep.subr.mxu0 0.0
    %2971 = vmatpush1.msra.mxu0 0.0
    %2972 = vmatprep.subr.mxu0 0.0
    %2973 = vmatpush1.msra.mxu0 0.0
    %2974 = vmatprep.subr.mxu0 0.0
    %2975 = vmatpush1.msra.mxu0 0.0
    %2976 = vmatprep.subr.mxu0 0.0
    %2977 = vmatpush1.msra.mxu0 0.0
    %2978 = vmatprep.subr.mxu0 0.0
    %2979 = vmatpush1.msra.mxu0 0.0
    %2980 = vmatprep.subr.mxu0 0.0
    %2981 = vmatpush1.msra.mxu0 0.0
    %2982 = vmatprep.subr.mxu0 0.0
    %2983 = vmatpush1.msra.mxu0 0.0
    %2984 = vmatprep.subr.mxu0 0.0
    %2985 = vmatpush1.msra.mxu0 0.0
    %2986 = vmatprep.subr.mxu0 0.0
    %2987 = vmatpush1.msra.mxu0 0.0
    %2988 = vmatprep.subr.mxu0 0.0
    %2989 = vmatpush1.msra.mxu0 0.0
    %2990 = vmatprep.subr.mxu0 0.0
    %2991 = vmatpush1.msra.mxu0 0.0
    %2992 = vmatprep.subr.mxu0 0.0
    %2993 = vmatpush1.msra.mxu0 0.0
    %2994 = vmatprep.subr.mxu0 0.0
    %2995 = vmatpush1.msra.mxu0 0.0
    %2996 = vmatprep.subr.mxu0 0.0
    %2997 = vmatpush1.msra.mxu0 0.0
    %2998 = vmatprep.subr.mxu0 0.0
    %2999 = vmatpush1.msra.mxu0 0.0
    %3000 = vmatprep.subr.mxu0 0.0
    %3001 = vmatpush1.msra.mxu0 0.0
    %3002 = vmatprep.subr.mxu0 0.0
    %3003 = vmatpush1.msra.mxu0 0.0
    %3004 = vmatprep.subr.mxu0 0.0
    %3005 = vmatpush1.msra.mxu0 0.0
    %3006 = vmatprep.subr.mxu0 0.0
    %3007 = vmatpush1.msra.mxu0 0.0
    %3008 = vmatprep.subr.mxu0 0.0
    %3009 = vmatpush1.msra.mxu0 0.0
    %3010 = vmatprep.subr.mxu0 0.0
    %3011 = vmatpush1.msra.mxu0 0.0
    %3012 = vmatprep.subr.mxu0 0.0
    %3013 = vmatpush1.msra.mxu0 0.0
    %3014 = vmatprep.mubr.f32.mxu0 0.0
    %3015 = vmatmul.mubr.f32.gmra.mrb[0].mxu0 %v2945
    %v3016 = vpop.f32.mrb[0].mxu0
    %v3017 = vadd.f32 0.0, %v3016
    %v3018 = vpop.f32.mrb[0].mxu0
    %3019 = vmatprep.mubr.f32.mxu0 0.0
    %3020 = vmatmul.mubr.f32.gmra.mrb[0].mxu0 %v2948
    %v3021 = vpop.f32.mrb[0].mxu0
    %v3022 = vadd.f32 0.0, %v3021
    %v3023 = vpop.f32.mrb[0].mxu0
    %3024 = vdwg.mxu0
    %3025 = vrot.lane.b32.xlu0 %v306, 40
    %v3026 = vpop.permute.xlu0 %3025
    %3027 = vrot.lane.b32.xlu0 %v311, 40
    %v3028 = vpop.permute.xlu0 %3027
    %v3032 = vsel %vm493, %v2936, 0
    %v3035 = vsel %vm493, %v2937, 0
    %3037 = vmatprep.subr.mxu0 0.0
    %3038 = vmatpush1.msra.mxu0 %v3026
    %3039 = vmatprep.subr.mxu0 0.0
    %3040 = vmatpush1.msra.mxu0 %v3028
    %3041 = vmatprep.subr.mxu0 0.0
    %3042 = vmatpush1.msra.mxu0 0.0
    %3043 = vmatprep.subr.mxu0 0.0
    %3044 = vmatpush1.msra.mxu0 0.0
    %3045 = vmatprep.subr.mxu0 0.0
    %3046 = vmatpush1.msra.mxu0 0.0
    %3047 = vmatprep.subr.mxu0 0.0
    %3048 = vmatpush1.msra.mxu0 0.0
    %3049 = vmatprep.subr.mxu0 0.0
    %3050 = vmatpush1.msra.mxu0 0.0
    %3051 = vmatprep.subr.mxu0 0.0
    %3052 = vmatpush1.msra.mxu0 0.0
    %3053 = vmatprep.subr.mxu0 0.0
    %3054 = vmatpush1.msra.mxu0 0.0
    %3055 = vmatprep.subr.mxu0 0.0
    %3056 = vmatpush1.msra.mxu0 0.0
    %3057 = vmatprep.subr.mxu0 0.0
    %3058 = vmatpush1.msra.mxu0 0.0
    %3059 = vmatprep.subr.mxu0 0.0
    %3060 = vmatpush1.msra.mxu0 0.0
    %3061 = vmatprep.subr.mxu0 0.0
    %3062 = vmatpush1.msra.mxu0 0.0
    %3063 = vmatprep.subr.mxu0 0.0
    %3064 = vmatpush1.msra.mxu0 0.0
    %3065 = vmatprep.subr.mxu0 0.0
    %3066 = vmatpush1.msra.mxu0 0.0
    %3067 = vmatprep.subr.mxu0 0.0
    %3068 = vmatpush1.msra.mxu0 0.0
    %3069 = vmatprep.subr.mxu0 0.0
    %3070 = vmatpush1.msra.mxu0 0.0
    %3071 = vmatprep.subr.mxu0 0.0
    %3072 = vmatpush1.msra.mxu0 0.0
    %3073 = vmatprep.subr.mxu0 0.0
    %3074 = vmatpush1.msra.mxu0 0.0
    %3075 = vmatprep.subr.mxu0 0.0
    %3076 = vmatpush1.msra.mxu0 0.0
    %3077 = vmatprep.subr.mxu0 0.0
    %3078 = vmatpush1.msra.mxu0 0.0
    %3079 = vmatprep.subr.mxu0 0.0
    %3080 = vmatpush1.msra.mxu0 0.0
    %3081 = vmatprep.subr.mxu0 0.0
    %3082 = vmatpush1.msra.mxu0 0.0
    %3083 = vmatprep.subr.mxu0 0.0
    %3084 = vmatpush1.msra.mxu0 0.0
    %3085 = vmatprep.subr.mxu0 0.0
    %3086 = vmatpush1.msra.mxu0 0.0
    %3087 = vmatprep.subr.mxu0 0.0
    %3088 = vmatpush1.msra.mxu0 0.0
    %3089 = vmatprep.subr.mxu0 0.0
    %3090 = vmatpush1.msra.mxu0 0.0
    %3091 = vmatprep.subr.mxu0 0.0
    %3092 = vmatpush1.msra.mxu0 0.0
    %3093 = vmatprep.subr.mxu0 0.0
    %3094 = vmatpush1.msra.mxu0 0.0
    %3095 = vmatprep.subr.mxu0 0.0
    %3096 = vmatpush1.msra.mxu0 0.0
    %3097 = vmatprep.subr.mxu0 0.0
    %3098 = vmatpush1.msra.mxu0 0.0
    %3099 = vmatprep.subr.mxu0 0.0
    %3100 = vmatpush1.msra.mxu0 0.0
    %3101 = vmatprep.mubr.f32.mxu0 0.0
    %3102 = vmatmul.mubr.f32.gmra.mrb[0].mxu0 %v3032
    %v3103 = vpop.f32.mrb[0].mxu0
    %v3104 = vadd.f32 0.0, %v3103
    %v3105 = vpop.f32.mrb[0].mxu0
    %3106 = vmatprep.mubr.f32.mxu0 0.0
    %3107 = vmatmul.mubr.f32.gmra.mrb[0].mxu0 %v3035
    %v3108 = vpop.f32.mrb[0].mxu0
    %v3109 = vadd.f32 0.0, %v3108
    %v3110 = vpop.f32.mrb[0].mxu0
    %3111 = vdwg.mxu0
    %3112 = vrot.lane.b32.xlu0 %v296, 100
    %v3113 = vpop.permute.xlu0 %3112
    %3114 = vrot.lane.b32.xlu0 %v301, 100
    %v3115 = vpop.permute.xlu0 %3114
    %3116 = vrot.lane.b32.xlu0 %v296, 68
    %v3117 = vpop.permute.xlu0 %3116
    %3118 = vrot.lane.b32.xlu0 %v301, 68
    %v3119 = vpop.permute.xlu0 %3118
    %v3120 = vsel %vm320, %v3113, 0
    %v3122 = vsel %vm320, %v3115, 0
    %v3124 = vsel %vm320, %v3117, 0
    %v3126 = vsel %vm320, %v3119, 0
    %3128 = vmatprep.subr.mxu0 0.0
    %3129 = vmatpush1.xpose.msra.mxu0 %v3124
    %3130 = vmatprep.subr.mxu0 0.0
    %3131 = vmatpush1.xpose.msra.mxu0 %v3126
    %3132 = vmatprep.subr.mxu0 0.0
    %3133 = vmatpush1.xpose.msra.mxu0 0.0
    %3134 = vmatprep.subr.mxu0 0.0
    %3135 = vmatpush1.xpose.msra.mxu0 0.0
    %3136 = vmatprep.subr.mxu0 0.0
    %3137 = vmatpush1.xpose.msra.mxu0 0.0
    %3138 = vmatprep.subr.mxu0 0.0
    %3139 = vmatpush1.xpose.msra.mxu0 0.0
    %3140 = vmatprep.subr.mxu0 0.0
    %3141 = vmatpush1.xpose.msra.mxu0 0.0
    %3142 = vmatprep.subr.mxu0 0.0
    %3143 = vmatpush1.xpose.msra.mxu0 0.0
    %3144 = vmatprep.subr.mxu0 0.0
    %3145 = vmatpush1.xpose.msra.mxu0 0.0
    %3146 = vmatprep.subr.mxu0 0.0
    %3147 = vmatpush1.xpose.msra.mxu0 0.0
    %3148 = vmatprep.subr.mxu0 0.0
    %3149 = vmatpush1.xpose.msra.mxu0 0.0
    %3150 = vmatprep.subr.mxu0 0.0
    %3151 = vmatpush1.xpose.msra.mxu0 0.0
    %3152 = vmatprep.subr.mxu0 0.0
    %3153 = vmatpush1.xpose.msra.mxu0 0.0
    %3154 = vmatprep.subr.mxu0 0.0
    %3155 = vmatpush1.xpose.msra.mxu0 0.0
    %3156 = vmatprep.subr.mxu0 0.0
    %3157 = vmatpush1.xpose.msra.mxu0 0.0
    %3158 = vmatprep.subr.mxu0 0.0
    %3159 = vmatpush1.xpose.msra.mxu0 0.0
    %3160 = vmatprep.subr.mxu0 0.0
    %3161 = vmatpush1.xpose.msra.mxu0 0.0
    %3162 = vmatprep.subr.mxu0 0.0
    %3163 = vmatpush1.xpose.msra.mxu0 0.0
    %3164 = vmatprep.subr.mxu0 0.0
    %3165 = vmatpush1.xpose.msra.mxu0 0.0
    %3166 = vmatprep.subr.mxu0 0.0
    %3167 = vmatpush1.xpose.msra.mxu0 0.0
    %3168 = vmatprep.subr.mxu0 0.0
    %3169 = vmatpush1.xpose.msra.mxu0 0.0
    %3170 = vmatprep.subr.mxu0 0.0
    %3171 = vmatpush1.xpose.msra.mxu0 0.0
    %3172 = vmatprep.subr.mxu0 0.0
    %3173 = vmatpush1.xpose.msra.mxu0 0.0
    %3174 = vmatprep.subr.mxu0 0.0
    %3175 = vmatpush1.xpose.msra.mxu0 0.0
    %3176 = vmatprep.subr.mxu0 0.0
    %3177 = vmatpush1.xpose.msra.mxu0 0.0
    %3178 = vmatprep.subr.mxu0 0.0
    %3179 = vmatpush1.xpose.msra.mxu0 0.0
    %3180 = vmatprep.subr.mxu0 0.0
    %3181 = vmatpush1.xpose.msra.mxu0 0.0
    %3182 = vmatprep.subr.mxu0 0.0
    %3183 = vmatpush1.xpose.msra.mxu0 0.0
    %3184 = vmatprep.subr.mxu0 0.0
    %3185 = vmatpush1.xpose.msra.mxu0 0.0
    %3186 = vmatprep.subr.mxu0 0.0
    %3187 = vmatpush1.xpose.msra.mxu0 0.0
    %3188 = vmatprep.subr.mxu0 0.0
    %3189 = vmatpush1.xpose.msra.mxu0 0.0
    %3190 = vmatprep.subr.mxu0 0.0
    %3191 = vmatpush1.xpose.msra.mxu0 0.0
    %3192 = vmatprep.mubr.f32.mxu0 0.0
    %3193 = vmatmul.mubr.f32.gmra.mrb[0].mxu0 %v3120
    %v3194 = vpop.f32.mrb[0].mxu0
    %v3195 = vadd.f32 0.0, %v3194
    %v3196 = vpop.f32.mrb[0].mxu0
    %3197 = vmatprep.mubr.f32.mxu0 0.0
    %3198 = vmatmul.mubr.f32.gmra.mrb[0].mxu0 %v3122
    %v3199 = vpop.f32.mrb[0].mxu0
    %v3200 = vadd.f32 0.0, %v3199
    %v3201 = vpop.f32.mrb[0].mxu0
    %3202 = vdwg.mxu0
    %3203 = vrot.lane.b32.xlu0 %v306, 100
    %v3204 = vpop.permute.xlu0 %3203
    %3205 = vrot.lane.b32.xlu0 %v311, 100
    %v3206 = vpop.permute.xlu0 %3205
    %3207 = vrot.lane.b32.xlu0 %v306, 68
    %v3208 = vpop.permute.xlu0 %3207
    %3209 = vrot.lane.b32.xlu0 %v311, 68
    %v3210 = vpop.permute.xlu0 %3209
    %v3211 = vsel %vm320, %v3204, 0
    %v3213 = vsel %vm320, %v3206, 0
    %v3215 = vsel %vm320, %v3208, 0
    %v3217 = vsel %vm320, %v3210, 0
    %3219 = vmatprep.subr.mxu0 0.0
    %3220 = vmatpush1.xpose.msra.mxu0 %v3215
    %3221 = vmatprep.subr.mxu0 0.0
    %3222 = vmatpush1.xpose.msra.mxu0 %v3217
    %3223 = vmatprep.subr.mxu0 0.0
    %3224 = vmatpush1.xpose.msra.mxu0 0.0
    %3225 = vmatprep.subr.mxu0 0.0
    %3226 = vmatpush1.xpose.msra.mxu0 0.0
    %3227 = vmatprep.subr.mxu0 0.0
    %3228 = vmatpush1.xpose.msra.mxu0 0.0
    %3229 = vmatprep.subr.mxu0 0.0
    %3230 = vmatpush1.xpose.msra.mxu0 0.0
    %3231 = vmatprep.subr.mxu0 0.0
    %3232 = vmatpush1.xpose.msra.mxu0 0.0
    %3233 = vmatprep.subr.mxu0 0.0
    %3234 = vmatpush1.xpose.msra.mxu0 0.0
    %3235 = vmatprep.subr.mxu0 0.0
    %3236 = vmatpush1.xpose.msra.mxu0 0.0
    %3237 = vmatprep.subr.mxu0 0.0
    %3238 = vmatpush1.xpose.msra.mxu0 0.0
    %3239 = vmatprep.subr.mxu0 0.0
    %3240 = vmatpush1.xpose.msra.mxu0 0.0
    %3241 = vmatprep.subr.mxu0 0.0
    %3242 = vmatpush1.xpose.msra.mxu0 0.0
    %3243 = vmatprep.subr.mxu0 0.0
    %3244 = vmatpush1.xpose.msra.mxu0 0.0
    %3245 = vmatprep.subr.mxu0 0.0
    %3246 = vmatpush1.xpose.msra.mxu0 0.0
    %3247 = vmatprep.subr.mxu0 0.0
    %3248 = vmatpush1.xpose.msra.mxu0 0.0
    %3249 = vmatprep.subr.mxu0 0.0
    %3250 = vmatpush1.xpose.msra.mxu0 0.0
    %3251 = vmatprep.subr.mxu0 0.0
    %3252 = vmatpush1.xpose.msra.mxu0 0.0
    %3253 = vmatprep.subr.mxu0 0.0
    %3254 = vmatpush1.xpose.msra.mxu0 0.0
    %3255 = vmatprep.subr.mxu0 0.0
    %3256 = vmatpush1.xpose.msra.mxu0 0.0
    %3257 = vmatprep.subr.mxu0 0.0
    %3258 = vmatpush1.xpose.msra.mxu0 0.0
    %3259 = vmatprep.subr.mxu0 0.0
    %3260 = vmatpush1.xpose.msra.mxu0 0.0
    %3261 = vmatprep.subr.mxu0 0.0
    %3262 = vmatpush1.xpose.msra.mxu0 0.0
    %3263 = vmatprep.subr.mxu0 0.0
    %3264 = vmatpush1.xpose.msra.mxu0 0.0
    %3265 = vmatprep.subr.mxu0 0.0
    %3266 = vmatpush1.xpose.msra.mxu0 0.0
    %3267 = vmatprep.subr.mxu0 0.0
    %3268 = vmatpush1.xpose.msra.mxu0 0.0
    %3269 = vmatprep.subr.mxu0 0.0
    %3270 = vmatpush1.xpose.msra.mxu0 0.0
    %3271 = vmatprep.subr.mxu0 0.0
    %3272 = vmatpush1.xpose.msra.mxu0 0.0
    %3273 = vmatprep.subr.mxu0 0.0
    %3274 = vmatpush1.xpose.msra.mxu0 0.0
    %3275 = vmatprep.subr.mxu0 0.0
    %3276 = vmatpush1.xpose.msra.mxu0 0.0
    %3277 = vmatprep.subr.mxu0 0.0
    %3278 = vmatpush1.xpose.msra.mxu0 0.0
    %3279 = vmatprep.subr.mxu0 0.0
    %3280 = vmatpush1.xpose.msra.mxu0 0.0
    %3281 = vmatprep.subr.mxu0 0.0
    %3282 = vmatpush1.xpose.msra.mxu0 0.0
    %3283 = vmatprep.mubr.f32.mxu0 0.0
    %3284 = vmatmul.mubr.f32.gmra.mrb[0].mxu0 %v3211
    %v3285 = vpop.f32.mrb[0].mxu0
    %v3286 = vadd.f32 0.0, %v3285
    %v3287 = vpop.f32.mrb[0].mxu0
    %3288 = vmatprep.mubr.f32.mxu0 0.0
    %3289 = vmatmul.mubr.f32.gmra.mrb[0].mxu0 %v3213
    %v3290 = vpop.f32.mrb[0].mxu0
    %v3291 = vadd.f32 0.0, %v3290
    %v3292 = vpop.f32.mrb[0].mxu0
    %3293 = vdwg.mxu0
    %v3294 = vsel %vm493, %v3195, -inf
    %3295 = vmax.xlane.f32.xlu0 %v3294
    %v3296 = vpop.xlane.xlu0 %3295
    %v3297 = vsel %vm493, %v3200, -inf
    %3298 = vmax.xlane.f32.xlu0 %v3297
    %v3299 = vpop.xlane.xlu0 %3298
    %v3300 = vsel %vm493, %v3286, -inf
    %3301 = vmax.xlane.f32.xlu0 %v3300
    %v3302 = vpop.xlane.xlu0 %3301
    %v3303 = vsel %vm493, %v3291, -inf
    %3304 = vmax.xlane.f32.xlu0 %v3303
    %v3305 = vpop.xlane.xlu0 %3304
    %v3306 = vsub.f32 %v3195, %v3296
    %v3307 = vsub.f32 %v3200, %v3299
    %v3308 = vsub.f32 %v3286, %v3302
    %v3309 = vsub.f32 %v3291, %v3305
    %v3310 = vmul.f32 %v3306, 1.442695
    %v3311 = vpow.pop %v3310
    %v3312 = vmul.f32 %v3307, 1.442695
    %v3313 = vpow.pop %v3312
    %v3314 = vmul.f32 %v3308, 1.442695
    %v3315 = vpow.pop %v3314
    %v3316 = vmul.f32 %v3309, 1.442695
    %v3317 = vpow.pop %v3316
    %v3318 = vsel %vm493, %v3311, 0.0
    %3319 = vadd.xlane.f32.xlu0 %v3318
    %v3320 = vpop.xlane.xlu0 %3319
    %v3321 = vsel %vm493, %v3313, 0.0
    %3322 = vadd.xlane.f32.xlu0 %v3321
    %v3323 = vpop.xlane.xlu0 %3322
    %v3324 = vsel %vm493, %v3315, 0.0
    %3325 = vadd.xlane.f32.xlu0 %v3324
    %v3326 = vpop.xlane.xlu0 %3325
    %v3327 = vsel %vm493, %v3317, 0.0
    %3328 = vadd.xlane.f32.xlu0 %v3327
    %v3329 = vpop.xlane.xlu0 %3328
    %v3330 = vrcp.pop %v3320
    %v3331 = vrcp.pop %v3323
    %v3332 = vrcp.pop %v3326
    %v3333 = vrcp.pop %v3329
    %v3334 = vmul.f32 %v3311, %v3330
    %v3335 = vmul.f32 %v3313, %v3331
    %v3336 = vmul.f32 %v3315, %v3332
    %v3337 = vmul.f32 %v3317, %v3333
    %3338 = vrot.lane.b32.xlu0 %v296, 36
    %v3339 = vpop.permute.xlu0 %3338
    %3340 = vrot.lane.b32.xlu0 %v301, 36
    %v3341 = vpop.permute.xlu0 %3340
    %v3345 = vsel %vm493, %v3334, 0
    %v3348 = vsel %vm493, %v3335, 0
    %3350 = vmatprep.subr.mxu0 0.0
    %3351 = vmatpush1.msra.mxu0 %v3339
    %3352 = vmatprep.subr.mxu0 0.0
    %3353 = vmatpush1.msra.mxu0 %v3341
    %3354 = vmatprep.subr.mxu0 0.0
    %3355 = vmatpush1.msra.mxu0 0.0
    %3356 = vmatprep.subr.mxu0 0.0
    %3357 = vmatpush1.msra.mxu0 0.0
    %3358 = vmatprep.subr.mxu0 0.0
    %3359 = vmatpush1.msra.mxu0 0.0
    %3360 = vmatprep.subr.mxu0 0.0
    %3361 = vmatpush1.msra.mxu0 0.0
    %3362 = vmatprep.subr.mxu0 0.0
    %3363 = vmatpush1.msra.mxu0 0.0
    %3364 = vmatprep.subr.mxu0 0.0
    %3365 = vmatpush1.msra.mxu0 0.0
    %3366 = vmatprep.subr.mxu0 0.0
    %3367 = vmatpush1.msra.mxu0 0.0
    %3368 = vmatprep.subr.mxu0 0.0
    %3369 = vmatpush1.msra.mxu0 0.0
    %3370 = vmatprep.subr.mxu0 0.0
    %3371 = vmatpush1.msra.mxu0 0.0
    %3372 = vmatprep.subr.mxu0 0.0
    %3373 = vmatpush1.msra.mxu0 0.0
    %3374 = vmatprep.subr.mxu0 0.0
    %3375 = vmatpush1.msra.mxu0 0.0
    %3376 = vmatprep.subr.mxu0 0.0
    %3377 = vmatpush1.msra.mxu0 0.0
    %3378 = vmatprep.subr.mxu0 0.0
    %3379 = vmatpush1.msra.mxu0 0.0
    %3380 = vmatprep.subr.mxu0 0.0
    %3381 = vmatpush1.msra.mxu0 0.0
    %3382 = vmatprep.subr.mxu0 0.0
    %3383 = vmatpush1.msra.mxu0 0.0
    %3384 = vmatprep.subr.mxu0 0.0
    %3385 = vmatpush1.msra.mxu0 0.0
    %3386 = vmatprep.subr.mxu0 0.0
    %3387 = vmatpush1.msra.mxu0 0.0
    %3388 = vmatprep.subr.mxu0 0.0
    %3389 = vmatpush1.msra.mxu0 0.0
    %3390 = vmatprep.subr.mxu0 0.0
    %3391 = vmatpush1.msra.mxu0 0.0
    %3392 = vmatprep.subr.mxu0 0.0
    %3393 = vmatpush1.msra.mxu0 0.0
    %3394 = vmatprep.subr.mxu0 0.0
    %3395 = vmatpush1.msra.mxu0 0.0
    %3396 = vmatprep.subr.mxu0 0.0
    %3397 = vmatpush1.msra.mxu0 0.0
    %3398 = vmatprep.subr.mxu0 0.0
    %3399 = vmatpush1.msra.mxu0 0.0
    %3400 = vmatprep.subr.mxu0 0.0
    %3401 = vmatpush1.msra.mxu0 0.0
    %3402 = vmatprep.subr.mxu0 0.0
    %3403 = vmatpush1.msra.mxu0 0.0
    %3404 = vmatprep.subr.mxu0 0.0
    %3405 = vmatpush1.msra.mxu0 0.0
    %3406 = vmatprep.subr.mxu0 0.0
    %3407 = vmatpush1.msra.mxu0 0.0
    %3408 = vmatprep.subr.mxu0 0.0
    %3409 = vmatpush1.msra.mxu0 0.0
    %3410 = vmatprep.subr.mxu0 0.0
    %3411 = vmatpush1.msra.mxu0 0.0
    %3412 = vmatprep.subr.mxu0 0.0
    %3413 = vmatpush1.msra.mxu0 0.0
    %3414 = vmatprep.mubr.f32.mxu0 0.0
    %3415 = vmatmul.mubr.f32.gmra.mrb[0].mxu0 %v3345
    %v3416 = vpop.f32.mrb[0].mxu0
    %v3417 = vadd.f32 0.0, %v3416
    %v3418 = vpop.f32.mrb[0].mxu0
    %3419 = vmatprep.mubr.f32.mxu0 0.0
    %3420 = vmatmul.mubr.f32.gmra.mrb[0].mxu0 %v3348
    %v3421 = vpop.f32.mrb[0].mxu0
    %v3422 = vadd.f32 0.0, %v3421
    %v3423 = vpop.f32.mrb[0].mxu0
    %3424 = vdwg.mxu0
    %3425 = vrot.lane.b32.xlu0 %v306, 36
    %v3426 = vpop.permute.xlu0 %3425
    %3427 = vrot.lane.b32.xlu0 %v311, 36
    %v3428 = vpop.permute.xlu0 %3427
    %v3432 = vsel %vm493, %v3336, 0
    %v3435 = vsel %vm493, %v3337, 0
    %3437 = vmatprep.subr.mxu0 0.0
    %3438 = vmatpush1.msra.mxu0 %v3426
    %3439 = vmatprep.subr.mxu0 0.0
    %3440 = vmatpush1.msra.mxu0 %v3428
    %3441 = vmatprep.subr.mxu0 0.0
    %3442 = vmatpush1.msra.mxu0 0.0
    %3443 = vmatprep.subr.mxu0 0.0
    %3444 = vmatpush1.msra.mxu0 0.0
    %3445 = vmatprep.subr.mxu0 0.0
    %3446 = vmatpush1.msra.mxu0 0.0
    %3447 = vmatprep.subr.mxu0 0.0
    %3448 = vmatpush1.msra.mxu0 0.0
    %3449 = vmatprep.subr.mxu0 0.0
    %3450 = vmatpush1.msra.mxu0 0.0
    %3451 = vmatprep.subr.mxu0 0.0
    %3452 = vmatpush1.msra.mxu0 0.0
    %3453 = vmatprep.subr.mxu0 0.0
    %3454 = vmatpush1.msra.mxu0 0.0
    %3455 = vmatprep.subr.mxu0 0.0
    %3456 = vmatpush1.msra.mxu0 0.0
    %3457 = vmatprep.subr.mxu0 0.0
    %3458 = vmatpush1.msra.mxu0 0.0
    %3459 = vmatprep.subr.mxu0 0.0
    %3460 = vmatpush1.msra.mxu0 0.0
    %3461 = vmatprep.subr.mxu0 0.0
    %3462 = vmatpush1.msra.mxu0 0.0
    %3463 = vmatprep.subr.mxu0 0.0
    %3464 = vmatpush1.msra.mxu0 0.0
    %3465 = vmatprep.subr.mxu0 0.0
    %3466 = vmatpush1.msra.mxu0 0.0
    %3467 = vmatprep.subr.mxu0 0.0
    %3468 = vmatpush1.msra.mxu0 0.0
    %3469 = vmatprep.subr.mxu0 0.0
    %3470 = vmatpush1.msra.mxu0 0.0
    %3471 = vmatprep.subr.mxu0 0.0
    %3472 = vmatpush1.msra.mxu0 0.0
    %3473 = vmatprep.subr.mxu0 0.0
    %3474 = vmatpush1.msra.mxu0 0.0
    %3475 = vmatprep.subr.mxu0 0.0
    %3476 = vmatpush1.msra.mxu0 0.0
    %3477 = vmatprep.subr.mxu0 0.0
    %3478 = vmatpush1.msra.mxu0 0.0
    %3479 = vmatprep.subr.mxu0 0.0
    %3480 = vmatpush1.msra.mxu0 0.0
    %3481 = vmatprep.subr.mxu0 0.0
    %3482 = vmatpush1.msra.mxu0 0.0
    %3483 = vmatprep.subr.mxu0 0.0
    %3484 = vmatpush1.msra.mxu0 0.0
    %3485 = vmatprep.subr.mxu0 0.0
    %3486 = vmatpush1.msra.mxu0 0.0
    %3487 = vmatprep.subr.mxu0 0.0
    %3488 = vmatpush1.msra.mxu0 0.0
    %3489 = vmatprep.subr.mxu0 0.0
    %3490 = vmatpush1.msra.mxu0 0.0
    %3491 = vmatprep.subr.mxu0 0.0
    %3492 = vmatpush1.msra.mxu0 0.0
    %3493 = vmatprep.subr.mxu0 0.0
    %3494 = vmatpush1.msra.mxu0 0.0
    %3495 = vmatprep.subr.mxu0 0.0
    %3496 = vmatpush1.msra.mxu0 0.0
    %3497 = vmatprep.subr.mxu0 0.0
    %3498 = vmatpush1.msra.mxu0 0.0
    %3499 = vmatprep.subr.mxu0 0.0
    %3500 = vmatpush1.msra.mxu0 0.0
    %3501 = vmatprep.mubr.f32.mxu0 0.0
    %3502 = vmatmul.mubr.f32.gmra.mrb[0].mxu0 %v3432
    %v3503 = vpop.f32.mrb[0].mxu0
    %v3504 = vadd.f32 0.0, %v3503
    %v3505 = vpop.f32.mrb[0].mxu0
    %3506 = vmatprep.mubr.f32.mxu0 0.0
    %3507 = vmatmul.mubr.f32.gmra.mrb[0].mxu0 %v3435
    %v3508 = vpop.f32.mrb[0].mxu0
    %v3509 = vadd.f32 0.0, %v3508
    %v3510 = vpop.f32.mrb[0].mxu0
    %3511 = vdwg.mxu0
    %3516 = vrot.lane.b32.xlu0 %v1017, 4
    %v3517 = vpop.permute.xlu0 %3516
    %3518 = vrot.lane.b32.xlu0 %v1022, 4
    %v3519 = vpop.permute.xlu0 %3518
    %3520 = vrot.lane.b32.xlu0 %v1104, 4
    %v3521 = vpop.permute.xlu0 %3520
    %3522 = vrot.lane.b32.xlu0 %v1109, 4
    %v3523 = vpop.permute.xlu0 %3522
    %3532 = vrot.lane.b32.xlu0 %v1417, 8
    %v3533 = vpop.permute.xlu0 %3532
    %3534 = vrot.lane.b32.xlu0 %v1422, 8
    %v3535 = vpop.permute.xlu0 %3534
    %3536 = vrot.lane.b32.xlu0 %v1504, 8
    %v3537 = vpop.permute.xlu0 %3536
    %3538 = vrot.lane.b32.xlu0 %v1509, 8
    %v3539 = vpop.permute.xlu0 %3538
    %3548 = vrot.lane.b32.xlu0 %v1817, 12
    %v3549 = vpop.permute.xlu0 %3548
    %3550 = vrot.lane.b32.xlu0 %v1822, 12
    %v3551 = vpop.permute.xlu0 %3550
    %3552 = vrot.lane.b32.xlu0 %v1904, 12
    %v3553 = vpop.permute.xlu0 %3552
    %3554 = vrot.lane.b32.xlu0 %v1909, 12
    %v3555 = vpop.permute.xlu0 %3554
    %3564 = vrot.lane.b32.xlu0 %v2217, 16
    %v3565 = vpop.permute.xlu0 %3564
    %3566 = vrot.lane.b32.xlu0 %v2222, 16
    %v3567 = vpop.permute.xlu0 %3566
    %3568 = vrot.lane.b32.xlu0 %v2304, 16
    %v3569 = vpop.permute.xlu0 %3568
    %3570 = vrot.lane.b32.xlu0 %v2309, 16
    %v3571 = vpop.permute.xlu0 %3570
    %3580 = vrot.lane.b32.xlu0 %v2617, 20
    %v3581 = vpop.permute.xlu0 %3580
    %3582 = vrot.lane.b32.xlu0 %v2622, 20
    %v3583 = vpop.permute.xlu0 %3582
    %3584 = vrot.lane.b32.xlu0 %v2704, 20
    %v3585 = vpop.permute.xlu0 %3584
    %3586 = vrot.lane.b32.xlu0 %v2709, 20
    %v3587 = vpop.permute.xlu0 %3586
    %3596 = vrot.lane.b32.xlu0 %v3017, 24
    %v3597 = vpop.permute.xlu0 %3596
    %3598 = vrot.lane.b32.xlu0 %v3022, 24
    %v3599 = vpop.permute.xlu0 %3598
    %3600 = vrot.lane.b32.xlu0 %v3104, 24
    %v3601 = vpop.permute.xlu0 %3600
    %3602 = vrot.lane.b32.xlu0 %v3109, 24
    %v3603 = vpop.permute.xlu0 %3602
    %3612 = vrot.lane.b32.xlu0 %v3417, 28
    %v3613 = vpop.permute.xlu0 %3612
    %3614 = vrot.lane.b32.xlu0 %v3422, 28
    %v3615 = vpop.permute.xlu0 %3614
    %3616 = vrot.lane.b32.xlu0 %v3504, 28
    %v3617 = vpop.permute.xlu0 %3616
    %3618 = vrot.lane.b32.xlu0 %v3509, 28
    %v3619 = vpop.permute.xlu0 %3618
    %v3624 = vsel %vm320, %v617, %v3517
    %v3625 = vsel %vm320, %v622, %v3519
    %v3626 = vsel %vm320, %v704, %v3521
    %v3627 = vsel %vm320, %v709, %v3523
    %vm3628 = vcmask 64512
    %v3629 = vsel %vm3628, %v3624, %v3533
    %v3630 = vsel %vm3628, %v3625, %v3535
    %v3631 = vsel %vm3628, %v3626, %v3537
    %v3632 = vsel %vm3628, %v3627, %v3539
    %vm3633 = vcmask 97280
    %v3634 = vsel %vm3633, %v3629, %v3549
    %v3635 = vsel %vm3633, %v3630, %v3551
    %v3636 = vsel %vm3633, %v3631, %v3553
    %v3637 = vsel %vm3633, %v3632, %v3555
    %v3638 = vsel %vm493, %v3634, %v3565
    %v3639 = vsel %vm493, %v3635, %v3567
    %v3640 = vsel %vm493, %v3636, %v3569
    %v3641 = vsel %vm493, %v3637, %v3571
    %vm3642 = vcmask 162816
    %v3643 = vsel %vm3642, %v3638, %v3581
    %v3644 = vsel %vm3642, %v3639, %v3583
    %v3645 = vsel %vm3642, %v3640, %v3585
    %v3646 = vsel %vm3642, %v3641, %v3587
    %vm3647 = vcmask 195584
    %v3648 = vsel %vm3647, %v3643, %v3597
    %v3649 = vsel %vm3647, %v3644, %v3599
    %v3650 = vsel %vm3647, %v3645, %v3601
    %v3651 = vsel %vm3647, %v3646, %v3603
    %vm3652 = vcmask 228352
    %v3653 = vsel %vm3652, %v3648, %v3613
    %v3654 = vsel %vm3652, %v3649, %v3615
    %v3655 = vsel %vm3652, %v3650, %v3617
    %v3656 = vsel %vm3652, %v3651, %v3619
    %v3658 = vlaneseq
    %v3659 = vshrl.u32 %v3658, 7
    %v3660 = vsub.s32 0, %v3659
    %v3661 = vrot.slane %v113, %v3660
    %v3664 = vsel %vm117, %v3653, 0
    %v3667 = vsel %vm117, %v3654, 0
    %v3670 = vsel %vm117, %v3655, 0
    %v3673 = vsel %vm117, %v3656, 0
    %3675 = vmatprep.subr.mxu0 0.0
    %3676 = vmatpush1.msra.mxu0 %v109
    %3677 = vmatprep.subr.mxu0 0.0
    %3678 = vmatpush1.msra.mxu0 %v110
    %3679 = vmatprep.subr.mxu0 0.0
    %3680 = vmatpush1.msra.mxu0 %v111
    %3681 = vmatprep.subr.mxu0 0.0
    %3682 = vmatpush1.msra.mxu0 %v112
    %3683 = vmatprep.subr.mxu0 0.0
    %3684 = vmatpush1.msra.mxu0 0.0
    %3685 = vmatprep.subr.mxu0 0.0
    %3686 = vmatpush1.msra.mxu0 0.0
    %3687 = vmatprep.subr.mxu0 0.0
    %3688 = vmatpush1.msra.mxu0 0.0
    %3689 = vmatprep.subr.mxu0 0.0
    %3690 = vmatpush1.msra.mxu0 0.0
    %3691 = vmatprep.subr.mxu0 0.0
    %3692 = vmatpush1.msra.mxu0 0.0
    %3693 = vmatprep.subr.mxu0 0.0
    %3694 = vmatpush1.msra.mxu0 0.0
    %3695 = vmatprep.subr.mxu0 0.0
    %3696 = vmatpush1.msra.mxu0 0.0
    %3697 = vmatprep.subr.mxu0 0.0
    %3698 = vmatpush1.msra.mxu0 0.0
    %3699 = vmatprep.subr.mxu0 0.0
    %3700 = vmatpush1.msra.mxu0 0.0
    %3701 = vmatprep.subr.mxu0 0.0
    %3702 = vmatpush1.msra.mxu0 0.0
    %3703 = vmatprep.subr.mxu0 0.0
    %3704 = vmatpush1.msra.mxu0 0.0
    %3705 = vmatprep.subr.mxu0 0.0
    %3706 = vmatpush1.msra.mxu0 0.0
    %3707 = vmatprep.subr.mxu0 0.0
    %3708 = vmatpush1.msra.mxu0 0.0
    %3709 = vmatprep.subr.mxu0 0.0
    %3710 = vmatpush1.msra.mxu0 0.0
    %3711 = vmatprep.subr.mxu0 0.0
    %3712 = vmatpush1.msra.mxu0 0.0
    %3713 = vmatprep.subr.mxu0 0.0
    %3714 = vmatpush1.msra.mxu0 0.0
    %3715 = vmatprep.subr.mxu0 0.0
    %3716 = vmatpush1.msra.mxu0 0.0
    %3717 = vmatprep.subr.mxu0 0.0
    %3718 = vmatpush1.msra.mxu0 0.0
    %3719 = vmatprep.subr.mxu0 0.0
    %3720 = vmatpush1.msra.mxu0 0.0
    %3721 = vmatprep.subr.mxu0 0.0
    %3722 = vmatpush1.msra.mxu0 0.0
    %3723 = vmatprep.subr.mxu0 0.0
    %3724 = vmatpush1.msra.mxu0 0.0
    %3725 = vmatprep.subr.mxu0 0.0
    %3726 = vmatpush1.msra.mxu0 0.0
    %3727 = vmatprep.subr.mxu0 0.0
    %3728 = vmatpush1.msra.mxu0 0.0
    %3729 = vmatprep.subr.mxu0 0.0
    %3730 = vmatpush1.msra.mxu0 0.0
    %3731 = vmatprep.subr.mxu0 0.0
    %3732 = vmatpush1.msra.mxu0 0.0
    %3733 = vmatprep.subr.mxu0 0.0
    %3734 = vmatpush1.msra.mxu0 0.0
    %3735 = vmatprep.subr.mxu0 0.0
    %3736 = vmatpush1.msra.mxu0 0.0
    %3737 = vmatprep.subr.mxu0 0.0
    %3738 = vmatpush1.msra.mxu0 0.0
    %3739 = vmatprep.mubr.f32.mxu0 0.0
    %3740 = vmatmul.mubr.f32.gmra.mrb[0].mxu0 %v3664
    %v3741 = vpop.f32.mrb[0].mxu0
    %v3742 = vadd.f32 %v3661, %v3741
    %v3743 = vpop.f32.mrb[0].mxu0
    %3744 = vmatprep.mubr.f32.mxu0 0.0
    %3745 = vmatmul.mubr.f32.gmra.mrb[0].mxu0 %v3667
    %v3746 = vpop.f32.mrb[0].mxu0
    %v3747 = vadd.f32 %v3661, %v3746
    %v3748 = vpop.f32.mrb[0].mxu0
    %3749 = vmatprep.mubr.f32.mxu0 0.0
    %3750 = vmatmul.mubr.f32.gmra.mrb[0].mxu0 %v3670
    %v3751 = vpop.f32.mrb[0].mxu0
    %v3752 = vadd.f32 %v3661, %v3751
    %v3753 = vpop.f32.mrb[0].mxu0
    %3754 = vmatprep.mubr.f32.mxu0 0.0
    %3755 = vmatmul.mubr.f32.gmra.mrb[0].mxu0 %v3673
    %v3756 = vpop.f32.mrb[0].mxu0
    %v3757 = vadd.f32 %v3661, %v3756
    %v3758 = vpop.f32.mrb[0].mxu0
    %3759 = vdwg.mxu0
    %v3760 = vadd.f32 %v161, %v3742
    %v3761 = vadd.f32 %v209, %v3747
    %v3762 = vadd.f32 %v162, %v3752
    %v3763 = vadd.f32 %v210, %v3757
    %v3764 = vsel %vm117, %v3760, 0.0
    %v3765 = vrot.slane %v3764, 4
    %v3766 = vadd.f32 %v3764, %v3765
    %v3767 = vrot.slane %v3766, 2
    %v3768 = vadd.f32 %v3766, %v3767
    %v3769 = vrot.slane %v3768, 1
    %v3770 = vadd.f32 %v3768, %v3769
    %v3771 = vsel %vm117, %v3762, 0.0
    %v3772 = vrot.slane %v3771, 4
    %v3773 = vadd.f32 %v3771, %v3772
    %v3774 = vrot.slane %v3773, 2
    %v3775 = vadd.f32 %v3773, %v3774
    %v3776 = vrot.slane %v3775, 1
    %v3777 = vadd.f32 %v3775, %v3776
    %v3778 = vld [vmem:[#allocation10] sm:$0xff]
    %v3779 = vld [vmem:[#allocation10 + $0x8] sm:$0xff]
    %v3780 = vld [vmem:[#allocation10 + $0x10] sm:$0xff]
    %v3781 = vld [vmem:[#allocation10 + $0x18] sm:$0xff]
    %v3782 = vsel %vm117, %v3761, 0.0
    %v3783 = vrot.slane %v3782, 4
    %v3784 = vadd.f32 %v3782, %v3783
    %v3785 = vrot.slane %v3784, 2
    %v3786 = vadd.f32 %v3784, %v3785
    %v3787 = vrot.slane %v3786, 1
    %v3788 = vadd.f32 %v3786, %v3787
    %v3789 = vsel %vm117, %v3763, 0.0
    %v3790 = vrot.slane %v3789, 4
    %v3791 = vadd.f32 %v3789, %v3790
    %v3792 = vrot.slane %v3791, 2
    %v3793 = vadd.f32 %v3791, %v3792
    %v3794 = vrot.slane %v3793, 1
    %v3795 = vadd.f32 %v3793, %v3794
    %s3796 = scalar_lea.vmem [#allocation10], 32
    %v3797 = vld [vmem:[%s3796] sm:$0xff]
    %v3798 = vld [vmem:[%s3796 + $0x8] sm:$0xff]
    %v3799 = vld [vmem:[%s3796 + $0x10] sm:$0xff]
    %v3800 = vld [vmem:[%s3796 + $0x18] sm:$0xff]
    %vm3803 = vcmask 1041409
    %v3804 = vsel %vm3803, %v3795, %v3788
    %v3805 = vsel %vm117, %v3804, 0
    %3807 = vmatprep.subr.mxu0 0.0
    %3808 = vmatpush1.msra.mxu0 %v3797
    %3809 = vmatprep.subr.mxu0 0.0
    %3810 = vmatpush1.msra.mxu0 %v3798
    %3811 = vmatprep.subr.mxu0 0.0
    %3812 = vmatpush1.msra.mxu0 %v3799
    %3813 = vmatprep.subr.mxu0 0.0
    %3814 = vmatpush1.msra.mxu0 %v3800
    %3815 = vmatprep.subr.mxu0 0.0
    %3816 = vmatpush1.msra.mxu0 0.0
    %3817 = vmatprep.subr.mxu0 0.0
    %3818 = vmatpush1.msra.mxu0 0.0
    %3819 = vmatprep.subr.mxu0 0.0
    %3820 = vmatpush1.msra.mxu0 0.0
    %3821 = vmatprep.subr.mxu0 0.0
    %3822 = vmatpush1.msra.mxu0 0.0
    %3823 = vmatprep.subr.mxu0 0.0
    %3824 = vmatpush1.msra.mxu0 0.0
    %3825 = vmatprep.subr.mxu0 0.0
    %3826 = vmatpush1.msra.mxu0 0.0
    %3827 = vmatprep.subr.mxu0 0.0
    %3828 = vmatpush1.msra.mxu0 0.0
    %3829 = vmatprep.subr.mxu0 0.0
    %3830 = vmatpush1.msra.mxu0 0.0
    %3831 = vmatprep.subr.mxu0 0.0
    %3832 = vmatpush1.msra.mxu0 0.0
    %3833 = vmatprep.subr.mxu0 0.0
    %3834 = vmatpush1.msra.mxu0 0.0
    %3835 = vmatprep.subr.mxu0 0.0
    %3836 = vmatpush1.msra.mxu0 0.0
    %3837 = vmatprep.subr.mxu0 0.0
    %3838 = vmatpush1.msra.mxu0 0.0
    %3839 = vmatprep.subr.mxu0 0.0
    %3840 = vmatpush1.msra.mxu0 0.0
    %3841 = vmatprep.subr.mxu0 0.0
    %3842 = vmatpush1.msra.mxu0 0.0
    %3843 = vmatprep.subr.mxu0 0.0
    %3844 = vmatpush1.msra.mxu0 0.0
    %3845 = vmatprep.subr.mxu0 0.0
    %3846 = vmatpush1.msra.mxu0 0.0
    %3847 = vmatprep.subr.mxu0 0.0
    %3848 = vmatpush1.msra.mxu0 0.0
    %3849 = vmatprep.subr.mxu0 0.0
    %3850 = vmatpush1.msra.mxu0 0.0
    %3851 = vmatprep.subr.mxu0 0.0
    %3852 = vmatpush1.msra.mxu0 0.0
    %3853 = vmatprep.subr.mxu0 0.0
    %3854 = vmatpush1.msra.mxu0 0.0
    %3855 = vmatprep.subr.mxu0 0.0
    %3856 = vmatpush1.msra.mxu0 0.0
    %3857 = vmatprep.subr.mxu0 0.0
    %3858 = vmatpush1.msra.mxu0 0.0
    %3859 = vmatprep.subr.mxu0 0.0
    %3860 = vmatpush1.msra.mxu0 0.0
    %3861 = vmatprep.subr.mxu0 0.0
    %3862 = vmatpush1.msra.mxu0 0.0
    %3863 = vmatprep.subr.mxu0 0.0
    %3864 = vmatpush1.msra.mxu0 0.0
    %3865 = vmatprep.subr.mxu0 0.0
    %3866 = vmatpush1.msra.mxu0 0.0
    %3867 = vmatprep.subr.mxu0 0.0
    %3868 = vmatpush1.msra.mxu0 0.0
    %3869 = vmatprep.subr.mxu0 0.0
    %3870 = vmatpush1.msra.mxu0 0.0
    %3871 = vmatprep.mubr.f32.mxu0 0.0
    %3872 = vmatmul.mubr.f32.gmra.mrb[0].mxu0 %v3805
    %v3873 = vpop.f32.mrb[0].mxu0
    %v3874 = vadd.f32 0.0, %v3873
    %v3875 = vpop.f32.mrb[0].mxu0
    %3876 = vdwg.mxu0
    %v3879 = vsel %vm3803, %v3777, %v3770
    %v3880 = vsel %vm117, %v3879, 0
    %3882 = vmatprep.subr.mxu0 0.0
    %3883 = vmatpush1.msra.mxu0 %v3778
    %3884 = vmatprep.subr.mxu0 0.0
    %3885 = vmatpush1.msra.mxu0 %v3779
    %3886 = vmatprep.subr.mxu0 0.0
    %3887 = vmatpush1.msra.mxu0 %v3780
    %3888 = vmatprep.subr.mxu0 0.0
    %3889 = vmatpush1.msra.mxu0 %v3781
    %3890 = vmatprep.subr.mxu0 0.0
    %3891 = vmatpush1.msra.mxu0 0.0
    %3892 = vmatprep.subr.mxu0 0.0
    %3893 = vmatpush1.msra.mxu0 0.0
    %3894 = vmatprep.subr.mxu0 0.0
    %3895 = vmatpush1.msra.mxu0 0.0
    %3896 = vmatprep.subr.mxu0 0.0
    %3897 = vmatpush1.msra.mxu0 0.0
    %3898 = vmatprep.subr.mxu0 0.0
    %3899 = vmatpush1.msra.mxu0 0.0
    %3900 = vmatprep.subr.mxu0 0.0
    %3901 = vmatpush1.msra.mxu0 0.0
    %3902 = vmatprep.subr.mxu0 0.0
    %3903 = vmatpush1.msra.mxu0 0.0
    %3904 = vmatprep.subr.mxu0 0.0
    %3905 = vmatpush1.msra.mxu0 0.0
    %3906 = vmatprep.subr.mxu0 0.0
    %3907 = vmatpush1.msra.mxu0 0.0
    %3908 = vmatprep.subr.mxu0 0.0
    %3909 = vmatpush1.msra.mxu0 0.0
    %3910 = vmatprep.subr.mxu0 0.0
    %3911 = vmatpush1.msra.mxu0 0.0
    %3912 = vmatprep.subr.mxu0 0.0
    %3913 = vmatpush1.msra.mxu0 0.0
    %3914 = vmatprep.subr.mxu0 0.0
    %3915 = vmatpush1.msra.mxu0 0.0
    %3916 = vmatprep.subr.mxu0 0.0
    %3917 = vmatpush1.msra.mxu0 0.0
    %3918 = vmatprep.subr.mxu0 0.0
    %3919 = vmatpush1.msra.mxu0 0.0
    %3920 = vmatprep.subr.mxu0 0.0
    %3921 = vmatpush1.msra.mxu0 0.0
    %3922 = vmatprep.subr.mxu0 0.0
    %3923 = vmatpush1.msra.mxu0 0.0
    %3924 = vmatprep.subr.mxu0 0.0
    %3925 = vmatpush1.msra.mxu0 0.0
    %3926 = vmatprep.subr.mxu0 0.0
    %3927 = vmatpush1.msra.mxu0 0.0
    %3928 = vmatprep.subr.mxu0 0.0
    %3929 = vmatpush1.msra.mxu0 0.0
    %3930 = vmatprep.subr.mxu0 0.0
    %3931 = vmatpush1.msra.mxu0 0.0
    %3932 = vmatprep.subr.mxu0 0.0
    %3933 = vmatpush1.msra.mxu0 0.0
    %3934 = vmatprep.subr.mxu0 0.0
    %3935 = vmatpush1.msra.mxu0 0.0
    %3936 = vmatprep.subr.mxu0 0.0
    %3937 = vmatpush1.msra.mxu0 0.0
    %3938 = vmatprep.subr.mxu0 0.0
    %3939 = vmatpush1.msra.mxu0 0.0
    %3940 = vmatprep.subr.mxu0 0.0
    %3941 = vmatpush1.msra.mxu0 0.0
    %3942 = vmatprep.subr.mxu0 0.0
    %3943 = vmatpush1.msra.mxu0 0.0
    %3944 = vmatprep.subr.mxu0 0.0
    %3945 = vmatpush1.msra.mxu0 0.0
    %3946 = vmatprep.mubr.f32.mxu0 0.0
    %3947 = vmatmul.mubr.f32.gmra.mrb[0].mxu0 %v3880
    %v3948 = vpop.f32.mrb[0].mxu0
    %v3949 = vadd.f32 %v3874, %v3948
    %v3950 = vpop.f32.mrb[0].mxu0
    %3951 = vdwg.mxu0
    %v3953 = vlaneseq
    %v3954 = vshrl.u32 %v3953, 7
    %v3955 = vsub.s32 0, %v3954
    %v3956 = vrot.slane %v114, %v3955
    %v3958 = vadd.f32 %v3949, %v3956
    %vm3959 = vcmask 254976
    %3960 = vst.msk [vmem:[#allocation11] sm:$0x3] %vm3959, %v3958
    // Predicated region
    $region62: #{tpu_custom_call.1} parent=1 // pred_check
      _
    $region63: #{tpu_custom_call.1} parent=1 // pred_check_branch
      %3962 = sbr.rel (0) target = $region65
    $region64: #{tpu_custom_call.1} parent=1 // pred_region
      %s3964 = ssub.s32 32, 32
      %3965 = vsyncadd [#allocation4], %s3964
      %s3967 = sshll.u32 [#allocation11], 4
      %s3968 = int_to_ptr.vmem [resolvable:$true] %s3967
      %3970 = dma.vmem_to_hbm [thread:$0]  %s3968, 32, %s10, [#allocation4]
    $region65: #{tpu_custom_call.1} parent=1 // pred_fallthru
      _
    // Predicated region
    $region66: #{tpu_custom_call.1} parent=1 // pred_check
      _
    $region67: #{tpu_custom_call.1} parent=1 // pred_check_branch
      %3972 = sbr.rel (0) target = $region69
    $region68: #{tpu_custom_call.1} parent=1 // pred_region
      %3973 = dma.done [#allocation4], 32
    $region69: #{tpu_custom_call.1} parent=1 // pred_fallthru
      _
    %3974 = vsyncpa [#allocation3], 1
    %3975 = vsyncpa [#allocation6], 1
    %3976 = vsyncpa [#allocation9], 1
    %3977 = vsyncpa [#allocation4], 1

</llo_original>
